<compile_context>
chip_gen: v7x
topology: tpu7x:2x2x1
jax: 0.10.0
libtpu: 0.0.40
codegen_flags: <defaults>
</compile_context>

<pallas_src>
import math

import jax
import jax.numpy as jnp
import numpy as np
from jax import lax
from jax.experimental import pallas as pl
from jax.experimental.pallas import tpu as pltpu

HIDDEN = 64          # torch.nn.LSTM(in_channels, 64)
OUT_PAD = 128        # lane-dense padded classifier width


# ----------------------------- config ---------------------------------------
class Config:
    time_steps = 8
    channels = 4            # in_channels
    classes = 3             # out_channels
    diff = 4                # spatial crop on each side
    output_patch_size = 8   # 16 - 2*diff


# ----------------------------- Pallas kernel --------------------------------
def lstm_head_kernel(x_ref, wbig_ref, whh_ref, bbig_ref, wlin_ref, blin_ref,
                     out_ref, xg_sc, h_sc, c_sc, acc_sc):
    """LSTM over time + ReLU + temporal mean + padded Linear, one token tile.

    x_ref:    (tn, T*C)   bf16, per-token flattened (t-major, c-minor)
    wbig_ref: (T*C, T*4H) bf16 block-diagonal input->gate weight (order i,f,o,g)
    whh_ref:  (H, 4H)     f32 hidden->gate weight (reordered i,f,o,g)
    bbig_ref: (1, T*4H)   f32 combined bias (b_ih+b_hh) tiled over T
    wlin_ref: (H, 128)    f32 classifier weight, zero-padded to 128 lanes
    blin_ref: (1, 128)    f32 classifier bias, zero-padded
    out_ref:  (tn, 128)
    scratch:  xg_sc (tn, T*4H) f32; h_sc/c_sc/acc_sc (tn, H) f32
    """
    H = HIDDEN
    G = 4 * H
    T = xg_sc.shape[1] // G

    # Hoisted input projection: one MXU matmul for all timesteps + one bias add.
    xg_sc[...] = (jnp.dot(x_ref[...], wbig_ref[...],
                          preferred_element_type=jnp.float32)
                  + bbig_ref[...])

    h_sc[...] = jnp.zeros_like(h_sc)
    c_sc[...] = jnp.zeros_like(c_sc)
    acc_sc[...] = jnp.zeros_like(acc_sc)

    # Static unroll over the (small, fixed) time axis; LSTM state lives in VMEM
    # scratch refs. Recurrent matmul kept in f32 (rounding compounds over T).
    for t in range(T):
        gates = (xg_sc[:, t * G:(t + 1) * G]
                 + jnp.dot(h_sc[...], whh_ref[...],
                           preferred_element_type=jnp.float32))   # (tn, 4H)
        sig = jax.nn.sigmoid(gates[:, 0:3 * H])    # i|f|o fused, lanes [0,3H)
        g_g = jnp.tanh(gates[:, 3 * H:4 * H])
        i_g = sig[:, 0:H]
        f_g = sig[:, H:2 * H]
        o_g = sig[:, 2 * H:3 * H]
        c_new = f_g * c_sc[...] + i_g * g_g
        h_new = o_g * jnp.tanh(c_new)
        c_sc[...] = c_new
        h_sc[...] = h_new
        acc_sc[...] += jnp.maximum(h_new, 0.0)     # ReLU, accumulated for mean

    mean_h = acc_sc[...] * (1.0 / T)               # mean over time of relu(h_t)
    out_ref[...] = (jnp.dot(mean_h, wlin_ref[...],
                            preferred_element_type=jnp.float32)
                    + blin_ref[...]).astype(out_ref.dtype)


def lstm_head(seq, w_ih, w_hh, b_ih, b_hh, w_lin, b_lin, *, tn=None):
    """seq: (N, T, C) float32  ->  (N, classes) float32."""
    N, T, C = seq.shape
    H = HIDDEN
    G = 4 * H
    classes = w_lin.shape[0]

    if tn is None:
        # >= 2 grid blocks so "parallel" can use both TensorCores on v7x;
        # cap at 512 to amortize per-grid-step overhead on v5e/v6e.
        tn = (min(512, max(16, N // 2)) // 8) * 8
        tn = max(tn, 8)
    n_pad = pl.cdiv(N, tn) * tn

    # Gate reorder (i, f, g, o) -> (i, f, o, g): one sigmoid covers lanes [0,3H).
    perm = np.concatenate([np.arange(0, 2 * H),
                           np.arange(3 * H, 4 * H),
                           np.arange(2 * H, 3 * H)])
    w_ih_r = w_ih[perm]                       # (4H, C)
    w_hh_r = w_hh[perm]                       # (4H, H)
    bias_r = (b_ih + b_hh)[perm]              # (4H,)

    # Lane-dense token-major input (N, T*C); bf16 for the MXU input projection.
    x2d = seq.reshape(N, T * C)
    if n_pad != N:
        x2d = jnp.pad(x2d, ((0, n_pad - N), (0, 0)))
    x2d = x2d.astype(jnp.bfloat16)

    # Block-diagonal input->gate weight: (x @ W_big)[:, t*4H:(t+1)*4H] = x_t @ W_ih^T.
    w_big = jnp.kron(jnp.eye(T, dtype=jnp.float32), w_ih_r.T).astype(jnp.bfloat16)
    b_big = jnp.tile(bias_r, (T,)).reshape(1, T * G).astype(jnp.float32)

    whh_t = w_hh_r.T.astype(jnp.float32)      # (H, 4H); recurrence stays f32
    w_lin_pad = jnp.zeros((H, OUT_PAD), jnp.float32).at[:, :classes].set(w_lin.T)
    b_lin_pad = jnp.zeros((1, OUT_PAD), jnp.float32).at[:, :classes].set(b_lin)

    out = pl.pallas_call(
        lstm_head_kernel,
        out_shape=jax.ShapeDtypeStruct((n_pad, OUT_PAD), jnp.float32),
        grid_spec=pltpu.PrefetchScalarGridSpec(
            num_scalar_prefetch=0,
            grid=(n_pad // tn,),
            in_specs=[
                pl.BlockSpec((tn, T * C), lambda i: (i, 0)),
                pl.BlockSpec((T * C, T * G), lambda i: (0, 0)),
                pl.BlockSpec((H, G), lambda i: (0, 0)),
                pl.BlockSpec((1, T * G), lambda i: (0, 0)),
                pl.BlockSpec((H, OUT_PAD), lambda i: (0, 0)),
                pl.BlockSpec((1, OUT_PAD), lambda i: (0, 0)),
            ],
            out_specs=pl.BlockSpec((tn, OUT_PAD), lambda i: (i, 0)),
            scratch_shapes=[
                pltpu.VMEM((tn, T * G), jnp.float32),   # hoisted x-gates
                pltpu.VMEM((tn, H), jnp.float32),       # h
                pltpu.VMEM((tn, H), jnp.float32),       # c
                pltpu.VMEM((tn, H), jnp.float32),       # sum of relu(h)
            ],
        ),
        compiler_params=pltpu.CompilerParams(
            dimension_semantics=("parallel",)),
    )(x2d, w_big, whh_t, b_big, w_lin_pad, b_lin_pad)

    return out[:N, :classes]


# ----------------------------- full forward (glue in plain JAX) -------------
def forward(x, params, cfg):
    w_ih, w_hh, b_ih, b_hh, w_lin, b_lin = params
    B = x.shape[0]
    d = cfg.diff
    xc = x[:, :, :, d:-d, d:-d]                           # (B, T, C, P, P)
    P = xc.shape[3]
    seq = xc.reshape(B, cfg.time_steps, cfg.channels, P * P)
    seq = jnp.transpose(seq, (0, 3, 1, 2))                # (B, P*P, T, C)
    seq = seq.reshape(B * P * P, cfg.time_steps, cfg.channels)

    out = lstm_head(seq, w_ih, w_hh, b_ih, b_hh, w_lin, b_lin)   # (B*P*P, classes)

    out = out.reshape(B, cfg.output_patch_size, cfg.output_patch_size, cfg.classes)
    out = jnp.transpose(out, (0, 3, 1, 2))                # (B, classes, P, P)
    return out


# ----------------------------- pure-JAX reference ----------------------------
def reference_forward(x, params, cfg):
    w_ih, w_hh, b_ih, b_hh, w_lin, b_lin = params
    B = x.shape[0]
    d = cfg.diff
    xc = x[:, :, :, d:-d, d:-d]
    P = xc.shape[3]
    seq = xc.reshape(B, cfg.time_steps, cfg.channels, P * P)
    seq = jnp.transpose(seq, (0, 3, 1, 2)).reshape(B * P * P, cfg.time_steps,
                                                   cfg.channels)
    N = seq.shape[0]
    H = HIDDEN
    hp = lax.Precision.HIGHEST

    def step(carry, x_t):
        h, c = carry
        gates = (jnp.dot(x_t, w_ih.T, precision=hp)
                 + jnp.dot(h, w_hh.T, precision=hp) + b_ih + b_hh)
        i_g = jax.nn.sigmoid(gates[:, 0 * H:1 * H])
        f_g = jax.nn.sigmoid(gates[:, 1 * H:2 * H])
        g_g = jnp.tanh(gates[:, 2 * H:3 * H])
        o_g = jax.nn.sigmoid(gates[:, 3 * H:4 * H])
        c = f_g * c + i_g * g_g
        h = o_g * jnp.tanh(c)
        return (h, c), h

    h0 = jnp.zeros((N, H), jnp.float32)
    c0 = jnp.zeros((N, H), jnp.float32)
    _, hs = lax.scan(step, (h0, c0), jnp.transpose(seq, (1, 0, 2)))  # (T, N, H)
    hs = jnp.maximum(hs, 0.0)
    mean_h = jnp.mean(hs, axis=0)
    out = jnp.dot(mean_h, w_lin.T, precision=hp) + b_lin
    out = out.reshape(B, cfg.output_patch_size, cfg.output_patch_size, cfg.classes)
    return jnp.transpose(out, (0, 3, 1, 2))


# ----------------------------- parameter init --------------------------------
def init_params(cfg, key):
    H = HIDDEN
    C = cfg.channels
    classes = cfg.classes
    k1, k2, k3, k4, k5, k6 = jax.random.split(key, 6)
    stdv = 1.0 / math.sqrt(H)                              # torch LSTM default init
    w_ih = jax.random.uniform(k1, (4 * H, C), jnp.float32, -stdv, stdv)
    w_hh = jax.random.uniform(k2, (4 * H, H), jnp.float32, -stdv, stdv)
    b_ih = jax.random.uniform(k3, (4 * H,), jnp.float32, -stdv, stdv)
    b_hh = jax.random.uniform(k4, (4 * H,), jnp.float32, -stdv, stdv)
    xav = math.sqrt(6.0 / (H + classes))                   # xavier_uniform_ on Linear
    w_lin = jax.random.uniform(k5, (classes, H), jnp.float32, -xav, xav)
    b_lin = jax.random.uniform(k6, (classes,), jnp.float32, -stdv, stdv)
    return (w_ih, w_hh, b_ih, b_hh, w_lin, b_lin)


# ----------------------------- main ------------------------------------------
if __name__ == "__main__":
    cfg = Config()
    key = jax.random.PRNGKey(0)
    kx, kp = jax.random.split(key)

    B, T, C, Hs, Ws = 2, cfg.time_steps, cfg.channels, 16, 16
    x = jax.random.normal(kx, (B, T, C, Hs, Ws), jnp.float32)
    params = init_params(cfg, kp)

    out = jax.block_until_ready(forward(x, params, cfg))
    ref = jax.block_until_ready(reference_forward(x, params, cfg))

    # Slightly relaxed vs. pure-f32 because the input projection runs in bf16 on
    # the MXU (recurrent path is kept f32).
    np.testing.assert_allclose(np.asarray(out), np.asarray(ref),
                               rtol=2e-3, atol=2e-3)
    assert out.shape == (B, cfg.classes, cfg.output_patch_size,
                         cfg.output_patch_size)
    print("KERNEL_OK")
</pallas_src>

<mosaic_0001>
module attributes {stable_mosaic.version = 11 : i64} {
  func.func @lstm_head_kernel(%arg0: i32, %arg1: memref<64x32xbf16, #tpu.memory_space<vmem>>, %arg2: memref<32x2048xbf16, #tpu.memory_space<vmem>>, %arg3: memref<64x256xf32, #tpu.memory_space<vmem>>, %arg4: memref<1x2048xf32, #tpu.memory_space<vmem>>, %arg5: memref<64x128xf32, #tpu.memory_space<vmem>>, %arg6: memref<1x128xf32, #tpu.memory_space<vmem>>, %arg7: memref<64x128xf32, #tpu.memory_space<vmem>>, %arg8: memref<64x2048xf32, #tpu.memory_space<vmem>>, %arg9: memref<64x64xf32, #tpu.memory_space<vmem>>, %arg10: memref<64x64xf32, #tpu.memory_space<vmem>>, %arg11: memref<64x64xf32, #tpu.memory_space<vmem>>) attributes {dimension_semantics = [#tpu.dimension_semantics<parallel>], iteration_bounds = array<i64: 2>, scalar_prefetch = 0 : i64, scratch_operands = 4 : i64, tpu.core_type = #tpu.core_type<tc>, window_params = [{transform_indices = @transform_0, window_bounds = array<i64: 64, 32>}, {pipeline_mode = #tpu.pipeline_mode<synchronous>, transform_indices = @transform_1, window_bounds = array<i64: 32, 2048>}, {pipeline_mode = #tpu.pipeline_mode<synchronous>, transform_indices = @transform_2, window_bounds = array<i64: 64, 256>}, {pipeline_mode = #tpu.pipeline_mode<synchronous>, transform_indices = @transform_3, window_bounds = array<i64: 1, 2048>}, {pipeline_mode = #tpu.pipeline_mode<synchronous>, transform_indices = @transform_4, window_bounds = array<i64: 64, 128>}, {pipeline_mode = #tpu.pipeline_mode<synchronous>, transform_indices = @transform_5, window_bounds = array<i64: 1, 128>}, {transform_indices = @transform_6, window_bounds = array<i64: 64, 128>}]} {
    %c0 = arith.constant 0 : index
    %c0_0 = arith.constant 0 : index
    %0 = vector.load %arg1[%c0, %c0_0] : memref<64x32xbf16, #tpu.memory_space<vmem>>, vector<64x32xbf16>
    %c0_1 = arith.constant 0 : index
    %c0_2 = arith.constant 0 : index
    %1 = vector.load %arg2[%c0_1, %c0_2] : memref<32x2048xbf16, #tpu.memory_space<vmem>>, vector<32x2048xbf16>
    %cst = arith.constant dense<0.000000e+00> : vector<64x2048xf32>
    %2 = tpu.matmul %0, %1, %cst {dimension_numbers = #tpu.dot_dimension_numbers<[1], [0], [0], [1], [0, 0, 1, 1], [], []>} : vector<64x32xbf16>, vector<32x2048xbf16>, vector<64x2048xf32> -> vector<64x2048xf32>
    %c0_3 = arith.constant 0 : index
    %c0_4 = arith.constant 0 : index
    %3 = vector.load %arg4[%c0_3, %c0_4] : memref<1x2048xf32, #tpu.memory_space<vmem>>, vector<1x2048xf32>
    %4 = vector.broadcast %3 : vector<1x2048xf32> to vector<64x2048xf32>
    %5 = arith.addf %2, %4 : vector<64x2048xf32>
    %c0_5 = arith.constant 0 : index
    %c0_6 = arith.constant 0 : index
    %6 = vector.load %arg8[%c0_5, %c0_6] : memref<64x2048xf32, #tpu.memory_space<vmem>>, vector<64x2048xf32>
    tpu.vector_store %arg8[%c0_5, %c0_6], %5 {strides = array<i32>} : memref<64x2048xf32, #tpu.memory_space<vmem>>, vector<64x2048xf32>,
    %cst_7 = arith.constant 0.000000e+00 : f32
    %7 = vector.broadcast %cst_7 : f32 to vector<64x64xf32>
    %c0_8 = arith.constant 0 : index
    %c0_9 = arith.constant 0 : index
    %8 = vector.load %arg9[%c0_8, %c0_9] : memref<64x64xf32, #tpu.memory_space<vmem>>, vector<64x64xf32>
    tpu.vector_store %arg9[%c0_8, %c0_9], %7 {strides = array<i32>} : memref<64x64xf32, #tpu.memory_space<vmem>>, vector<64x64xf32>,
    %cst_10 = arith.constant 0.000000e+00 : f32
    %9 = vector.broadcast %cst_10 : f32 to vector<64x64xf32>
    %c0_11 = arith.constant 0 : index
    %c0_12 = arith.constant 0 : index
    %10 = vector.load %arg10[%c0_11, %c0_12] : memref<64x64xf32, #tpu.memory_space<vmem>>, vector<64x64xf32>
    tpu.vector_store %arg10[%c0_11, %c0_12], %9 {strides = array<i32>} : memref<64x64xf32, #tpu.memory_space<vmem>>, vector<64x64xf32>,
    %cst_13 = arith.constant 0.000000e+00 : f32
    %11 = vector.broadcast %cst_13 : f32 to vector<64x64xf32>
    %c0_14 = arith.constant 0 : index
    %c0_15 = arith.constant 0 : index
    %12 = vector.load %arg11[%c0_14, %c0_15] : memref<64x64xf32, #tpu.memory_space<vmem>>, vector<64x64xf32>
    tpu.vector_store %arg11[%c0_14, %c0_15], %11 {strides = array<i32>} : memref<64x64xf32, #tpu.memory_space<vmem>>, vector<64x64xf32>,
    %c0_16 = arith.constant 0 : index
    %c0_17 = arith.constant 0 : index
    %13 = vector.load %arg8[%c0_16, %c0_17] : memref<64x2048xf32, #tpu.memory_space<vmem>>, vector<64x256xf32>
    %c0_18 = arith.constant 0 : index
    %c0_19 = arith.constant 0 : index
    %14 = vector.load %arg9[%c0_18, %c0_19] : memref<64x64xf32, #tpu.memory_space<vmem>>, vector<64x64xf32>
    %c0_20 = arith.constant 0 : index
    %c0_21 = arith.constant 0 : index
    %15 = vector.load %arg3[%c0_20, %c0_21] : memref<64x256xf32, #tpu.memory_space<vmem>>, vector<64x256xf32>
    %cst_22 = arith.constant dense<0.000000e+00> : vector<64x256xf32>
    %16 = tpu.matmul %14, %15, %cst_22 {dimension_numbers = #tpu.dot_dimension_numbers<[1], [0], [0], [1], [0, 0, 1, 1], [], []>} : vector<64x64xf32>, vector<64x256xf32>, vector<64x256xf32> -> vector<64x256xf32>
    %17 = arith.addf %13, %16 : vector<64x256xf32>
    %18 = vector.extract_strided_slice %17 {offsets = [0, 0], sizes = [64, 192], strides = [1, 1]} : vector<64x256xf32> to vector<64x192xf32>
    %19 = arith.negf %18 : vector<64x192xf32>
    %20 = math.exp %19 : vector<64x192xf32>
    %cst_23 = arith.constant 1.000000e+00 : f32
    %21 = vector.broadcast %cst_23 : f32 to vector<64x192xf32>
    %22 = arith.addf %21, %20 : vector<64x192xf32>
    %23 = arith.divf %21, %22 : vector<64x192xf32>
    %24 = vector.extract_strided_slice %17 {offsets = [0, 192], sizes = [64, 64], strides = [1, 1]} : vector<64x256xf32> to vector<64x64xf32>
    %25 = math.tanh %24 : vector<64x64xf32>
    %26 = vector.extract_strided_slice %23 {offsets = [0, 0], sizes = [64, 64], strides = [1, 1]} : vector<64x192xf32> to vector<64x64xf32>
    %27 = vector.extract_strided_slice %23 {offsets = [0, 64], sizes = [64, 64], strides = [1, 1]} : vector<64x192xf32> to vector<64x64xf32>
    %28 = vector.extract_strided_slice %23 {offsets = [0, 128], sizes = [64, 64], strides = [1, 1]} : vector<64x192xf32> to vector<64x64xf32>
    %c0_24 = arith.constant 0 : index
    %c0_25 = arith.constant 0 : index
    %29 = vector.load %arg10[%c0_24, %c0_25] : memref<64x64xf32, #tpu.memory_space<vmem>>, vector<64x64xf32>
    %30 = arith.mulf %27, %29 : vector<64x64xf32>
    %31 = arith.mulf %26, %25 : vector<64x64xf32>
    %32 = arith.addf %30, %31 : vector<64x64xf32>
    %33 = math.tanh %32 : vector<64x64xf32>
    %34 = arith.mulf %28, %33 : vector<64x64xf32>
    %c0_26 = arith.constant 0 : index
    %c0_27 = arith.constant 0 : index
    %35 = vector.load %arg10[%c0_26, %c0_27] : memref<64x64xf32, #tpu.memory_space<vmem>>, vector<64x64xf32>
    tpu.vector_store %arg10[%c0_26, %c0_27], %32 {strides = array<i32>} : memref<64x64xf32, #tpu.memory_space<vmem>>, vector<64x64xf32>,
    %c0_28 = arith.constant 0 : index
    %c0_29 = arith.constant 0 : index
    %36 = vector.load %arg9[%c0_28, %c0_29] : memref<64x64xf32, #tpu.memory_space<vmem>>, vector<64x64xf32>
    tpu.vector_store %arg9[%c0_28, %c0_29], %34 {strides = array<i32>} : memref<64x64xf32, #tpu.memory_space<vmem>>, vector<64x64xf32>,
    %c0_30 = arith.constant 0 : index
    %c0_31 = arith.constant 0 : index
    %37 = vector.load %arg11[%c0_30, %c0_31] : memref<64x64xf32, #tpu.memory_space<vmem>>, vector<64x64xf32>
    %cst_32 = arith.constant 0.000000e+00 : f32
    %38 = vector.broadcast %cst_32 : f32 to vector<64x64xf32>
    %39 = arith.maximumf %34, %38 : vector<64x64xf32>
    %40 = arith.addf %37, %39 : vector<64x64xf32>
    %c0_33 = arith.constant 0 : index
    %c0_34 = arith.constant 0 : index
    %41 = vector.load %arg11[%c0_33, %c0_34] : memref<64x64xf32, #tpu.memory_space<vmem>>, vector<64x64xf32>
    tpu.vector_store %arg11[%c0_33, %c0_34], %40 {strides = array<i32>} : memref<64x64xf32, #tpu.memory_space<vmem>>, vector<64x64xf32>,
    %c0_35 = arith.constant 0 : index
    %c256 = arith.constant 256 : index
    %42 = vector.load %arg8[%c0_35, %c256] : memref<64x2048xf32, #tpu.memory_space<vmem>>, vector<64x256xf32>
    %c0_36 = arith.constant 0 : index
    %c0_37 = arith.constant 0 : index
    %43 = vector.load %arg9[%c0_36, %c0_37] : memref<64x64xf32, #tpu.memory_space<vmem>>, vector<64x64xf32>
    %c0_38 = arith.constant 0 : index
    %c0_39 = arith.constant 0 : index
    %44 = vector.load %arg3[%c0_38, %c0_39] : memref<64x256xf32, #tpu.memory_space<vmem>>, vector<64x256xf32>
    %cst_40 = arith.constant dense<0.000000e+00> : vector<64x256xf32>
    %45 = tpu.matmul %43, %44, %cst_40 {dimension_numbers = #tpu.dot_dimension_numbers<[1], [0], [0], [1], [0, 0, 1, 1], [], []>} : vector<64x64xf32>, vector<64x256xf32>, vector<64x256xf32> -> vector<64x256xf32>
    %46 = arith.addf %42, %45 : vector<64x256xf32>
    %47 = vector.extract_strided_slice %46 {offsets = [0, 0], sizes = [64, 192], strides = [1, 1]} : vector<64x256xf32> to vector<64x192xf32>
    %48 = arith.negf %47 : vector<64x192xf32>
    %49 = math.exp %48 : vector<64x192xf32>
    %cst_41 = arith.constant 1.000000e+00 : f32
    %50 = vector.broadcast %cst_41 : f32 to vector<64x192xf32>
    %51 = arith.addf %50, %49 : vector<64x192xf32>
    %52 = arith.divf %50, %51 : vector<64x192xf32>
    %53 = vector.extract_strided_slice %46 {offsets = [0, 192], sizes = [64, 64], strides = [1, 1]} : vector<64x256xf32> to vector<64x64xf32>
    %54 = math.tanh %53 : vector<64x64xf32>
    %55 = vector.extract_strided_slice %52 {offsets = [0, 0], sizes = [64, 64], strides = [1, 1]} : vector<64x192xf32> to vector<64x64xf32>
    %56 = vector.extract_strided_slice %52 {offsets = [0, 64], sizes = [64, 64], strides = [1, 1]} : vector<64x192xf32> to vector<64x64xf32>
    %57 = vector.extract_strided_slice %52 {offsets = [0, 128], sizes = [64, 64], strides = [1, 1]} : vector<64x192xf32> to vector<64x64xf32>
    %c0_42 = arith.constant 0 : index
    %c0_43 = arith.constant 0 : index
    %58 = vector.load %arg10[%c0_42, %c0_43] : memref<64x64xf32, #tpu.memory_space<vmem>>, vector<64x64xf32>
    %59 = arith.mulf %56, %58 : vector<64x64xf32>
    %60 = arith.mulf %55, %54 : vector<64x64xf32>
    %61 = arith.addf %59, %60 : vector<64x64xf32>
    %62 = math.tanh %61 : vector<64x64xf32>
    %63 = arith.mulf %57, %62 : vector<64x64xf32>
    %c0_44 = arith.constant 0 : index
    %c0_45 = arith.constant 0 : index
    %64 = vector.load %arg10[%c0_44, %c0_45] : memref<64x64xf32, #tpu.memory_space<vmem>>, vector<64x64xf32>
    tpu.vector_store %arg10[%c0_44, %c0_45], %61 {strides = array<i32>} : memref<64x64xf32, #tpu.memory_space<vmem>>, vector<64x64xf32>,
    %c0_46 = arith.constant 0 : index
    %c0_47 = arith.constant 0 : index
    %65 = vector.load %arg9[%c0_46, %c0_47] : memref<64x64xf32, #tpu.memory_space<vmem>>, vector<64x64xf32>
    tpu.vector_store %arg9[%c0_46, %c0_47], %63 {strides = array<i32>} : memref<64x64xf32, #tpu.memory_space<vmem>>, vector<64x64xf32>,
    %c0_48 = arith.constant 0 : index
    %c0_49 = arith.constant 0 : index
    %66 = vector.load %arg11[%c0_48, %c0_49] : memref<64x64xf32, #tpu.memory_space<vmem>>, vector<64x64xf32>
    %cst_50 = arith.constant 0.000000e+00 : f32
    %67 = vector.broadcast %cst_50 : f32 to vector<64x64xf32>
    %68 = arith.maximumf %63, %67 : vector<64x64xf32>
    %69 = arith.addf %66, %68 : vector<64x64xf32>
    %c0_51 = arith.constant 0 : index
    %c0_52 = arith.constant 0 : index
    %70 = vector.load %arg11[%c0_51, %c0_52] : memref<64x64xf32, #tpu.memory_space<vmem>>, vector<64x64xf32>
    tpu.vector_store %arg11[%c0_51, %c0_52], %69 {strides = array<i32>} : memref<64x64xf32, #tpu.memory_space<vmem>>, vector<64x64xf32>,
    %c0_53 = arith.constant 0 : index
    %c512 = arith.constant 512 : index
    %71 = vector.load %arg8[%c0_53, %c512] : memref<64x2048xf32, #tpu.memory_space<vmem>>, vector<64x256xf32>
    %c0_54 = arith.constant 0 : index
    %c0_55 = arith.constant 0 : index
    %72 = vector.load %arg9[%c0_54, %c0_55] : memref<64x64xf32, #tpu.memory_space<vmem>>, vector<64x64xf32>
    %c0_56 = arith.constant 0 : index
    %c0_57 = arith.constant 0 : index
    %73 = vector.load %arg3[%c0_56, %c0_57] : memref<64x256xf32, #tpu.memory_space<vmem>>, vector<64x256xf32>
    %cst_58 = arith.constant dense<0.000000e+00> : vector<64x256xf32>
    %74 = tpu.matmul %72, %73, %cst_58 {dimension_numbers = #tpu.dot_dimension_numbers<[1], [0], [0], [1], [0, 0, 1, 1], [], []>} : vector<64x64xf32>, vector<64x256xf32>, vector<64x256xf32> -> vector<64x256xf32>
    %75 = arith.addf %71, %74 : vector<64x256xf32>
    %76 = vector.extract_strided_slice %75 {offsets = [0, 0], sizes = [64, 192], strides = [1, 1]} : vector<64x256xf32> to vector<64x192xf32>
    %77 = arith.negf %76 : vector<64x192xf32>
    %78 = math.exp %77 : vector<64x192xf32>
    %cst_59 = arith.constant 1.000000e+00 : f32
    %79 = vector.broadcast %cst_59 : f32 to vector<64x192xf32>
    %80 = arith.addf %79, %78 : vector<64x192xf32>
    %81 = arith.divf %79, %80 : vector<64x192xf32>
    %82 = vector.extract_strided_slice %75 {offsets = [0, 192], sizes = [64, 64], strides = [1, 1]} : vector<64x256xf32> to vector<64x64xf32>
    %83 = math.tanh %82 : vector<64x64xf32>
    %84 = vector.extract_strided_slice %81 {offsets = [0, 0], sizes = [64, 64], strides = [1, 1]} : vector<64x192xf32> to vector<64x64xf32>
    %85 = vector.extract_strided_slice %81 {offsets = [0, 64], sizes = [64, 64], strides = [1, 1]} : vector<64x192xf32> to vector<64x64xf32>
    %86 = vector.extract_strided_slice %81 {offsets = [0, 128], sizes = [64, 64], strides = [1, 1]} : vector<64x192xf32> to vector<64x64xf32>
    %c0_60 = arith.constant 0 : index
    %c0_61 = arith.constant 0 : index
    %87 = vector.load %arg10[%c0_60, %c0_61] : memref<64x64xf32, #tpu.memory_space<vmem>>, vector<64x64xf32>
    %88 = arith.mulf %85, %87 : vector<64x64xf32>
    %89 = arith.mulf %84, %83 : vector<64x64xf32>
    %90 = arith.addf %88, %89 : vector<64x64xf32>
    %91 = math.tanh %90 : vector<64x64xf32>
    %92 = arith.mulf %86, %91 : vector<64x64xf32>
    %c0_62 = arith.constant 0 : index
    %c0_63 = arith.constant 0 : index
    %93 = vector.load %arg10[%c0_62, %c0_63] : memref<64x64xf32, #tpu.memory_space<vmem>>, vector<64x64xf32>
    tpu.vector_store %arg10[%c0_62, %c0_63], %90 {strides = array<i32>} : memref<64x64xf32, #tpu.memory_space<vmem>>, vector<64x64xf32>,
    %c0_64 = arith.constant 0 : index
    %c0_65 = arith.constant 0 : index
    %94 = vector.load %arg9[%c0_64, %c0_65] : memref<64x64xf32, #tpu.memory_space<vmem>>, vector<64x64xf32>
    tpu.vector_store %arg9[%c0_64, %c0_65], %92 {strides = array<i32>} : memref<64x64xf32, #tpu.memory_space<vmem>>, vector<64x64xf32>,
    %c0_66 = arith.constant 0 : index
    %c0_67 = arith.constant 0 : index
    %95 = vector.load %arg11[%c0_66, %c0_67] : memref<64x64xf32, #tpu.memory_space<vmem>>, vector<64x64xf32>
    %cst_68 = arith.constant 0.000000e+00 : f32
    %96 = vector.broadcast %cst_68 : f32 to vector<64x64xf32>
    %97 = arith.maximumf %92, %96 : vector<64x64xf32>
    %98 = arith.addf %95, %97 : vector<64x64xf32>
    %c0_69 = arith.constant 0 : index
    %c0_70 = arith.constant 0 : index
    %99 = vector.load %arg11[%c0_69, %c0_70] : memref<64x64xf32, #tpu.memory_space<vmem>>, vector<64x64xf32>
    tpu.vector_store %arg11[%c0_69, %c0_70], %98 {strides = array<i32>} : memref<64x64xf32, #tpu.memory_space<vmem>>, vector<64x64xf32>,
    %c0_71 = arith.constant 0 : index
    %c768 = arith.constant 768 : index
    %100 = vector.load %arg8[%c0_71, %c768] : memref<64x2048xf32, #tpu.memory_space<vmem>>, vector<64x256xf32>
    %c0_72 = arith.constant 0 : index
    %c0_73 = arith.constant 0 : index
    %101 = vector.load %arg9[%c0_72, %c0_73] : memref<64x64xf32, #tpu.memory_space<vmem>>, vector<64x64xf32>
    %c0_74 = arith.constant 0 : index
    %c0_75 = arith.constant 0 : index
    %102 = vector.load %arg3[%c0_74, %c0_75] : memref<64x256xf32, #tpu.memory_space<vmem>>, vector<64x256xf32>
    %cst_76 = arith.constant dense<0.000000e+00> : vector<64x256xf32>
    %103 = tpu.matmul %101, %102, %cst_76 {dimension_numbers = #tpu.dot_dimension_numbers<[1], [0], [0], [1], [0, 0, 1, 1], [], []>} : vector<64x64xf32>, vector<64x256xf32>, vector<64x256xf32> -> vector<64x256xf32>
    %104 = arith.addf %100, %103 : vector<64x256xf32>
    %105 = vector.extract_strided_slice %104 {offsets = [0, 0], sizes = [64, 192], strides = [1, 1]} : vector<64x256xf32> to vector<64x192xf32>
    %106 = arith.negf %105 : vector<64x192xf32>
    %107 = math.exp %106 : vector<64x192xf32>
    %cst_77 = arith.constant 1.000000e+00 : f32
    %108 = vector.broadcast %cst_77 : f32 to vector<64x192xf32>
    %109 = arith.addf %108, %107 : vector<64x192xf32>
    %110 = arith.divf %108, %109 : vector<64x192xf32>
    %111 = vector.extract_strided_slice %104 {offsets = [0, 192], sizes = [64, 64], strides = [1, 1]} : vector<64x256xf32> to vector<64x64xf32>
    %112 = math.tanh %111 : vector<64x64xf32>
    %113 = vector.extract_strided_slice %110 {offsets = [0, 0], sizes = [64, 64], strides = [1, 1]} : vector<64x192xf32> to vector<64x64xf32>
    %114 = vector.extract_strided_slice %110 {offsets = [0, 64], sizes = [64, 64], strides = [1, 1]} : vector<64x192xf32> to vector<64x64xf32>
    %115 = vector.extract_strided_slice %110 {offsets = [0, 128], sizes = [64, 64], strides = [1, 1]} : vector<64x192xf32> to vector<64x64xf32>
    %c0_78 = arith.constant 0 : index
    %c0_79 = arith.constant 0 : index
    %116 = vector.load %arg10[%c0_78, %c0_79] : memref<64x64xf32, #tpu.memory_space<vmem>>, vector<64x64xf32>
    %117 = arith.mulf %114, %116 : vector<64x64xf32>
    %118 = arith.mulf %113, %112 : vector<64x64xf32>
    %119 = arith.addf %117, %118 : vector<64x64xf32>
    %120 = math.tanh %119 : vector<64x64xf32>
    %121 = arith.mulf %115, %120 : vector<64x64xf32>
    %c0_80 = arith.constant 0 : index
    %c0_81 = arith.constant 0 : index
    %122 = vector.load %arg10[%c0_80, %c0_81] : memref<64x64xf32, #tpu.memory_space<vmem>>, vector<64x64xf32>
    tpu.vector_store %arg10[%c0_80, %c0_81], %119 {strides = array<i32>} : memref<64x64xf32, #tpu.memory_space<vmem>>, vector<64x64xf32>,
    %c0_82 = arith.constant 0 : index
    %c0_83 = arith.constant 0 : index
    %123 = vector.load %arg9[%c0_82, %c0_83] : memref<64x64xf32, #tpu.memory_space<vmem>>, vector<64x64xf32>
    tpu.vector_store %arg9[%c0_82, %c0_83], %121 {strides = array<i32>} : memref<64x64xf32, #tpu.memory_space<vmem>>, vector<64x64xf32>,
    %c0_84 = arith.constant 0 : index
    %c0_85 = arith.constant 0 : index
    %124 = vector.load %arg11[%c0_84, %c0_85] : memref<64x64xf32, #tpu.memory_space<vmem>>, vector<64x64xf32>
    %cst_86 = arith.constant 0.000000e+00 : f32
    %125 = vector.broadcast %cst_86 : f32 to vector<64x64xf32>
    %126 = arith.maximumf %121, %125 : vector<64x64xf32>
    %127 = arith.addf %124, %126 : vector<64x64xf32>
    %c0_87 = arith.constant 0 : index
    %c0_88 = arith.constant 0 : index
    %128 = vector.load %arg11[%c0_87, %c0_88] : memref<64x64xf32, #tpu.memory_space<vmem>>, vector<64x64xf32>
    tpu.vector_store %arg11[%c0_87, %c0_88], %127 {strides = array<i32>} : memref<64x64xf32, #tpu.memory_space<vmem>>, vector<64x64xf32>,
    %c0_89 = arith.constant 0 : index
    %c1024 = arith.constant 1024 : index
    %129 = vector.load %arg8[%c0_89, %c1024] : memref<64x2048xf32, #tpu.memory_space<vmem>>, vector<64x256xf32>
    %c0_90 = arith.constant 0 : index
    %c0_91 = arith.constant 0 : index
    %130 = vector.load %arg9[%c0_90, %c0_91] : memref<64x64xf32, #tpu.memory_space<vmem>>, vector<64x64xf32>
    %c0_92 = arith.constant 0 : index
    %c0_93 = arith.constant 0 : index
    %131 = vector.load %arg3[%c0_92, %c0_93] : memref<64x256xf32, #tpu.memory_space<vmem>>, vector<64x256xf32>
    %cst_94 = arith.constant dense<0.000000e+00> : vector<64x256xf32>
    %132 = tpu.matmul %130, %131, %cst_94 {dimension_numbers = #tpu.dot_dimension_numbers<[1], [0], [0], [1], [0, 0, 1, 1], [], []>} : vector<64x64xf32>, vector<64x256xf32>, vector<64x256xf32> -> vector<64x256xf32>
    %133 = arith.addf %129, %132 : vector<64x256xf32>
    %134 = vector.extract_strided_slice %133 {offsets = [0, 0], sizes = [64, 192], strides = [1, 1]} : vector<64x256xf32> to vector<64x192xf32>
    %135 = arith.negf %134 : vector<64x192xf32>
    %136 = math.exp %135 : vector<64x192xf32>
    %cst_95 = arith.constant 1.000000e+00 : f32
    %137 = vector.broadcast %cst_95 : f32 to vector<64x192xf32>
    %138 = arith.addf %137, %136 : vector<64x192xf32>
    %139 = arith.divf %137, %138 : vector<64x192xf32>
    %140 = vector.extract_strided_slice %133 {offsets = [0, 192], sizes = [64, 64], strides = [1, 1]} : vector<64x256xf32> to vector<64x64xf32>
    %141 = math.tanh %140 : vector<64x64xf32>
    %142 = vector.extract_strided_slice %139 {offsets = [0, 0], sizes = [64, 64], strides = [1, 1]} : vector<64x192xf32> to vector<64x64xf32>
    %143 = vector.extract_strided_slice %139 {offsets = [0, 64], sizes = [64, 64], strides = [1, 1]} : vector<64x192xf32> to vector<64x64xf32>
    %144 = vector.extract_strided_slice %139 {offsets = [0, 128], sizes = [64, 64], strides = [1, 1]} : vector<64x192xf32> to vector<64x64xf32>
    %c0_96 = arith.constant 0 : index
    %c0_97 = arith.constant 0 : index
    %145 = vector.load %arg10[%c0_96, %c0_97] : memref<64x64xf32, #tpu.memory_space<vmem>>, vector<64x64xf32>
    %146 = arith.mulf %143, %145 : vector<64x64xf32>
    %147 = arith.mulf %142, %141 : vector<64x64xf32>
    %148 = arith.addf %146, %147 : vector<64x64xf32>
    %149 = math.tanh %148 : vector<64x64xf32>
    %150 = arith.mulf %144, %149 : vector<64x64xf32>
    %c0_98 = arith.constant 0 : index
    %c0_99 = arith.constant 0 : index
    %151 = vector.load %arg10[%c0_98, %c0_99] : memref<64x64xf32, #tpu.memory_space<vmem>>, vector<64x64xf32>
    tpu.vector_store %arg10[%c0_98, %c0_99], %148 {strides = array<i32>} : memref<64x64xf32, #tpu.memory_space<vmem>>, vector<64x64xf32>,
    %c0_100 = arith.constant 0 : index
    %c0_101 = arith.constant 0 : index
    %152 = vector.load %arg9[%c0_100, %c0_101] : memref<64x64xf32, #tpu.memory_space<vmem>>, vector<64x64xf32>
    tpu.vector_store %arg9[%c0_100, %c0_101], %150 {strides = array<i32>} : memref<64x64xf32, #tpu.memory_space<vmem>>, vector<64x64xf32>,
    %c0_102 = arith.constant 0 : index
    %c0_103 = arith.constant 0 : index
    %153 = vector.load %arg11[%c0_102, %c0_103] : memref<64x64xf32, #tpu.memory_space<vmem>>, vector<64x64xf32>
    %cst_104 = arith.constant 0.000000e+00 : f32
    %154 = vector.broadcast %cst_104 : f32 to vector<64x64xf32>
    %155 = arith.maximumf %150, %154 : vector<64x64xf32>
    %156 = arith.addf %153, %155 : vector<64x64xf32>
    %c0_105 = arith.constant 0 : index
    %c0_106 = arith.constant 0 : index
    %157 = vector.load %arg11[%c0_105, %c0_106] : memref<64x64xf32, #tpu.memory_space<vmem>>, vector<64x64xf32>
    tpu.vector_store %arg11[%c0_105, %c0_106], %156 {strides = array<i32>} : memref<64x64xf32, #tpu.memory_space<vmem>>, vector<64x64xf32>,
    %c0_107 = arith.constant 0 : index
    %c1280 = arith.constant 1280 : index
    %158 = vector.load %arg8[%c0_107, %c1280] : memref<64x2048xf32, #tpu.memory_space<vmem>>, vector<64x256xf32>
    %c0_108 = arith.constant 0 : index
    %c0_109 = arith.constant 0 : index
    %159 = vector.load %arg9[%c0_108, %c0_109] : memref<64x64xf32, #tpu.memory_space<vmem>>, vector<64x64xf32>
    %c0_110 = arith.constant 0 : index
    %c0_111 = arith.constant 0 : index
    %160 = vector.load %arg3[%c0_110, %c0_111] : memref<64x256xf32, #tpu.memory_space<vmem>>, vector<64x256xf32>
    %cst_112 = arith.constant dense<0.000000e+00> : vector<64x256xf32>
    %161 = tpu.matmul %159, %160, %cst_112 {dimension_numbers = #tpu.dot_dimension_numbers<[1], [0], [0], [1], [0, 0, 1, 1], [], []>} : vector<64x64xf32>, vector<64x256xf32>, vector<64x256xf32> -> vector<64x256xf32>
    %162 = arith.addf %158, %161 : vector<64x256xf32>
    %163 = vector.extract_strided_slice %162 {offsets = [0, 0], sizes = [64, 192], strides = [1, 1]} : vector<64x256xf32> to vector<64x192xf32>
    %164 = arith.negf %163 : vector<64x192xf32>
    %165 = math.exp %164 : vector<64x192xf32>
    %cst_113 = arith.constant 1.000000e+00 : f32
    %166 = vector.broadcast %cst_113 : f32 to vector<64x192xf32>
    %167 = arith.addf %166, %165 : vector<64x192xf32>
    %168 = arith.divf %166, %167 : vector<64x192xf32>
    %169 = vector.extract_strided_slice %162 {offsets = [0, 192], sizes = [64, 64], strides = [1, 1]} : vector<64x256xf32> to vector<64x64xf32>
    %170 = math.tanh %169 : vector<64x64xf32>
    %171 = vector.extract_strided_slice %168 {offsets = [0, 0], sizes = [64, 64], strides = [1, 1]} : vector<64x192xf32> to vector<64x64xf32>
    %172 = vector.extract_strided_slice %168 {offsets = [0, 64], sizes = [64, 64], strides = [1, 1]} : vector<64x192xf32> to vector<64x64xf32>
    %173 = vector.extract_strided_slice %168 {offsets = [0, 128], sizes = [64, 64], strides = [1, 1]} : vector<64x192xf32> to vector<64x64xf32>
    %c0_114 = arith.constant 0 : index
    %c0_115 = arith.constant 0 : index
    %174 = vector.load %arg10[%c0_114, %c0_115] : memref<64x64xf32, #tpu.memory_space<vmem>>, vector<64x64xf32>
    %175 = arith.mulf %172, %174 : vector<64x64xf32>
    %176 = arith.mulf %171, %170 : vector<64x64xf32>
    %177 = arith.addf %175, %176 : vector<64x64xf32>
    %178 = math.tanh %177 : vector<64x64xf32>
    %179 = arith.mulf %173, %178 : vector<64x64xf32>
    %c0_116 = arith.constant 0 : index
    %c0_117 = arith.constant 0 : index
    %180 = vector.load %arg10[%c0_116, %c0_117] : memref<64x64xf32, #tpu.memory_space<vmem>>, vector<64x64xf32>
    tpu.vector_store %arg10[%c0_116, %c0_117], %177 {strides = array<i32>} : memref<64x64xf32, #tpu.memory_space<vmem>>, vector<64x64xf32>,
    %c0_118 = arith.constant 0 : index
    %c0_119 = arith.constant 0 : index
    %181 = vector.load %arg9[%c0_118, %c0_119] : memref<64x64xf32, #tpu.memory_space<vmem>>, vector<64x64xf32>
    tpu.vector_store %arg9[%c0_118, %c0_119], %179 {strides = array<i32>} : memref<64x64xf32, #tpu.memory_space<vmem>>, vector<64x64xf32>,
    %c0_120 = arith.constant 0 : index
    %c0_121 = arith.constant 0 : index
    %182 = vector.load %arg11[%c0_120, %c0_121] : memref<64x64xf32, #tpu.memory_space<vmem>>, vector<64x64xf32>
    %cst_122 = arith.constant 0.000000e+00 : f32
    %183 = vector.broadcast %cst_122 : f32 to vector<64x64xf32>
    %184 = arith.maximumf %179, %183 : vector<64x64xf32>
    %185 = arith.addf %182, %184 : vector<64x64xf32>
    %c0_123 = arith.constant 0 : index
    %c0_124 = arith.constant 0 : index
    %186 = vector.load %arg11[%c0_123, %c0_124] : memref<64x64xf32, #tpu.memory_space<vmem>>, vector<64x64xf32>
    tpu.vector_store %arg11[%c0_123, %c0_124], %185 {strides = array<i32>} : memref<64x64xf32, #tpu.memory_space<vmem>>, vector<64x64xf32>,
    %c0_125 = arith.constant 0 : index
    %c1536 = arith.constant 1536 : index
    %187 = vector.load %arg8[%c0_125, %c1536] : memref<64x2048xf32, #tpu.memory_space<vmem>>, vector<64x256xf32>
    %c0_126 = arith.constant 0 : index
    %c0_127 = arith.constant 0 : index
    %188 = vector.load %arg9[%c0_126, %c0_127] : memref<64x64xf32, #tpu.memory_space<vmem>>, vector<64x64xf32>
    %c0_128 = arith.constant 0 : index
    %c0_129 = arith.constant 0 : index
    %189 = vector.load %arg3[%c0_128, %c0_129] : memref<64x256xf32, #tpu.memory_space<vmem>>, vector<64x256xf32>
    %cst_130 = arith.constant dense<0.000000e+00> : vector<64x256xf32>
    %190 = tpu.matmul %188, %189, %cst_130 {dimension_numbers = #tpu.dot_dimension_numbers<[1], [0], [0], [1], [0, 0, 1, 1], [], []>} : vector<64x64xf32>, vector<64x256xf32>, vector<64x256xf32> -> vector<64x256xf32>
    %191 = arith.addf %187, %190 : vector<64x256xf32>
    %192 = vector.extract_strided_slice %191 {offsets = [0, 0], sizes = [64, 192], strides = [1, 1]} : vector<64x256xf32> to vector<64x192xf32>
    %193 = arith.negf %192 : vector<64x192xf32>
    %194 = math.exp %193 : vector<64x192xf32>
    %cst_131 = arith.constant 1.000000e+00 : f32
    %195 = vector.broadcast %cst_131 : f32 to vector<64x192xf32>
    %196 = arith.addf %195, %194 : vector<64x192xf32>
    %197 = arith.divf %195, %196 : vector<64x192xf32>
    %198 = vector.extract_strided_slice %191 {offsets = [0, 192], sizes = [64, 64], strides = [1, 1]} : vector<64x256xf32> to vector<64x64xf32>
    %199 = math.tanh %198 : vector<64x64xf32>
    %200 = vector.extract_strided_slice %197 {offsets = [0, 0], sizes = [64, 64], strides = [1, 1]} : vector<64x192xf32> to vector<64x64xf32>
    %201 = vector.extract_strided_slice %197 {offsets = [0, 64], sizes = [64, 64], strides = [1, 1]} : vector<64x192xf32> to vector<64x64xf32>
    %202 = vector.extract_strided_slice %197 {offsets = [0, 128], sizes = [64, 64], strides = [1, 1]} : vector<64x192xf32> to vector<64x64xf32>
    %c0_132 = arith.constant 0 : index
    %c0_133 = arith.constant 0 : index
    %203 = vector.load %arg10[%c0_132, %c0_133] : memref<64x64xf32, #tpu.memory_space<vmem>>, vector<64x64xf32>
    %204 = arith.mulf %201, %203 : vector<64x64xf32>
    %205 = arith.mulf %200, %199 : vector<64x64xf32>
    %206 = arith.addf %204, %205 : vector<64x64xf32>
    %207 = math.tanh %206 : vector<64x64xf32>
    %208 = arith.mulf %202, %207 : vector<64x64xf32>
    %c0_134 = arith.constant 0 : index
    %c0_135 = arith.constant 0 : index
    %209 = vector.load %arg10[%c0_134, %c0_135] : memref<64x64xf32, #tpu.memory_space<vmem>>, vector<64x64xf32>
    tpu.vector_store %arg10[%c0_134, %c0_135], %206 {strides = array<i32>} : memref<64x64xf32, #tpu.memory_space<vmem>>, vector<64x64xf32>,
    %c0_136 = arith.constant 0 : index
    %c0_137 = arith.constant 0 : index
    %210 = vector.load %arg9[%c0_136, %c0_137] : memref<64x64xf32, #tpu.memory_space<vmem>>, vector<64x64xf32>
    tpu.vector_store %arg9[%c0_136, %c0_137], %208 {strides = array<i32>} : memref<64x64xf32, #tpu.memory_space<vmem>>, vector<64x64xf32>,
    %c0_138 = arith.constant 0 : index
    %c0_139 = arith.constant 0 : index
    %211 = vector.load %arg11[%c0_138, %c0_139] : memref<64x64xf32, #tpu.memory_space<vmem>>, vector<64x64xf32>
    %cst_140 = arith.constant 0.000000e+00 : f32
    %212 = vector.broadcast %cst_140 : f32 to vector<64x64xf32>
    %213 = arith.maximumf %208, %212 : vector<64x64xf32>
    %214 = arith.addf %211, %213 : vector<64x64xf32>
    %c0_141 = arith.constant 0 : index
    %c0_142 = arith.constant 0 : index
    %215 = vector.load %arg11[%c0_141, %c0_142] : memref<64x64xf32, #tpu.memory_space<vmem>>, vector<64x64xf32>
    tpu.vector_store %arg11[%c0_141, %c0_142], %214 {strides = array<i32>} : memref<64x64xf32, #tpu.memory_space<vmem>>, vector<64x64xf32>,
    %c0_143 = arith.constant 0 : index
    %c1792 = arith.constant 1792 : index
    %216 = vector.load %arg8[%c0_143, %c1792] : memref<64x2048xf32, #tpu.memory_space<vmem>>, vector<64x256xf32>
    %c0_144 = arith.constant 0 : index
    %c0_145 = arith.constant 0 : index
    %217 = vector.load %arg9[%c0_144, %c0_145] : memref<64x64xf32, #tpu.memory_space<vmem>>, vector<64x64xf32>
    %c0_146 = arith.constant 0 : index
    %c0_147 = arith.constant 0 : index
    %218 = vector.load %arg3[%c0_146, %c0_147] : memref<64x256xf32, #tpu.memory_space<vmem>>, vector<64x256xf32>
    %cst_148 = arith.constant dense<0.000000e+00> : vector<64x256xf32>
    %219 = tpu.matmul %217, %218, %cst_148 {dimension_numbers = #tpu.dot_dimension_numbers<[1], [0], [0], [1], [0, 0, 1, 1], [], []>} : vector<64x64xf32>, vector<64x256xf32>, vector<64x256xf32> -> vector<64x256xf32>
    %220 = arith.addf %216, %219 : vector<64x256xf32>
    %221 = vector.extract_strided_slice %220 {offsets = [0, 0], sizes = [64, 192], strides = [1, 1]} : vector<64x256xf32> to vector<64x192xf32>
    %222 = arith.negf %221 : vector<64x192xf32>
    %223 = math.exp %222 : vector<64x192xf32>
    %cst_149 = arith.constant 1.000000e+00 : f32
    %224 = vector.broadcast %cst_149 : f32 to vector<64x192xf32>
    %225 = arith.addf %224, %223 : vector<64x192xf32>
    %226 = arith.divf %224, %225 : vector<64x192xf32>
    %227 = vector.extract_strided_slice %220 {offsets = [0, 192], sizes = [64, 64], strides = [1, 1]} : vector<64x256xf32> to vector<64x64xf32>
    %228 = math.tanh %227 : vector<64x64xf32>
    %229 = vector.extract_strided_slice %226 {offsets = [0, 0], sizes = [64, 64], strides = [1, 1]} : vector<64x192xf32> to vector<64x64xf32>
    %230 = vector.extract_strided_slice %226 {offsets = [0, 64], sizes = [64, 64], strides = [1, 1]} : vector<64x192xf32> to vector<64x64xf32>
    %231 = vector.extract_strided_slice %226 {offsets = [0, 128], sizes = [64, 64], strides = [1, 1]} : vector<64x192xf32> to vector<64x64xf32>
    %c0_150 = arith.constant 0 : index
    %c0_151 = arith.constant 0 : index
    %232 = vector.load %arg10[%c0_150, %c0_151] : memref<64x64xf32, #tpu.memory_space<vmem>>, vector<64x64xf32>
    %233 = arith.mulf %230, %232 : vector<64x64xf32>
    %234 = arith.mulf %229, %228 : vector<64x64xf32>
    %235 = arith.addf %233, %234 : vector<64x64xf32>
    %236 = math.tanh %235 : vector<64x64xf32>
    %237 = arith.mulf %231, %236 : vector<64x64xf32>
    %c0_152 = arith.constant 0 : index
    %c0_153 = arith.constant 0 : index
    %238 = vector.load %arg10[%c0_152, %c0_153] : memref<64x64xf32, #tpu.memory_space<vmem>>, vector<64x64xf32>
    tpu.vector_store %arg10[%c0_152, %c0_153], %235 {strides = array<i32>} : memref<64x64xf32, #tpu.memory_space<vmem>>, vector<64x64xf32>,
    %c0_154 = arith.constant 0 : index
    %c0_155 = arith.constant 0 : index
    %239 = vector.load %arg9[%c0_154, %c0_155] : memref<64x64xf32, #tpu.memory_space<vmem>>, vector<64x64xf32>
    tpu.vector_store %arg9[%c0_154, %c0_155], %237 {strides = array<i32>} : memref<64x64xf32, #tpu.memory_space<vmem>>, vector<64x64xf32>,
    %c0_156 = arith.constant 0 : index
    %c0_157 = arith.constant 0 : index
    %240 = vector.load %arg11[%c0_156, %c0_157] : memref<64x64xf32, #tpu.memory_space<vmem>>, vector<64x64xf32>
    %cst_158 = arith.constant 0.000000e+00 : f32
    %241 = vector.broadcast %cst_158 : f32 to vector<64x64xf32>
    %242 = arith.maximumf %237, %241 : vector<64x64xf32>
    %243 = arith.addf %240, %242 : vector<64x64xf32>
    %c0_159 = arith.constant 0 : index
    %c0_160 = arith.constant 0 : index
    %244 = vector.load %arg11[%c0_159, %c0_160] : memref<64x64xf32, #tpu.memory_space<vmem>>, vector<64x64xf32>
    tpu.vector_store %arg11[%c0_159, %c0_160], %243 {strides = array<i32>} : memref<64x64xf32, #tpu.memory_space<vmem>>, vector<64x64xf32>,
    %c0_161 = arith.constant 0 : index
    %c0_162 = arith.constant 0 : index
    %245 = vector.load %arg11[%c0_161, %c0_162] : memref<64x64xf32, #tpu.memory_space<vmem>>, vector<64x64xf32>
    %cst_163 = arith.constant 1.250000e-01 : f32
    %246 = vector.broadcast %cst_163 : f32 to vector<64x64xf32>
    %247 = arith.mulf %245, %246 : vector<64x64xf32>
    %c0_164 = arith.constant 0 : index
    %c0_165 = arith.constant 0 : index
    %248 = vector.load %arg5[%c0_164, %c0_165] : memref<64x128xf32, #tpu.memory_space<vmem>>, vector<64x128xf32>
    %cst_166 = arith.constant dense<0.000000e+00> : vector<64x128xf32>
    %249 = tpu.matmul %247, %248, %cst_166 {dimension_numbers = #tpu.dot_dimension_numbers<[1], [0], [0], [1], [0, 0, 1, 1], [], []>} : vector<64x64xf32>, vector<64x128xf32>, vector<64x128xf32> -> vector<64x128xf32>
    %c0_167 = arith.constant 0 : index
    %c0_168 = arith.constant 0 : index
    %250 = vector.load %arg6[%c0_167, %c0_168] : memref<1x128xf32, #tpu.memory_space<vmem>>, vector<1x128xf32>
    %251 = vector.broadcast %250 : vector<1x128xf32> to vector<64x128xf32>
    %252 = arith.addf %249, %251 : vector<64x128xf32>
    %c0_169 = arith.constant 0 : index
    %c0_170 = arith.constant 0 : index
    %253 = vector.load %arg7[%c0_169, %c0_170] : memref<64x128xf32, #tpu.memory_space<vmem>>, vector<64x128xf32>
    tpu.vector_store %arg7[%c0_169, %c0_170], %252 {strides = array<i32>} : memref<64x128xf32, #tpu.memory_space<vmem>>, vector<64x128xf32>,
    return
  }
  func.func @transform_0(%arg0: i32) -> (i32, i32) {
    %c0_i32 = arith.constant 0 : i32
    %c0_i32_0 = arith.constant 0 : i32
    return %arg0, %c0_i32 : i32, i32
  }
  func.func @transform_1(%arg0: i32) -> (i32, i32) {
    %c0_i32 = arith.constant 0 : i32
    %c0_i32_0 = arith.constant 0 : i32
    %c0_i32_1 = arith.constant 0 : i32
    return %c0_i32, %c0_i32_0 : i32, i32
  }
  func.func @transform_2(%arg0: i32) -> (i32, i32) {
    %c0_i32 = arith.constant 0 : i32
    %c0_i32_0 = arith.constant 0 : i32
    %c0_i32_1 = arith.constant 0 : i32
    return %c0_i32, %c0_i32_0 : i32, i32
  }
  func.func @transform_3(%arg0: i32) -> (i32, i32) {
    %c0_i32 = arith.constant 0 : i32
    %c0_i32_0 = arith.constant 0 : i32
    %c0_i32_1 = arith.constant 0 : i32
    return %c0_i32, %c0_i32_0 : i32, i32
  }
  func.func @transform_4(%arg0: i32) -> (i32, i32) {
    %c0_i32 = arith.constant 0 : i32
    %c0_i32_0 = arith.constant 0 : i32
    %c0_i32_1 = arith.constant 0 : i32
    return %c0_i32, %c0_i32_0 : i32, i32
  }
  func.func @transform_5(%arg0: i32) -> (i32, i32) {
    %c0_i32 = arith.constant 0 : i32
    %c0_i32_0 = arith.constant 0 : i32
    %c0_i32_1 = arith.constant 0 : i32
    return %c0_i32, %c0_i32_0 : i32, i32
  }
  func.func @transform_6(%arg0: i32) -> (i32, i32) {
    %c0_i32 = arith.constant 0 : i32
    %c0_i32_0 = arith.constant 0 : i32
    return %arg0, %c0_i32 : i32, i32
  }
}

</mosaic_0001>

<llo_original>
// kernel: tpu_custom_call.1
$region0: #{tpu_custom_call.1}
  #allocation0 [shape = 'u32[]', space=smem, size = 0x4, offset = 0x4, fixed_abs, tag = 'smem constant byte address 0x4 - core index']
  #allocation1 [shape = 'u32[144,128]{1,0:T(1,128)}', space=vmem, size = 0x12000, scoped, tag = 'internal scratch']
  #allocation2 [shape = 'f32[64,2048]{1,0:T(8,128)}', space=vmem, size = 0x80000, scoped, tag = 'scratch operand']
  #allocation3 [shape = 'f32[64,64]{1,0:T(8,128)}', space=vmem, size = 0x8000, scoped, tag = 'scratch operand']
  #allocation4 [shape = 'f32[64,64]{1,0:T(8,128)}', space=vmem, size = 0x8000, scoped, tag = 'scratch operand']
  #allocation5 [shape = 'f32[64,64]{1,0:T(8,128)}', space=vmem, size = 0x8000, scoped, tag = 'scratch operand']
  %s0 = inlined_call_operand.vmem [shape: bf16[128,32], index: 0, kind: input, shape index: {}]
  %s1 = inlined_call_operand.hbm [shape: bf16[32,2048], index: 1, kind: input, shape index: {}]
  %s2 = inlined_call_operand.hbm [shape: f32[64,256], index: 2, kind: input, shape index: {}]
  %s3 = inlined_call_operand.vmem [shape: f32[1,2048], index: 3, kind: input, shape index: {}]
  %s4 = inlined_call_operand.vmem [shape: f32[64,128], index: 4, kind: input, shape index: {}]
  %s5 = inlined_call_operand.vmem [shape: f32[1,128], index: 5, kind: input, shape index: {}]
  %s6 = inlined_call_operand.hbm [shape: f32[128,128], index: 6, kind: output, shape index: {}]
  %s7 = sld [smem:[#allocation0]]
  $region65: #{tpu_custom_call.1} parent=0
    _
  %s9 = ssub.s32 1, %s7
  %s10 = scalar_select 0, %s9, %s7
  $region1: #{tpu_custom_call.1} parent=0
    #allocation6 [shape = 'u8[131072]{0}', space=vmem, size = 0x20000, scoped, tag = 'input window, operand 1, single buffered']
    #allocation7 [shape = 's32[2]{0}', space=sflag, size = 0x8, scoped, tag = 'scoped memory for tpu_custom_call.1']
    #allocation8 [shape = 's32[2]{0}', space=sflag, size = 0x8, scoped, tag = 'scoped memory for tpu_custom_call.1']
    #allocation9 [shape = 'u8[65536]{0}', space=vmem, size = 0x10000, scoped, tag = 'input window, operand 2, single buffered']
    #allocation10 [shape = 's32[1]{0}', space=sflag, size = 0x4, scoped, tag = 'scoped memory for tpu_custom_call.1']
    #allocation11 [shape = 'u8[65536]{0}', space=vmem, size = 0x10000, scoped, tag = 'output window, operand 0']
    %11 = vsyncpa [#allocation7], 0
    %12 = vsyncpa [#allocation10], 0
    %13 = vsyncpa [#allocation8], 0
    %s14 = scalar_lea.sflag [#allocation8], 1
    %15 = vsyncpa %s14, 0
    loop: start=0, step=1, limit=4
    $region2: #{tpu_custom_call.1} parent=1 // loop_pre_header
      _
    $region3: #{tpu_custom_call.1} parent=1 // loop_header
      %s17 = sphi 0, %s21
      %p18 = scmp.ge.s32.totalorder %s17, 4
      %s27 = sphi 0, %s29
      %s30 = sphi 0, %s27
      %s31 = sphi 0, %s30
      %s47 = sphi 0, %s31
      %s51 = sphi 0, %s51
      %s53 = sphi 0, %s51
      %s54 = sphi 0, %s53
      %s68 = sphi 0, %s54
      %s72 = sphi 0, %s72
      %s74 = sphi 0, %s72
      %s75 = sphi 0, %s74
      %s89 = sphi 0, %s75
      %s93 = sphi 0, %s93
      %s95 = sphi 0, %s93
      %s96 = sphi 0, %s95
      %s110 = sphi 0, %s96
      %s114 = sphi 0, %s114
      %s116 = sphi 0, %s114
      %s117 = sphi 0, %s116
      %s131 = sphi 0, %s117
      %s135 = sphi 0, %s135
      %s137 = sphi 0, %s135
      %s138 = sphi 0, %s137
      %s152 = sphi 0, %s138
      %s158 = sphi 0, %s160
      %s161 = sphi 0, %s158
      %s162 = sphi 0, %s161
      %s178 = sphi 0, %s162
    $region4: #{tpu_custom_call.1} parent=1 // loop_header_branch
      %20 = sbr.rel (%p18) target = $region8
    $region5: #{tpu_custom_call.1} parent=1 // loop_body
      %s22 = ssub.s32 %s17, 1
      %s23 = ssub.s32 %s17, 2
      %s24 = sadd.s32 %s17, 1
      %s25 = ssub.s32 %s17, %s24
      %p26 = scmp.eq.s32.totalorder %s25, 0
      %s28 = sadd.s32 %s27, 1
      %s29 = scalar_select %p26, %s27, %s28
      %p32 = pneg %p26
      %p33 = scmp.eq.s32.totalorder %s17, 1
      %p34 = por %p32, %p33
      %p35 = scmp.ne.s32.totalorder %s27, %s30
      %p36 = scmp.eq.s32.totalorder %s17, 0
      %p37 = por %p35, %p36
      %p38 = scmp.ne.s32.totalorder %s27, %s30
      %p39 = scmp.eq.s32.totalorder %s22, 1
      %p40 = por %p38, %p39
      %p41 = scmp.ne.s32.totalorder %s30, %s31
      %p42 = scmp.eq.s32.totalorder %s22, 0
      %p43 = por %p41, %p42
      %p44 = scmp.ne.s32.totalorder %s30, %s31
      %p45 = scmp.eq.s32.totalorder %s23, 1
      %p46 = por %p44, %p45
      %p48 = scmp.ne.s32.totalorder %s31, %s47
      %p49 = scmp.eq.s32.totalorder %s23, 0
      %p50 = por %p48, %p49
      %s52 = sadd.s32 %s51, 1
      %p55 = scmp.eq.s32.totalorder %s17, 1
      %p56 = scmp.ne.s32.totalorder %s51, %s53
      %p57 = scmp.eq.s32.totalorder %s17, 0
      %p58 = por %p56, %p57
      %p59 = scmp.ne.s32.totalorder %s51, %s53
      %p60 = scmp.eq.s32.totalorder %s22, 1
      %p61 = por %p59, %p60
      %p62 = scmp.ne.s32.totalorder %s53, %s54
      %p63 = scmp.eq.s32.totalorder %s22, 0
      %p64 = por %p62, %p63
      %p65 = scmp.ne.s32.totalorder %s53, %s54
      %p66 = scmp.eq.s32.totalorder %s23, 1
      %p67 = por %p65, %p66
      %p69 = scmp.ne.s32.totalorder %s54, %s68
      %p70 = scmp.eq.s32.totalorder %s23, 0
      %p71 = por %p69, %p70
      %s73 = sadd.s32 %s72, 1
      %p76 = scmp.eq.s32.totalorder %s17, 1
      %p77 = scmp.ne.s32.totalorder %s72, %s74
      %p78 = scmp.eq.s32.totalorder %s17, 0
      %p79 = por %p77, %p78
      %p80 = scmp.ne.s32.totalorder %s72, %s74
      %p81 = scmp.eq.s32.totalorder %s22, 1
      %p82 = por %p80, %p81
      %p83 = scmp.ne.s32.totalorder %s74, %s75
      %p84 = scmp.eq.s32.totalorder %s22, 0
      %p85 = por %p83, %p84
      %p86 = scmp.ne.s32.totalorder %s74, %s75
      %p87 = scmp.eq.s32.totalorder %s23, 1
      %p88 = por %p86, %p87
      %p90 = scmp.ne.s32.totalorder %s75, %s89
      %p91 = scmp.eq.s32.totalorder %s23, 0
      %p92 = por %p90, %p91
      %s94 = sadd.s32 %s93, 1
      %p97 = scmp.eq.s32.totalorder %s17, 1
      %p98 = scmp.ne.s32.totalorder %s93, %s95
      %p99 = scmp.eq.s32.totalorder %s17, 0
      %p100 = por %p98, %p99
      %p101 = scmp.ne.s32.totalorder %s93, %s95
      %p102 = scmp.eq.s32.totalorder %s22, 1
      %p103 = por %p101, %p102
      %p104 = scmp.ne.s32.totalorder %s95, %s96
      %p105 = scmp.eq.s32.totalorder %s22, 0
      %p106 = por %p104, %p105
      %p107 = scmp.ne.s32.totalorder %s95, %s96
      %p108 = scmp.eq.s32.totalorder %s23, 1
      %p109 = por %p107, %p108
      %p111 = scmp.ne.s32.totalorder %s96, %s110
      %p112 = scmp.eq.s32.totalorder %s23, 0
      %p113 = por %p111, %p112
      %s115 = sadd.s32 %s114, 1
      %p118 = scmp.eq.s32.totalorder %s17, 1
      %p119 = scmp.ne.s32.totalorder %s114, %s116
      %p120 = scmp.eq.s32.totalorder %s17, 0
      %p121 = por %p119, %p120
      %p122 = scmp.ne.s32.totalorder %s114, %s116
      %p123 = scmp.eq.s32.totalorder %s22, 1
      %p124 = por %p122, %p123
      %p125 = scmp.ne.s32.totalorder %s116, %s117
      %p126 = scmp.eq.s32.totalorder %s22, 0
      %p127 = por %p125, %p126
      %p128 = scmp.ne.s32.totalorder %s116, %s117
      %p129 = scmp.eq.s32.totalorder %s23, 1
      %p130 = por %p128, %p129
      %p132 = scmp.ne.s32.totalorder %s117, %s131
      %p133 = scmp.eq.s32.totalorder %s23, 0
      %p134 = por %p132, %p133
      %s136 = sadd.s32 %s135, 1
      %p139 = scmp.eq.s32.totalorder %s17, 1
      %p140 = scmp.ne.s32.totalorder %s135, %s137
      %p141 = scmp.eq.s32.totalorder %s17, 0
      %p142 = por %p140, %p141
      %p143 = scmp.ne.s32.totalorder %s135, %s137
      %p144 = scmp.eq.s32.totalorder %s22, 1
      %p145 = por %p143, %p144
      %p146 = scmp.ne.s32.totalorder %s137, %s138
      %p147 = scmp.eq.s32.totalorder %s22, 0
      %p148 = por %p146, %p147
      %p149 = scmp.ne.s32.totalorder %s137, %s138
      %p150 = scmp.eq.s32.totalorder %s23, 1
      %p151 = por %p149, %p150
      %p153 = scmp.ne.s32.totalorder %s138, %s152
      %p154 = scmp.eq.s32.totalorder %s23, 0
      %p155 = por %p153, %p154
      %s156 = ssub.s32 %s17, %s24
      %p157 = scmp.eq.s32.totalorder %s156, 0
      %s159 = sadd.s32 %s158, 1
      %s160 = scalar_select %p157, %s158, %s159
      %p163 = pneg %p157
      %p164 = scmp.eq.s32.totalorder %s17, 1
      %p165 = por %p163, %p164
      %p166 = scmp.ne.s32.totalorder %s158, %s161
      %p167 = scmp.eq.s32.totalorder %s17, 0
      %p168 = por %p166, %p167
      %p169 = scmp.ne.s32.totalorder %s158, %s161
      %p170 = scmp.eq.s32.totalorder %s22, 1
      %p171 = por %p169, %p170
      %p172 = scmp.ne.s32.totalorder %s161, %s162
      %p173 = scmp.eq.s32.totalorder %s22, 0
      %p174 = por %p172, %p173
      %p175 = scmp.ne.s32.totalorder %s161, %s162
      %p176 = scmp.eq.s32.totalorder %s23, 1
      %p177 = por %p175, %p176
      %p179 = scmp.ne.s32.totalorder %s162, %s178
      %p180 = scmp.eq.s32.totalorder %s23, 0
      %p181 = por %p179, %p180
      %p182 = scmp.le.s32.totalorder 1, %s17
      %p183 = scmp.lt.s32.totalorder %s17, 3
      %p184 = pnand %p182, %p183
      %p185 = pneg %p184
      // Predicated region
      $region9: #{tpu_custom_call.1} parent=5 // pred_check
        _
      $region10: #{tpu_custom_call.1} parent=5 // pred_check_branch
        %187 = sbr.rel (%p184) target = $region12
      $region11: #{tpu_custom_call.1} parent=5 // pred_region
        %s188 = ssub.s32 %s17, 1
        // Predicated region
        $region13: #{tpu_custom_call.1} parent=11 // pred_check
          %p189 = pneg %p64
        $region14: #{tpu_custom_call.1} parent=11 // pred_check_branch
          %191 = sbr.rel (%p189) target = $region16
        $region15: #{tpu_custom_call.1} parent=11 // pred_region
          %s193 = ssub.s32 4096, 4096
          %194 = vsyncadd [#allocation7], %s193
          %s195 = sshll.u32 [#allocation6], 4
          %s196 = int_to_ptr.vmem [resolvable:$true] %s195
          %201 = dma.hbm_to_vmem [thread:$0]  %s1, 4096, %s196, [#allocation7], 1024, 1024, 64
        $region16: #{tpu_custom_call.1} parent=11 // pred_fallthru
          _
        // Predicated region
        $region17: #{tpu_custom_call.1} parent=11 // pred_check
          %p202 = pneg %p85
        $region18: #{tpu_custom_call.1} parent=11 // pred_check_branch
          %204 = sbr.rel (%p202) target = $region20
        $region19: #{tpu_custom_call.1} parent=11 // pred_region
          %s206 = ssub.s32 2048, 2048
          %207 = vsyncadd [#allocation10], %s206
          %s208 = sshll.u32 [#allocation9], 4
          %s209 = int_to_ptr.vmem [resolvable:$true] %s208
          %214 = dma.hbm_to_vmem [thread:$0]  %s2, 2048, %s209, [#allocation10], 256, 256, 16
        $region20: #{tpu_custom_call.1} parent=11 // pred_fallthru
          _
        // Predicated region
        $region21: #{tpu_custom_call.1} parent=11 // pred_check
          %p215 = pneg %p106
        $region22: #{tpu_custom_call.1} parent=11 // pred_check_branch
          %217 = sbr.rel (%p215) target = $region24
        $region23: #{tpu_custom_call.1} parent=11 // pred_region
          _
        $region24: #{tpu_custom_call.1} parent=11 // pred_fallthru
          _
        // Predicated region
        $region25: #{tpu_custom_call.1} parent=11 // pred_check
          %p218 = pneg %p127
        $region26: #{tpu_custom_call.1} parent=11 // pred_check_branch
          %220 = sbr.rel (%p218) target = $region28
        $region27: #{tpu_custom_call.1} parent=11 // pred_region
          _
        $region28: #{tpu_custom_call.1} parent=11 // pred_fallthru
          _
        // Predicated region
        $region29: #{tpu_custom_call.1} parent=11 // pred_check
          %p221 = pneg %p148
        $region30: #{tpu_custom_call.1} parent=11 // pred_check_branch
          %223 = sbr.rel (%p221) target = $region32
        $region31: #{tpu_custom_call.1} parent=11 // pred_region
          _
        $region32: #{tpu_custom_call.1} parent=11 // pred_fallthru
          _
      $region12: #{tpu_custom_call.1} parent=5 // pred_fallthru
        _
      %p224 = scmp.lt.s32.totalorder %s17, 2
      // Predicated region
      $region33: #{tpu_custom_call.1} parent=5 // pred_check
        %p225 = pneg %p224
      $region34: #{tpu_custom_call.1} parent=5 // pred_check_branch
        %227 = sbr.rel (%p225) target = $region36
      $region35: #{tpu_custom_call.1} parent=5 // pred_region
        // Predicated region
        $region37: #{tpu_custom_call.1} parent=35 // pred_check
          %p228 = pneg %p37
        $region38: #{tpu_custom_call.1} parent=35 // pred_check_branch
          %230 = sbr.rel (%p228) target = $region40
        $region39: #{tpu_custom_call.1} parent=35 // pred_region
          %s231 = smul.u32 8, %s17
          %p232 = scmp.lt.s32.totalorder %s231, 15
          %s233 = scalar_select %p232, %s231, 15
          %s234 = smul.addr %s233, 4
          %s235 = scalar_lea.vmem %s0, %s234
          %s236 = smul.u32 8, %s17
        $region40: #{tpu_custom_call.1} parent=35 // pred_fallthru
          _
      $region36: #{tpu_custom_call.1} parent=5 // pred_fallthru
        _
      %p237 = scmp.le.s32.totalorder 1, %s17
      %p238 = scmp.lt.s32.totalorder %s17, 3
      %p239 = pnand %p237, %p238
      %p240 = pneg %p239
      // Predicated region
      $region41: #{tpu_custom_call.1} parent=5 // pred_check
        _
      $region42: #{tpu_custom_call.1} parent=5 // pred_check_branch
        %242 = sbr.rel (%p239) target = $region44
      $region43: #{tpu_custom_call.1} parent=5 // pred_region
        %s243 = ssub.s32 %s17, 1
        // Predicated region
        $region45: #{tpu_custom_call.1} parent=43 // pred_check
          %p244 = pneg %p64
        $region46: #{tpu_custom_call.1} parent=43 // pred_check_branch
          %246 = sbr.rel (%p244) target = $region48
        $region47: #{tpu_custom_call.1} parent=43 // pred_region
          %247 = dma.done [#allocation7], 4096
        $region48: #{tpu_custom_call.1} parent=43 // pred_fallthru
          _
        // Predicated region
        $region49: #{tpu_custom_call.1} parent=43 // pred_check
          %p248 = pneg %p85
        $region50: #{tpu_custom_call.1} parent=43 // pred_check_branch
          %250 = sbr.rel (%p248) target = $region52
        $region51: #{tpu_custom_call.1} parent=43 // pred_region
          %251 = dma.done [#allocation10], 2048
        $region52: #{tpu_custom_call.1} parent=43 // pred_fallthru
          _
        %s252 = smul.u32 8, %s22
        %p253 = scmp.lt.s32.totalorder %s252, 15
        %s254 = scalar_select %p253, %s252, 15
        %s255 = smul.addr %s254, 4
        %s256 = scalar_lea.vmem %s0, %s255
        %p257 = pneg %p43
        %p258 = pneg %p40
        %p259 = pneg %p64
        %p260 = pneg %p61
        %p261 = pneg %p85
        %p262 = pneg %p82
        %p263 = pneg %p106
        %p264 = pneg %p103
        %p265 = pneg %p127
        %p266 = pneg %p124
        %p267 = pneg %p148
        %p268 = pneg %p145
        %p269 = pneg %p174
        %p270 = pneg %p171
        %s271 = sand.u32 %s161, 1
        %s272 = scalar_lea.sflag [#allocation8], %s271
        %s273 = sand.u32 %s161, 1
        %s274 = smul.addr %s273, 64
        %s275 = scalar_lea.vmem [#allocation11], %s274
        %s276 = smul.u32 8, %s22
        %p277 = scmp.lt.s32.totalorder %s276, 15
        %s278 = scalar_select %p277, %s276, 15
        %s279 = smul.addr %s278, 4
        %s280 = scalar_lea.vmem %s0, %s279
        %s281 = smul.u32 8, %s22
        %s282 = smul.u32 8, %s22
        %v284 = vld [vmem:[%s280] sm:$0xf]
        %v285 = vld [vmem:[%s280 + $0x4] sm:$0xf]
        %v286 = vld [vmem:[%s280 + $0x8] sm:$0xf]
        %v287 = vld [vmem:[%s280 + $0xc] sm:$0xf]
        %v288 = vld [vmem:[%s280 + $0x10] sm:$0xf]
        %v289 = vld [vmem:[%s280 + $0x14] sm:$0xf]
        %v290 = vld [vmem:[%s280 + $0x18] sm:$0xf]
        %v291 = vld [vmem:[%s280 + $0x1c] sm:$0xf]
        %v292 = vld [vmem:[#allocation6] sm:$0xff]
        %v293 = vld [vmem:[#allocation6 + $0x8] sm:$0xff]
        %v294 = vld [vmem:[#allocation6 + $0x10] sm:$0xff]
        %v295 = vld [vmem:[#allocation6 + $0x18] sm:$0xff]
        %v296 = vld [vmem:[#allocation6 + $0x20] sm:$0xff]
        %v297 = vld [vmem:[#allocation6 + $0x28] sm:$0xff]
        %v298 = vld [vmem:[#allocation6 + $0x30] sm:$0xff]
        %v299 = vld [vmem:[#allocation6 + $0x38] sm:$0xff]
        %v300 = vld [vmem:[#allocation6 + $0x40] sm:$0xff]
        %v301 = vld [vmem:[#allocation6 + $0x48] sm:$0xff]
        %v302 = vld [vmem:[#allocation6 + $0x50] sm:$0xff]
        %v303 = vld [vmem:[#allocation6 + $0x58] sm:$0xff]
        %v304 = vld [vmem:[#allocation6 + $0x60] sm:$0xff]
        %v305 = vld [vmem:[#allocation6 + $0x68] sm:$0xff]
        %v306 = vld [vmem:[#allocation6 + $0x70] sm:$0xff]
        %v307 = vld [vmem:[#allocation6 + $0x78] sm:$0xff]
        %v308 = vld [vmem:[#allocation6 + $0x80] sm:$0xff]
        %v309 = vld [vmem:[#allocation6 + $0x88] sm:$0xff]
        %v310 = vld [vmem:[#allocation6 + $0x90] sm:$0xff]
        %v311 = vld [vmem:[#allocation6 + $0x98] sm:$0xff]
        %v312 = vld [vmem:[#allocation6 + $0xa0] sm:$0xff]
        %v313 = vld [vmem:[#allocation6 + $0xa8] sm:$0xff]
        %v314 = vld [vmem:[#allocation6 + $0xb0] sm:$0xff]
        %v315 = vld [vmem:[#allocation6 + $0xb8] sm:$0xff]
        %v316 = vld [vmem:[#allocation6 + $0xc0] sm:$0xff]
        %v317 = vld [vmem:[#allocation6 + $0xc8] sm:$0xff]
        %v318 = vld [vmem:[#allocation6 + $0xd0] sm:$0xff]
        %v319 = vld [vmem:[#allocation6 + $0xd8] sm:$0xff]
        %v320 = vld [vmem:[#allocation6 + $0xe0] sm:$0xff]
        %v321 = vld [vmem:[#allocation6 + $0xe8] sm:$0xff]
        %v322 = vld [vmem:[#allocation6 + $0xf0] sm:$0xff]
        %v323 = vld [vmem:[#allocation6 + $0xf8] sm:$0xff]
        %v324 = vld [vmem:[%s3] sm:$0xff]
        %v325 = vld [vmem:[%s3 + $0x8] sm:$0xff]
        %v328 = vlaneseq
        %v329 = vshrl.u32 %v328, 7
        %v330 = vsub.s32 0, %v329
        %v331 = vrot.slane %v324, %v330
        %v332 = vlaneseq
        %v333 = vshrl.u32 %v332, 7
        %v334 = vsub.s32 1, %v333
        %v335 = vrot.slane %v324, %v334
        %v336 = vlaneseq
        %v337 = vshrl.u32 %v336, 7
        %v338 = vsub.s32 2, %v337
        %v339 = vrot.slane %v324, %v338
        %v340 = vlaneseq
        %v341 = vshrl.u32 %v340, 7
        %v342 = vsub.s32 3, %v341
        %v343 = vrot.slane %v324, %v342
        %v344 = vlaneseq
        %v345 = vshrl.u32 %v344, 7
        %v346 = vsub.s32 4, %v345
        %v347 = vrot.slane %v324, %v346
        %v348 = vlaneseq
        %v349 = vshrl.u32 %v348, 7
        %v350 = vsub.s32 5, %v349
        %v351 = vrot.slane %v324, %v350
        %v352 = vlaneseq
        %v353 = vshrl.u32 %v352, 7
        %v354 = vsub.s32 6, %v353
        %v355 = vrot.slane %v324, %v354
        %v356 = vlaneseq
        %v357 = vshrl.u32 %v356, 7
        %v358 = vsub.s32 7, %v357
        %v359 = vrot.slane %v324, %v358
        %v360 = vlaneseq
        %v361 = vshrl.u32 %v360, 7
        %v362 = vsub.s32 0, %v361
        %v363 = vrot.slane %v325, %v362
        %v364 = vlaneseq
        %v365 = vshrl.u32 %v364, 7
        %v366 = vsub.s32 1, %v365
        %v367 = vrot.slane %v325, %v366
        %v368 = vlaneseq
        %v369 = vshrl.u32 %v368, 7
        %v370 = vsub.s32 2, %v369
        %v371 = vrot.slane %v325, %v370
        %v372 = vlaneseq
        %v373 = vshrl.u32 %v372, 7
        %v374 = vsub.s32 3, %v373
        %v375 = vrot.slane %v325, %v374
        %v376 = vlaneseq
        %v377 = vshrl.u32 %v376, 7
        %v378 = vsub.s32 4, %v377
        %v379 = vrot.slane %v325, %v378
        %v380 = vlaneseq
        %v381 = vshrl.u32 %v380, 7
        %v382 = vsub.s32 5, %v381
        %v383 = vrot.slane %v325, %v382
        %v384 = vlaneseq
        %v385 = vshrl.u32 %v384, 7
        %v386 = vsub.s32 6, %v385
        %v387 = vrot.slane %v325, %v386
        %v388 = vlaneseq
        %v389 = vshrl.u32 %v388, 7
        %v390 = vsub.s32 7, %v389
        %v391 = vrot.slane %v325, %v390
        %v416 = vunpack.c.l.b16 %v284
        %v417 = vunpack.c.l.b16 %v285
        %v418 = vunpack.c.l.b16 %v286
        %v419 = vunpack.c.l.b16 %v287
        %v420 = vunpack.c.l.b16 %v288
        %v421 = vunpack.c.l.b16 %v289
        %v422 = vunpack.c.l.b16 %v290
        %v423 = vunpack.c.l.b16 %v291
        %v424 = vpack.c.b16 %v417, %v416
        %v425 = vpack.c.b16 %v419, %v418
        %v426 = vpack.c.b16 %v421, %v420
        %v427 = vpack.c.b16 %v423, %v422
        %v460 = vunpack.c.l.b16 %v292
        %v461 = vunpack.c.h.b16 %v292
        %v462 = vunpack.c.l.b16 %v293
        %v463 = vunpack.c.h.b16 %v293
        %v464 = vunpack.c.l.b16 %v294
        %v465 = vunpack.c.h.b16 %v294
        %v466 = vunpack.c.l.b16 %v295
        %v467 = vunpack.c.h.b16 %v295
        %v468 = vunpack.c.l.b16 %v296
        %v469 = vunpack.c.h.b16 %v296
        %v470 = vunpack.c.l.b16 %v297
        %v471 = vunpack.c.h.b16 %v297
        %v472 = vunpack.c.l.b16 %v298
        %v473 = vunpack.c.h.b16 %v298
        %v474 = vunpack.c.l.b16 %v299
        %v475 = vunpack.c.h.b16 %v299
        %v476 = vunpack.c.l.b16 %v300
        %v477 = vunpack.c.h.b16 %v300
        %v478 = vunpack.c.l.b16 %v301
        %v479 = vunpack.c.h.b16 %v301
        %v480 = vunpack.c.l.b16 %v302
        %v481 = vunpack.c.h.b16 %v302
        %v482 = vunpack.c.l.b16 %v303
        %v483 = vunpack.c.h.b16 %v303
        %v484 = vunpack.c.l.b16 %v304
        %v485 = vunpack.c.h.b16 %v304
        %v486 = vunpack.c.l.b16 %v305
        %v487 = vunpack.c.h.b16 %v305
        %v488 = vunpack.c.l.b16 %v306
        %v489 = vunpack.c.h.b16 %v306
        %v490 = vunpack.c.l.b16 %v307
        %v491 = vunpack.c.h.b16 %v307
        %v492 = vunpack.c.l.b16 %v308
        %v493 = vunpack.c.h.b16 %v308
        %v494 = vunpack.c.l.b16 %v309
        %v495 = vunpack.c.h.b16 %v309
        %v496 = vunpack.c.l.b16 %v310
        %v497 = vunpack.c.h.b16 %v310
        %v498 = vunpack.c.l.b16 %v311
        %v499 = vunpack.c.h.b16 %v311
        %v500 = vunpack.c.l.b16 %v312
        %v501 = vunpack.c.h.b16 %v312
        %v502 = vunpack.c.l.b16 %v313
        %v503 = vunpack.c.h.b16 %v313
        %v504 = vunpack.c.l.b16 %v314
        %v505 = vunpack.c.h.b16 %v314
        %v506 = vunpack.c.l.b16 %v315
        %v507 = vunpack.c.h.b16 %v315
        %v508 = vunpack.c.l.b16 %v316
        %v509 = vunpack.c.h.b16 %v316
        %v510 = vunpack.c.l.b16 %v317
        %v511 = vunpack.c.h.b16 %v317
        %v512 = vunpack.c.l.b16 %v318
        %v513 = vunpack.c.h.b16 %v318
        %v514 = vunpack.c.l.b16 %v319
        %v515 = vunpack.c.h.b16 %v319
        %v516 = vunpack.c.l.b16 %v320
        %v517 = vunpack.c.h.b16 %v320
        %v518 = vunpack.c.l.b16 %v321
        %v519 = vunpack.c.h.b16 %v321
        %v520 = vunpack.c.l.b16 %v322
        %v521 = vunpack.c.h.b16 %v322
        %v522 = vunpack.c.l.b16 %v323
        %v523 = vunpack.c.h.b16 %v323
        %v524 = vpack.c.b16 %v476, %v460
        %v525 = vpack.c.b16 %v477, %v461
        %v526 = vpack.c.b16 %v478, %v462
        %v527 = vpack.c.b16 %v479, %v463
        %v528 = vpack.c.b16 %v480, %v464
        %v529 = vpack.c.b16 %v481, %v465
        %v530 = vpack.c.b16 %v482, %v466
        %v531 = vpack.c.b16 %v483, %v467
        %v532 = vpack.c.b16 %v484, %v468
        %v533 = vpack.c.b16 %v485, %v469
        %v534 = vpack.c.b16 %v486, %v470
        %v535 = vpack.c.b16 %v487, %v471
        %v536 = vpack.c.b16 %v488, %v472
        %v537 = vpack.c.b16 %v489, %v473
        %v538 = vpack.c.b16 %v490, %v474
        %v539 = vpack.c.b16 %v491, %v475
        %v540 = vpack.c.b16 %v508, %v492
        %v541 = vpack.c.b16 %v509, %v493
        %v542 = vpack.c.b16 %v510, %v494
        %v543 = vpack.c.b16 %v511, %v495
        %v544 = vpack.c.b16 %v512, %v496
        %v545 = vpack.c.b16 %v513, %v497
        %v546 = vpack.c.b16 %v514, %v498
        %v547 = vpack.c.b16 %v515, %v499
        %v548 = vpack.c.b16 %v516, %v500
        %v549 = vpack.c.b16 %v517, %v501
        %v550 = vpack.c.b16 %v518, %v502
        %v551 = vpack.c.b16 %v519, %v503
        %v552 = vpack.c.b16 %v520, %v504
        %v553 = vpack.c.b16 %v521, %v505
        %v554 = vpack.c.b16 %v522, %v506
        %v555 = vpack.c.b16 %v523, %v507
        %vm588 = vcmask 261120
        %v590 = vsel %vm588, %v424, 0
        %v593 = vsel %vm588, %v425, 0
        %v596 = vsel %vm588, %v426, 0
        %v599 = vsel %vm588, %v427, 0
        %601 = vmatprep.subr.bf16.mxu0 %v525
        %602 = vmatpush1.bf16.msra.mxu0 %v524
        %603 = vmatprep.subr.bf16.mxu0 %v541
        %604 = vmatpush1.bf16.msra.mxu0 %v540
        %605 = vmatprep.subr.bf16.mxu0 0
        %606 = vmatpush1.bf16.msra.mxu0 0
        %607 = vmatprep.subr.bf16.mxu0 0
        %608 = vmatpush1.bf16.msra.mxu0 0
        %609 = vmatprep.subr.bf16.mxu0 0
        %610 = vmatpush1.bf16.msra.mxu0 0
        %611 = vmatprep.subr.bf16.mxu0 0
        %612 = vmatpush1.bf16.msra.mxu0 0
        %613 = vmatprep.subr.bf16.mxu0 0
        %614 = vmatpush1.bf16.msra.mxu0 0
        %615 = vmatprep.subr.bf16.mxu0 0
        %616 = vmatpush1.bf16.msra.mxu0 0
        %617 = vmatprep.subr.bf16.mxu0 0
        %618 = vmatpush1.bf16.msra.mxu0 0
        %619 = vmatprep.subr.bf16.mxu0 0
        %620 = vmatpush1.bf16.msra.mxu0 0
        %621 = vmatprep.subr.bf16.mxu0 0
        %622 = vmatpush1.bf16.msra.mxu0 0
        %623 = vmatprep.subr.bf16.mxu0 0
        %624 = vmatpush1.bf16.msra.mxu0 0
        %625 = vmatprep.subr.bf16.mxu0 0
        %626 = vmatpush1.bf16.msra.mxu0 0
        %627 = vmatprep.subr.bf16.mxu0 0
        %628 = vmatpush1.bf16.msra.mxu0 0
        %629 = vmatprep.subr.bf16.mxu0 0
        %630 = vmatpush1.bf16.msra.mxu0 0
        %631 = vmatprep.subr.bf16.mxu0 0
        %632 = vmatpush1.bf16.msra.mxu0 0
        %633 = vmatprep.mubr.bf16.mxu0 0
        %634 = vmatmul.mubr.bf16.gmra.mrb[0].mxu0 %v590
        %v635 = vpop.f32.mrb[0].mxu0
        %v636 = vadd.f32 %v331, %v635
        %v637 = vpop.f32.mrb[0].mxu0
        %v638 = vadd.f32 %v335, %v637
        %v639 = vpop.f32.mrb[0].mxu0
        %v640 = vadd.f32 %v331, %v639
        %v641 = vpop.f32.mrb[0].mxu0
        %v642 = vadd.f32 %v335, %v641
        %643 = vmatprep.mubr.bf16.mxu0 0
        %644 = vmatmul.mubr.bf16.gmra.mrb[0].mxu0 %v593
        %v645 = vpop.f32.mrb[0].mxu0
        %v646 = vadd.f32 %v331, %v645
        %v647 = vpop.f32.mrb[0].mxu0
        %v648 = vadd.f32 %v335, %v647
        %v649 = vpop.f32.mrb[0].mxu0
        %v650 = vadd.f32 %v331, %v649
        %v651 = vpop.f32.mrb[0].mxu0
        %v652 = vadd.f32 %v335, %v651
        %653 = vmatprep.mubr.bf16.mxu0 0
        %654 = vmatmul.mubr.bf16.gmra.mrb[0].mxu0 %v596
        %v655 = vpop.f32.mrb[0].mxu0
        %v656 = vadd.f32 %v331, %v655
        %v657 = vpop.f32.mrb[0].mxu0
        %v658 = vadd.f32 %v335, %v657
        %v659 = vpop.f32.mrb[0].mxu0
        %v660 = vadd.f32 %v331, %v659
        %v661 = vpop.f32.mrb[0].mxu0
        %v662 = vadd.f32 %v335, %v661
        %663 = vmatprep.mubr.bf16.mxu0 0
        %664 = vmatmul.mubr.bf16.gmra.mrb[0].mxu0 %v599
        %v665 = vpop.f32.mrb[0].mxu0
        %v666 = vadd.f32 %v331, %v665
        %v667 = vpop.f32.mrb[0].mxu0
        %v668 = vadd.f32 %v335, %v667
        %v669 = vpop.f32.mrb[0].mxu0
        %v670 = vadd.f32 %v331, %v669
        %v671 = vpop.f32.mrb[0].mxu0
        %v672 = vadd.f32 %v335, %v671
        %673 = vdwg.mxu0
        %674 = vmatprep.subr.bf16.mxu0 %v527
        %675 = vmatpush1.bf16.msra.mxu0 %v526
        %676 = vmatprep.subr.bf16.mxu0 %v543
        %677 = vmatpush1.bf16.msra.mxu0 %v542
        %678 = vmatprep.subr.bf16.mxu0 0
        %679 = vmatpush1.bf16.msra.mxu0 0
        %680 = vmatprep.subr.bf16.mxu0 0
        %681 = vmatpush1.bf16.msra.mxu0 0
        %682 = vmatprep.subr.bf16.mxu0 0
        %683 = vmatpush1.bf16.msra.mxu0 0
        %684 = vmatprep.subr.bf16.mxu0 0
        %685 = vmatpush1.bf16.msra.mxu0 0
        %686 = vmatprep.subr.bf16.mxu0 0
        %687 = vmatpush1.bf16.msra.mxu0 0
        %688 = vmatprep.subr.bf16.mxu0 0
        %689 = vmatpush1.bf16.msra.mxu0 0
        %690 = vmatprep.subr.bf16.mxu0 0
        %691 = vmatpush1.bf16.msra.mxu0 0
        %692 = vmatprep.subr.bf16.mxu0 0
        %693 = vmatpush1.bf16.msra.mxu0 0
        %694 = vmatprep.subr.bf16.mxu0 0
        %695 = vmatpush1.bf16.msra.mxu0 0
        %696 = vmatprep.subr.bf16.mxu0 0
        %697 = vmatpush1.bf16.msra.mxu0 0
        %698 = vmatprep.subr.bf16.mxu0 0
        %699 = vmatpush1.bf16.msra.mxu0 0
        %700 = vmatprep.subr.bf16.mxu0 0
        %701 = vmatpush1.bf16.msra.mxu0 0
        %702 = vmatprep.subr.bf16.mxu0 0
        %703 = vmatpush1.bf16.msra.mxu0 0
        %704 = vmatprep.subr.bf16.mxu0 0
        %705 = vmatpush1.bf16.msra.mxu0 0
        %706 = vmatprep.mubr.bf16.mxu0 0
        %707 = vmatmul.mubr.bf16.gmra.mrb[0].mxu0 %v590
        %v708 = vpop.f32.mrb[0].mxu0
        %v709 = vadd.f32 %v339, %v708
        %v710 = vpop.f32.mrb[0].mxu0
        %v711 = vadd.f32 %v343, %v710
        %v712 = vpop.f32.mrb[0].mxu0
        %v713 = vadd.f32 %v339, %v712
        %v714 = vpop.f32.mrb[0].mxu0
        %v715 = vadd.f32 %v343, %v714
        %716 = vmatprep.mubr.bf16.mxu0 0
        %717 = vmatmul.mubr.bf16.gmra.mrb[0].mxu0 %v593
        %v718 = vpop.f32.mrb[0].mxu0
        %v719 = vadd.f32 %v339, %v718
        %v720 = vpop.f32.mrb[0].mxu0
        %v721 = vadd.f32 %v343, %v720
        %v722 = vpop.f32.mrb[0].mxu0
        %v723 = vadd.f32 %v339, %v722
        %v724 = vpop.f32.mrb[0].mxu0
        %v725 = vadd.f32 %v343, %v724
        %726 = vmatprep.mubr.bf16.mxu0 0
        %727 = vmatmul.mubr.bf16.gmra.mrb[0].mxu0 %v596
        %v728 = vpop.f32.mrb[0].mxu0
        %v729 = vadd.f32 %v339, %v728
        %v730 = vpop.f32.mrb[0].mxu0
        %v731 = vadd.f32 %v343, %v730
        %v732 = vpop.f32.mrb[0].mxu0
        %v733 = vadd.f32 %v339, %v732
        %v734 = vpop.f32.mrb[0].mxu0
        %v735 = vadd.f32 %v343, %v734
        %736 = vmatprep.mubr.bf16.mxu0 0
        %737 = vmatmul.mubr.bf16.gmra.mrb[0].mxu0 %v599
        %v738 = vpop.f32.mrb[0].mxu0
        %v739 = vadd.f32 %v339, %v738
        %v740 = vpop.f32.mrb[0].mxu0
        %v741 = vadd.f32 %v343, %v740
        %v742 = vpop.f32.mrb[0].mxu0
        %v743 = vadd.f32 %v339, %v742
        %v744 = vpop.f32.mrb[0].mxu0
        %v745 = vadd.f32 %v343, %v744
        %746 = vdwg.mxu0
        %747 = vmatprep.subr.bf16.mxu0 %v529
        %748 = vmatpush1.bf16.msra.mxu0 %v528
        %749 = vmatprep.subr.bf16.mxu0 %v545
        %750 = vmatpush1.bf16.msra.mxu0 %v544
        %751 = vmatprep.subr.bf16.mxu0 0
        %752 = vmatpush1.bf16.msra.mxu0 0
        %753 = vmatprep.subr.bf16.mxu0 0
        %754 = vmatpush1.bf16.msra.mxu0 0
        %755 = vmatprep.subr.bf16.mxu0 0
        %756 = vmatpush1.bf16.msra.mxu0 0
        %757 = vmatprep.subr.bf16.mxu0 0
        %758 = vmatpush1.bf16.msra.mxu0 0
        %759 = vmatprep.subr.bf16.mxu0 0
        %760 = vmatpush1.bf16.msra.mxu0 0
        %761 = vmatprep.subr.bf16.mxu0 0
        %762 = vmatpush1.bf16.msra.mxu0 0
        %763 = vmatprep.subr.bf16.mxu0 0
        %764 = vmatpush1.bf16.msra.mxu0 0
        %765 = vmatprep.subr.bf16.mxu0 0
        %766 = vmatpush1.bf16.msra.mxu0 0
        %767 = vmatprep.subr.bf16.mxu0 0
        %768 = vmatpush1.bf16.msra.mxu0 0
        %769 = vmatprep.subr.bf16.mxu0 0
        %770 = vmatpush1.bf16.msra.mxu0 0
        %771 = vmatprep.subr.bf16.mxu0 0
        %772 = vmatpush1.bf16.msra.mxu0 0
        %773 = vmatprep.subr.bf16.mxu0 0
        %774 = vmatpush1.bf16.msra.mxu0 0
        %775 = vmatprep.subr.bf16.mxu0 0
        %776 = vmatpush1.bf16.msra.mxu0 0
        %777 = vmatprep.subr.bf16.mxu0 0
        %778 = vmatpush1.bf16.msra.mxu0 0
        %779 = vmatprep.mubr.bf16.mxu0 0
        %780 = vmatmul.mubr.bf16.gmra.mrb[0].mxu0 %v590
        %v781 = vpop.f32.mrb[0].mxu0
        %v782 = vadd.f32 %v347, %v781
        %v783 = vpop.f32.mrb[0].mxu0
        %v784 = vadd.f32 %v351, %v783
        %v785 = vpop.f32.mrb[0].mxu0
        %v786 = vadd.f32 %v347, %v785
        %v787 = vpop.f32.mrb[0].mxu0
        %v788 = vadd.f32 %v351, %v787
        %789 = vmatprep.mubr.bf16.mxu0 0
        %790 = vmatmul.mubr.bf16.gmra.mrb[0].mxu0 %v593
        %v791 = vpop.f32.mrb[0].mxu0
        %v792 = vadd.f32 %v347, %v791
        %v793 = vpop.f32.mrb[0].mxu0
        %v794 = vadd.f32 %v351, %v793
        %v795 = vpop.f32.mrb[0].mxu0
        %v796 = vadd.f32 %v347, %v795
        %v797 = vpop.f32.mrb[0].mxu0
        %v798 = vadd.f32 %v351, %v797
        %799 = vmatprep.mubr.bf16.mxu0 0
        %800 = vmatmul.mubr.bf16.gmra.mrb[0].mxu0 %v596
        %v801 = vpop.f32.mrb[0].mxu0
        %v802 = vadd.f32 %v347, %v801
        %v803 = vpop.f32.mrb[0].mxu0
        %v804 = vadd.f32 %v351, %v803
        %v805 = vpop.f32.mrb[0].mxu0
        %v806 = vadd.f32 %v347, %v805
        %v807 = vpop.f32.mrb[0].mxu0
        %v808 = vadd.f32 %v351, %v807
        %809 = vmatprep.mubr.bf16.mxu0 0
        %810 = vmatmul.mubr.bf16.gmra.mrb[0].mxu0 %v599
        %v811 = vpop.f32.mrb[0].mxu0
        %v812 = vadd.f32 %v347, %v811
        %v813 = vpop.f32.mrb[0].mxu0
        %v814 = vadd.f32 %v351, %v813
        %v815 = vpop.f32.mrb[0].mxu0
        %v816 = vadd.f32 %v347, %v815
        %v817 = vpop.f32.mrb[0].mxu0
        %v818 = vadd.f32 %v351, %v817
        %819 = vdwg.mxu0
        %820 = vmatprep.subr.bf16.mxu0 %v531
        %821 = vmatpush1.bf16.msra.mxu0 %v530
        %822 = vmatprep.subr.bf16.mxu0 %v547
        %823 = vmatpush1.bf16.msra.mxu0 %v546
        %824 = vmatprep.subr.bf16.mxu0 0
        %825 = vmatpush1.bf16.msra.mxu0 0
        %826 = vmatprep.subr.bf16.mxu0 0
        %827 = vmatpush1.bf16.msra.mxu0 0
        %828 = vmatprep.subr.bf16.mxu0 0
        %829 = vmatpush1.bf16.msra.mxu0 0
        %830 = vmatprep.subr.bf16.mxu0 0
        %831 = vmatpush1.bf16.msra.mxu0 0
        %832 = vmatprep.subr.bf16.mxu0 0
        %833 = vmatpush1.bf16.msra.mxu0 0
        %834 = vmatprep.subr.bf16.mxu0 0
        %835 = vmatpush1.bf16.msra.mxu0 0
        %836 = vmatprep.subr.bf16.mxu0 0
        %837 = vmatpush1.bf16.msra.mxu0 0
        %838 = vmatprep.subr.bf16.mxu0 0
        %839 = vmatpush1.bf16.msra.mxu0 0
        %840 = vmatprep.subr.bf16.mxu0 0
        %841 = vmatpush1.bf16.msra.mxu0 0
        %842 = vmatprep.subr.bf16.mxu0 0
        %843 = vmatpush1.bf16.msra.mxu0 0
        %844 = vmatprep.subr.bf16.mxu0 0
        %845 = vmatpush1.bf16.msra.mxu0 0
        %846 = vmatprep.subr.bf16.mxu0 0
        %847 = vmatpush1.bf16.msra.mxu0 0
        %848 = vmatprep.subr.bf16.mxu0 0
        %849 = vmatpush1.bf16.msra.mxu0 0
        %850 = vmatprep.subr.bf16.mxu0 0
        %851 = vmatpush1.bf16.msra.mxu0 0
        %852 = vmatprep.mubr.bf16.mxu0 0
        %853 = vmatmul.mubr.bf16.gmra.mrb[0].mxu0 %v590
        %v854 = vpop.f32.mrb[0].mxu0
        %v855 = vadd.f32 %v355, %v854
        %v856 = vpop.f32.mrb[0].mxu0
        %v857 = vadd.f32 %v359, %v856
        %v858 = vpop.f32.mrb[0].mxu0
        %v859 = vadd.f32 %v355, %v858
        %v860 = vpop.f32.mrb[0].mxu0
        %v861 = vadd.f32 %v359, %v860
        %862 = vmatprep.mubr.bf16.mxu0 0
        %863 = vmatmul.mubr.bf16.gmra.mrb[0].mxu0 %v593
        %v864 = vpop.f32.mrb[0].mxu0
        %v865 = vadd.f32 %v355, %v864
        %v866 = vpop.f32.mrb[0].mxu0
        %v867 = vadd.f32 %v359, %v866
        %v868 = vpop.f32.mrb[0].mxu0
        %v869 = vadd.f32 %v355, %v868
        %v870 = vpop.f32.mrb[0].mxu0
        %v871 = vadd.f32 %v359, %v870
        %872 = vmatprep.mubr.bf16.mxu0 0
        %873 = vmatmul.mubr.bf16.gmra.mrb[0].mxu0 %v596
        %v874 = vpop.f32.mrb[0].mxu0
        %v875 = vadd.f32 %v355, %v874
        %v876 = vpop.f32.mrb[0].mxu0
        %v877 = vadd.f32 %v359, %v876
        %v878 = vpop.f32.mrb[0].mxu0
        %v879 = vadd.f32 %v355, %v878
        %v880 = vpop.f32.mrb[0].mxu0
        %v881 = vadd.f32 %v359, %v880
        %882 = vmatprep.mubr.bf16.mxu0 0
        %883 = vmatmul.mubr.bf16.gmra.mrb[0].mxu0 %v599
        %v884 = vpop.f32.mrb[0].mxu0
        %v885 = vadd.f32 %v355, %v884
        %v886 = vpop.f32.mrb[0].mxu0
        %v887 = vadd.f32 %v359, %v886
        %v888 = vpop.f32.mrb[0].mxu0
        %v889 = vadd.f32 %v355, %v888
        %v890 = vpop.f32.mrb[0].mxu0
        %v891 = vadd.f32 %v359, %v890
        %892 = vdwg.mxu0
        %893 = vmatprep.subr.bf16.mxu0 %v533
        %894 = vmatpush1.bf16.msra.mxu0 %v532
        %895 = vmatprep.subr.bf16.mxu0 %v549
        %896 = vmatpush1.bf16.msra.mxu0 %v548
        %897 = vmatprep.subr.bf16.mxu0 0
        %898 = vmatpush1.bf16.msra.mxu0 0
        %899 = vmatprep.subr.bf16.mxu0 0
        %900 = vmatpush1.bf16.msra.mxu0 0
        %901 = vmatprep.subr.bf16.mxu0 0
        %902 = vmatpush1.bf16.msra.mxu0 0
        %903 = vmatprep.subr.bf16.mxu0 0
        %904 = vmatpush1.bf16.msra.mxu0 0
        %905 = vmatprep.subr.bf16.mxu0 0
        %906 = vmatpush1.bf16.msra.mxu0 0
        %907 = vmatprep.subr.bf16.mxu0 0
        %908 = vmatpush1.bf16.msra.mxu0 0
        %909 = vmatprep.subr.bf16.mxu0 0
        %910 = vmatpush1.bf16.msra.mxu0 0
        %911 = vmatprep.subr.bf16.mxu0 0
        %912 = vmatpush1.bf16.msra.mxu0 0
        %913 = vmatprep.subr.bf16.mxu0 0
        %914 = vmatpush1.bf16.msra.mxu0 0
        %915 = vmatprep.subr.bf16.mxu0 0
        %916 = vmatpush1.bf16.msra.mxu0 0
        %917 = vmatprep.subr.bf16.mxu0 0
        %918 = vmatpush1.bf16.msra.mxu0 0
        %919 = vmatprep.subr.bf16.mxu0 0
        %920 = vmatpush1.bf16.msra.mxu0 0
        %921 = vmatprep.subr.bf16.mxu0 0
        %922 = vmatpush1.bf16.msra.mxu0 0
        %923 = vmatprep.subr.bf16.mxu0 0
        %924 = vmatpush1.bf16.msra.mxu0 0
        %925 = vmatprep.mubr.bf16.mxu0 0
        %926 = vmatmul.mubr.bf16.gmra.mrb[0].mxu0 %v590
        %v927 = vpop.f32.mrb[0].mxu0
        %v928 = vadd.f32 %v363, %v927
        %v929 = vpop.f32.mrb[0].mxu0
        %v930 = vadd.f32 %v367, %v929
        %v931 = vpop.f32.mrb[0].mxu0
        %v932 = vadd.f32 %v363, %v931
        %v933 = vpop.f32.mrb[0].mxu0
        %v934 = vadd.f32 %v367, %v933
        %935 = vmatprep.mubr.bf16.mxu0 0
        %936 = vmatmul.mubr.bf16.gmra.mrb[0].mxu0 %v593
        %v937 = vpop.f32.mrb[0].mxu0
        %v938 = vadd.f32 %v363, %v937
        %v939 = vpop.f32.mrb[0].mxu0
        %v940 = vadd.f32 %v367, %v939
        %v941 = vpop.f32.mrb[0].mxu0
        %v942 = vadd.f32 %v363, %v941
        %v943 = vpop.f32.mrb[0].mxu0
        %v944 = vadd.f32 %v367, %v943
        %945 = vmatprep.mubr.bf16.mxu0 0
        %946 = vmatmul.mubr.bf16.gmra.mrb[0].mxu0 %v596
        %v947 = vpop.f32.mrb[0].mxu0
        %v948 = vadd.f32 %v363, %v947
        %v949 = vpop.f32.mrb[0].mxu0
        %v950 = vadd.f32 %v367, %v949
        %v951 = vpop.f32.mrb[0].mxu0
        %v952 = vadd.f32 %v363, %v951
        %v953 = vpop.f32.mrb[0].mxu0
        %v954 = vadd.f32 %v367, %v953
        %955 = vmatprep.mubr.bf16.mxu0 0
        %956 = vmatmul.mubr.bf16.gmra.mrb[0].mxu0 %v599
        %v957 = vpop.f32.mrb[0].mxu0
        %v958 = vadd.f32 %v363, %v957
        %v959 = vpop.f32.mrb[0].mxu0
        %v960 = vadd.f32 %v367, %v959
        %v961 = vpop.f32.mrb[0].mxu0
        %v962 = vadd.f32 %v363, %v961
        %v963 = vpop.f32.mrb[0].mxu0
        %v964 = vadd.f32 %v367, %v963
        %965 = vdwg.mxu0
        %966 = vmatprep.subr.bf16.mxu0 %v535
        %967 = vmatpush1.bf16.msra.mxu0 %v534
        %968 = vmatprep.subr.bf16.mxu0 %v551
        %969 = vmatpush1.bf16.msra.mxu0 %v550
        %970 = vmatprep.subr.bf16.mxu0 0
        %971 = vmatpush1.bf16.msra.mxu0 0
        %972 = vmatprep.subr.bf16.mxu0 0
        %973 = vmatpush1.bf16.msra.mxu0 0
        %974 = vmatprep.subr.bf16.mxu0 0
        %975 = vmatpush1.bf16.msra.mxu0 0
        %976 = vmatprep.subr.bf16.mxu0 0
        %977 = vmatpush1.bf16.msra.mxu0 0
        %978 = vmatprep.subr.bf16.mxu0 0
        %979 = vmatpush1.bf16.msra.mxu0 0
        %980 = vmatprep.subr.bf16.mxu0 0
        %981 = vmatpush1.bf16.msra.mxu0 0
        %982 = vmatprep.subr.bf16.mxu0 0
        %983 = vmatpush1.bf16.msra.mxu0 0
        %984 = vmatprep.subr.bf16.mxu0 0
        %985 = vmatpush1.bf16.msra.mxu0 0
        %986 = vmatprep.subr.bf16.mxu0 0
        %987 = vmatpush1.bf16.msra.mxu0 0
        %988 = vmatprep.subr.bf16.mxu0 0
        %989 = vmatpush1.bf16.msra.mxu0 0
        %990 = vmatprep.subr.bf16.mxu0 0
        %991 = vmatpush1.bf16.msra.mxu0 0
        %992 = vmatprep.subr.bf16.mxu0 0
        %993 = vmatpush1.bf16.msra.mxu0 0
        %994 = vmatprep.subr.bf16.mxu0 0
        %995 = vmatpush1.bf16.msra.mxu0 0
        %996 = vmatprep.subr.bf16.mxu0 0
        %997 = vmatpush1.bf16.msra.mxu0 0
        %998 = vmatprep.mubr.bf16.mxu0 0
        %999 = vmatmul.mubr.bf16.gmra.mrb[0].mxu0 %v590
        %v1000 = vpop.f32.mrb[0].mxu0
        %v1001 = vadd.f32 %v371, %v1000
        %v1002 = vpop.f32.mrb[0].mxu0
        %v1003 = vadd.f32 %v375, %v1002
        %v1004 = vpop.f32.mrb[0].mxu0
        %v1005 = vadd.f32 %v371, %v1004
        %v1006 = vpop.f32.mrb[0].mxu0
        %v1007 = vadd.f32 %v375, %v1006
        %1008 = vmatprep.mubr.bf16.mxu0 0
        %1009 = vmatmul.mubr.bf16.gmra.mrb[0].mxu0 %v593
        %v1010 = vpop.f32.mrb[0].mxu0
        %v1011 = vadd.f32 %v371, %v1010
        %v1012 = vpop.f32.mrb[0].mxu0
        %v1013 = vadd.f32 %v375, %v1012
        %v1014 = vpop.f32.mrb[0].mxu0
        %v1015 = vadd.f32 %v371, %v1014
        %v1016 = vpop.f32.mrb[0].mxu0
        %v1017 = vadd.f32 %v375, %v1016
        %1018 = vmatprep.mubr.bf16.mxu0 0
        %1019 = vmatmul.mubr.bf16.gmra.mrb[0].mxu0 %v596
        %v1020 = vpop.f32.mrb[0].mxu0
        %v1021 = vadd.f32 %v371, %v1020
        %v1022 = vpop.f32.mrb[0].mxu0
        %v1023 = vadd.f32 %v375, %v1022
        %v1024 = vpop.f32.mrb[0].mxu0
        %v1025 = vadd.f32 %v371, %v1024
        %v1026 = vpop.f32.mrb[0].mxu0
        %v1027 = vadd.f32 %v375, %v1026
        %1028 = vmatprep.mubr.bf16.mxu0 0
        %1029 = vmatmul.mubr.bf16.gmra.mrb[0].mxu0 %v599
        %v1030 = vpop.f32.mrb[0].mxu0
        %v1031 = vadd.f32 %v371, %v1030
        %v1032 = vpop.f32.mrb[0].mxu0
        %v1033 = vadd.f32 %v375, %v1032
        %v1034 = vpop.f32.mrb[0].mxu0
        %v1035 = vadd.f32 %v371, %v1034
        %v1036 = vpop.f32.mrb[0].mxu0
        %v1037 = vadd.f32 %v375, %v1036
        %1038 = vdwg.mxu0
        %1039 = vmatprep.subr.bf16.mxu0 %v537
        %1040 = vmatpush1.bf16.msra.mxu0 %v536
        %1041 = vmatprep.subr.bf16.mxu0 %v553
        %1042 = vmatpush1.bf16.msra.mxu0 %v552
        %1043 = vmatprep.subr.bf16.mxu0 0
        %1044 = vmatpush1.bf16.msra.mxu0 0
        %1045 = vmatprep.subr.bf16.mxu0 0
        %1046 = vmatpush1.bf16.msra.mxu0 0
        %1047 = vmatprep.subr.bf16.mxu0 0
        %1048 = vmatpush1.bf16.msra.mxu0 0
        %1049 = vmatprep.subr.bf16.mxu0 0
        %1050 = vmatpush1.bf16.msra.mxu0 0
        %1051 = vmatprep.subr.bf16.mxu0 0
        %1052 = vmatpush1.bf16.msra.mxu0 0
        %1053 = vmatprep.subr.bf16.mxu0 0
        %1054 = vmatpush1.bf16.msra.mxu0 0
        %1055 = vmatprep.subr.bf16.mxu0 0
        %1056 = vmatpush1.bf16.msra.mxu0 0
        %1057 = vmatprep.subr.bf16.mxu0 0
        %1058 = vmatpush1.bf16.msra.mxu0 0
        %1059 = vmatprep.subr.bf16.mxu0 0
        %1060 = vmatpush1.bf16.msra.mxu0 0
        %1061 = vmatprep.subr.bf16.mxu0 0
        %1062 = vmatpush1.bf16.msra.mxu0 0
        %1063 = vmatprep.subr.bf16.mxu0 0
        %1064 = vmatpush1.bf16.msra.mxu0 0
        %1065 = vmatprep.subr.bf16.mxu0 0
        %1066 = vmatpush1.bf16.msra.mxu0 0
        %1067 = vmatprep.subr.bf16.mxu0 0
        %1068 = vmatpush1.bf16.msra.mxu0 0
        %1069 = vmatprep.subr.bf16.mxu0 0
        %1070 = vmatpush1.bf16.msra.mxu0 0
        %1071 = vmatprep.mubr.bf16.mxu0 0
        %1072 = vmatmul.mubr.bf16.gmra.mrb[0].mxu0 %v590
        %v1073 = vpop.f32.mrb[0].mxu0
        %v1074 = vadd.f32 %v379, %v1073
        %v1075 = vpop.f32.mrb[0].mxu0
        %v1076 = vadd.f32 %v383, %v1075
        %v1077 = vpop.f32.mrb[0].mxu0
        %v1078 = vadd.f32 %v379, %v1077
        %v1079 = vpop.f32.mrb[0].mxu0
        %v1080 = vadd.f32 %v383, %v1079
        %1081 = vmatprep.mubr.bf16.mxu0 0
        %1082 = vmatmul.mubr.bf16.gmra.mrb[0].mxu0 %v593
        %v1083 = vpop.f32.mrb[0].mxu0
        %v1084 = vadd.f32 %v379, %v1083
        %v1085 = vpop.f32.mrb[0].mxu0
        %v1086 = vadd.f32 %v383, %v1085
        %v1087 = vpop.f32.mrb[0].mxu0
        %v1088 = vadd.f32 %v379, %v1087
        %v1089 = vpop.f32.mrb[0].mxu0
        %v1090 = vadd.f32 %v383, %v1089
        %1091 = vmatprep.mubr.bf16.mxu0 0
        %1092 = vmatmul.mubr.bf16.gmra.mrb[0].mxu0 %v596
        %v1093 = vpop.f32.mrb[0].mxu0
        %v1094 = vadd.f32 %v379, %v1093
        %v1095 = vpop.f32.mrb[0].mxu0
        %v1096 = vadd.f32 %v383, %v1095
        %v1097 = vpop.f32.mrb[0].mxu0
        %v1098 = vadd.f32 %v379, %v1097
        %v1099 = vpop.f32.mrb[0].mxu0
        %v1100 = vadd.f32 %v383, %v1099
        %1101 = vmatprep.mubr.bf16.mxu0 0
        %1102 = vmatmul.mubr.bf16.gmra.mrb[0].mxu0 %v599
        %v1103 = vpop.f32.mrb[0].mxu0
        %v1104 = vadd.f32 %v379, %v1103
        %v1105 = vpop.f32.mrb[0].mxu0
        %v1106 = vadd.f32 %v383, %v1105
        %v1107 = vpop.f32.mrb[0].mxu0
        %v1108 = vadd.f32 %v379, %v1107
        %v1109 = vpop.f32.mrb[0].mxu0
        %v1110 = vadd.f32 %v383, %v1109
        %1111 = vdwg.mxu0
        %1112 = vmatprep.subr.bf16.mxu0 %v539
        %1113 = vmatpush1.bf16.msra.mxu0 %v538
        %1114 = vmatprep.subr.bf16.mxu0 %v555
        %1115 = vmatpush1.bf16.msra.mxu0 %v554
        %1116 = vmatprep.subr.bf16.mxu0 0
        %1117 = vmatpush1.bf16.msra.mxu0 0
        %1118 = vmatprep.subr.bf16.mxu0 0
        %1119 = vmatpush1.bf16.msra.mxu0 0
        %1120 = vmatprep.subr.bf16.mxu0 0
        %1121 = vmatpush1.bf16.msra.mxu0 0
        %1122 = vmatprep.subr.bf16.mxu0 0
        %1123 = vmatpush1.bf16.msra.mxu0 0
        %1124 = vmatprep.subr.bf16.mxu0 0
        %1125 = vmatpush1.bf16.msra.mxu0 0
        %1126 = vmatprep.subr.bf16.mxu0 0
        %1127 = vmatpush1.bf16.msra.mxu0 0
        %1128 = vmatprep.subr.bf16.mxu0 0
        %1129 = vmatpush1.bf16.msra.mxu0 0
        %1130 = vmatprep.subr.bf16.mxu0 0
        %1131 = vmatpush1.bf16.msra.mxu0 0
        %1132 = vmatprep.subr.bf16.mxu0 0
        %1133 = vmatpush1.bf16.msra.mxu0 0
        %1134 = vmatprep.subr.bf16.mxu0 0
        %1135 = vmatpush1.bf16.msra.mxu0 0
        %1136 = vmatprep.subr.bf16.mxu0 0
        %1137 = vmatpush1.bf16.msra.mxu0 0
        %1138 = vmatprep.subr.bf16.mxu0 0
        %1139 = vmatpush1.bf16.msra.mxu0 0
        %1140 = vmatprep.subr.bf16.mxu0 0
        %1141 = vmatpush1.bf16.msra.mxu0 0
        %1142 = vmatprep.subr.bf16.mxu0 0
        %1143 = vmatpush1.bf16.msra.mxu0 0
        %1144 = vmatprep.mubr.bf16.mxu0 0
        %1145 = vmatmul.mubr.bf16.gmra.mrb[0].mxu0 %v590
        %v1146 = vpop.f32.mrb[0].mxu0
        %v1147 = vadd.f32 %v387, %v1146
        %v1148 = vpop.f32.mrb[0].mxu0
        %v1149 = vadd.f32 %v391, %v1148
        %v1150 = vpop.f32.mrb[0].mxu0
        %v1151 = vadd.f32 %v387, %v1150
        %v1152 = vpop.f32.mrb[0].mxu0
        %v1153 = vadd.f32 %v391, %v1152
        %1154 = vmatprep.mubr.bf16.mxu0 0
        %1155 = vmatmul.mubr.bf16.gmra.mrb[0].mxu0 %v593
        %v1156 = vpop.f32.mrb[0].mxu0
        %v1157 = vadd.f32 %v387, %v1156
        %v1158 = vpop.f32.mrb[0].mxu0
        %v1159 = vadd.f32 %v391, %v1158
        %v1160 = vpop.f32.mrb[0].mxu0
        %v1161 = vadd.f32 %v387, %v1160
        %v1162 = vpop.f32.mrb[0].mxu0
        %v1163 = vadd.f32 %v391, %v1162
        %1164 = vmatprep.mubr.bf16.mxu0 0
        %1165 = vmatmul.mubr.bf16.gmra.mrb[0].mxu0 %v596
        %v1166 = vpop.f32.mrb[0].mxu0
        %v1167 = vadd.f32 %v387, %v1166
        %v1168 = vpop.f32.mrb[0].mxu0
        %v1169 = vadd.f32 %v391, %v1168
        %v1170 = vpop.f32.mrb[0].mxu0
        %v1171 = vadd.f32 %v387, %v1170
        %v1172 = vpop.f32.mrb[0].mxu0
        %v1173 = vadd.f32 %v391, %v1172
        %1174 = vmatprep.mubr.bf16.mxu0 0
        %1175 = vmatmul.mubr.bf16.gmra.mrb[0].mxu0 %v599
        %v1176 = vpop.f32.mrb[0].mxu0
        %v1177 = vadd.f32 %v387, %v1176
        %v1178 = vpop.f32.mrb[0].mxu0
        %v1179 = vadd.f32 %v391, %v1178
        %v1180 = vpop.f32.mrb[0].mxu0
        %v1181 = vadd.f32 %v387, %v1180
        %v1182 = vpop.f32.mrb[0].mxu0
        %v1183 = vadd.f32 %v391, %v1182
        %1184 = vdwg.mxu0
        %1185 = vst [vmem:[#allocation2] sm:$0xff] %v636
        %1186 = vst [vmem:[#allocation2 + $0x8] sm:$0xff] %v638
        %1187 = vst [vmem:[#allocation2 + $0x10] sm:$0xff] %v709
        %1188 = vst [vmem:[#allocation2 + $0x18] sm:$0xff] %v711
        %1189 = vst [vmem:[#allocation2 + $0x20] sm:$0xff] %v782
        %1190 = vst [vmem:[#allocation2 + $0x28] sm:$0xff] %v784
        %1191 = vst [vmem:[#allocation2 + $0x30] sm:$0xff] %v855
        %1192 = vst [vmem:[#allocation2 + $0x38] sm:$0xff] %v857
        %1193 = vst [vmem:[#allocation2 + $0x40] sm:$0xff] %v928
        %1194 = vst [vmem:[#allocation2 + $0x48] sm:$0xff] %v930
        %1195 = vst [vmem:[#allocation2 + $0x50] sm:$0xff] %v1001
        %1196 = vst [vmem:[#allocation2 + $0x58] sm:$0xff] %v1003
        %1197 = vst [vmem:[#allocation2 + $0x60] sm:$0xff] %v1074
        %1198 = vst [vmem:[#allocation2 + $0x68] sm:$0xff] %v1076
        %1199 = vst [vmem:[#allocation2 + $0x70] sm:$0xff] %v1147
        %1200 = vst [vmem:[#allocation2 + $0x78] sm:$0xff] %v1149
        %1201 = vst [vmem:[#allocation2 + $0x80] sm:$0xff] %v640
        %1202 = vst [vmem:[#allocation2 + $0x88] sm:$0xff] %v642
        %1203 = vst [vmem:[#allocation2 + $0x90] sm:$0xff] %v713
        %1204 = vst [vmem:[#allocation2 + $0x98] sm:$0xff] %v715
        %1205 = vst [vmem:[#allocation2 + $0xa0] sm:$0xff] %v786
        %1206 = vst [vmem:[#allocation2 + $0xa8] sm:$0xff] %v788
        %1207 = vst [vmem:[#allocation2 + $0xb0] sm:$0xff] %v859
        %1208 = vst [vmem:[#allocation2 + $0xb8] sm:$0xff] %v861
        %1209 = vst [vmem:[#allocation2 + $0xc0] sm:$0xff] %v932
        %1210 = vst [vmem:[#allocation2 + $0xc8] sm:$0xff] %v934
        %1211 = vst [vmem:[#allocation2 + $0xd0] sm:$0xff] %v1005
        %1212 = vst [vmem:[#allocation2 + $0xd8] sm:$0xff] %v1007
        %1213 = vst [vmem:[#allocation2 + $0xe0] sm:$0xff] %v1078
        %1214 = vst [vmem:[#allocation2 + $0xe8] sm:$0xff] %v1080
        %1215 = vst [vmem:[#allocation2 + $0xf0] sm:$0xff] %v1151
        %1216 = vst [vmem:[#allocation2 + $0xf8] sm:$0xff] %v1153
        %1217 = vst [vmem:[#allocation2 + $0x100] sm:$0xff] %v646
        %1218 = vst [vmem:[#allocation2 + $0x108] sm:$0xff] %v648
        %1219 = vst [vmem:[#allocation2 + $0x110] sm:$0xff] %v719
        %1220 = vst [vmem:[#allocation2 + $0x118] sm:$0xff] %v721
        %1221 = vst [vmem:[#allocation2 + $0x120] sm:$0xff] %v792
        %1222 = vst [vmem:[#allocation2 + $0x128] sm:$0xff] %v794
        %1223 = vst [vmem:[#allocation2 + $0x130] sm:$0xff] %v865
        %1224 = vst [vmem:[#allocation2 + $0x138] sm:$0xff] %v867
        %1225 = vst [vmem:[#allocation2 + $0x140] sm:$0xff] %v938
        %1226 = vst [vmem:[#allocation2 + $0x148] sm:$0xff] %v940
        %1227 = vst [vmem:[#allocation2 + $0x150] sm:$0xff] %v1011
        %1228 = vst [vmem:[#allocation2 + $0x158] sm:$0xff] %v1013
        %1229 = vst [vmem:[#allocation2 + $0x160] sm:$0xff] %v1084
        %1230 = vst [vmem:[#allocation2 + $0x168] sm:$0xff] %v1086
        %1231 = vst [vmem:[#allocation2 + $0x170] sm:$0xff] %v1157
        %1232 = vst [vmem:[#allocation2 + $0x178] sm:$0xff] %v1159
        %1233 = vst [vmem:[#allocation2 + $0x180] sm:$0xff] %v650
        %1234 = vst [vmem:[#allocation2 + $0x188] sm:$0xff] %v652
        %1235 = vst [vmem:[#allocation2 + $0x190] sm:$0xff] %v723
        %1236 = vst [vmem:[#allocation2 + $0x198] sm:$0xff] %v725
        %1237 = vst [vmem:[#allocation2 + $0x1a0] sm:$0xff] %v796
        %1238 = vst [vmem:[#allocation2 + $0x1a8] sm:$0xff] %v798
        %1239 = vst [vmem:[#allocation2 + $0x1b0] sm:$0xff] %v869
        %1240 = vst [vmem:[#allocation2 + $0x1b8] sm:$0xff] %v871
        %1241 = vst [vmem:[#allocation2 + $0x1c0] sm:$0xff] %v942
        %1242 = vst [vmem:[#allocation2 + $0x1c8] sm:$0xff] %v944
        %1243 = vst [vmem:[#allocation2 + $0x1d0] sm:$0xff] %v1015
        %1244 = vst [vmem:[#allocation2 + $0x1d8] sm:$0xff] %v1017
        %1245 = vst [vmem:[#allocation2 + $0x1e0] sm:$0xff] %v1088
        %1246 = vst [vmem:[#allocation2 + $0x1e8] sm:$0xff] %v1090
        %1247 = vst [vmem:[#allocation2 + $0x1f0] sm:$0xff] %v1161
        %1248 = vst [vmem:[#allocation2 + $0x1f8] sm:$0xff] %v1163
        %1249 = vst [vmem:[#allocation2 + $0x200] sm:$0xff] %v656
        %1250 = vst [vmem:[#allocation2 + $0x208] sm:$0xff] %v658
        %1251 = vst [vmem:[#allocation2 + $0x210] sm:$0xff] %v729
        %1252 = vst [vmem:[#allocation2 + $0x218] sm:$0xff] %v731
        %1253 = vst [vmem:[#allocation2 + $0x220] sm:$0xff] %v802
        %1254 = vst [vmem:[#allocation2 + $0x228] sm:$0xff] %v804
        %1255 = vst [vmem:[#allocation2 + $0x230] sm:$0xff] %v875
        %1256 = vst [vmem:[#allocation2 + $0x238] sm:$0xff] %v877
        %1257 = vst [vmem:[#allocation2 + $0x240] sm:$0xff] %v948
        %1258 = vst [vmem:[#allocation2 + $0x248] sm:$0xff] %v950
        %1259 = vst [vmem:[#allocation2 + $0x250] sm:$0xff] %v1021
        %1260 = vst [vmem:[#allocation2 + $0x258] sm:$0xff] %v1023
        %1261 = vst [vmem:[#allocation2 + $0x260] sm:$0xff] %v1094
        %1262 = vst [vmem:[#allocation2 + $0x268] sm:$0xff] %v1096
        %1263 = vst [vmem:[#allocation2 + $0x270] sm:$0xff] %v1167
        %1264 = vst [vmem:[#allocation2 + $0x278] sm:$0xff] %v1169
        %1265 = vst [vmem:[#allocation2 + $0x280] sm:$0xff] %v660
        %1266 = vst [vmem:[#allocation2 + $0x288] sm:$0xff] %v662
        %1267 = vst [vmem:[#allocation2 + $0x290] sm:$0xff] %v733
        %1268 = vst [vmem:[#allocation2 + $0x298] sm:$0xff] %v735
        %1269 = vst [vmem:[#allocation2 + $0x2a0] sm:$0xff] %v806
        %1270 = vst [vmem:[#allocation2 + $0x2a8] sm:$0xff] %v808
        %1271 = vst [vmem:[#allocation2 + $0x2b0] sm:$0xff] %v879
        %1272 = vst [vmem:[#allocation2 + $0x2b8] sm:$0xff] %v881
        %1273 = vst [vmem:[#allocation2 + $0x2c0] sm:$0xff] %v952
        %1274 = vst [vmem:[#allocation2 + $0x2c8] sm:$0xff] %v954
        %1275 = vst [vmem:[#allocation2 + $0x2d0] sm:$0xff] %v1025
        %1276 = vst [vmem:[#allocation2 + $0x2d8] sm:$0xff] %v1027
        %1277 = vst [vmem:[#allocation2 + $0x2e0] sm:$0xff] %v1098
        %1278 = vst [vmem:[#allocation2 + $0x2e8] sm:$0xff] %v1100
        %1279 = vst [vmem:[#allocation2 + $0x2f0] sm:$0xff] %v1171
        %1280 = vst [vmem:[#allocation2 + $0x2f8] sm:$0xff] %v1173
        %1281 = vst [vmem:[#allocation2 + $0x300] sm:$0xff] %v666
        %1282 = vst [vmem:[#allocation2 + $0x308] sm:$0xff] %v668
        %1283 = vst [vmem:[#allocation2 + $0x310] sm:$0xff] %v739
        %1284 = vst [vmem:[#allocation2 + $0x318] sm:$0xff] %v741
        %1285 = vst [vmem:[#allocation2 + $0x320] sm:$0xff] %v812
        %1286 = vst [vmem:[#allocation2 + $0x328] sm:$0xff] %v814
        %1287 = vst [vmem:[#allocation2 + $0x330] sm:$0xff] %v885
        %1288 = vst [vmem:[#allocation2 + $0x338] sm:$0xff] %v887
        %1289 = vst [vmem:[#allocation2 + $0x340] sm:$0xff] %v958
        %1290 = vst [vmem:[#allocation2 + $0x348] sm:$0xff] %v960
        %1291 = vst [vmem:[#allocation2 + $0x350] sm:$0xff] %v1031
        %1292 = vst [vmem:[#allocation2 + $0x358] sm:$0xff] %v1033
        %1293 = vst [vmem:[#allocation2 + $0x360] sm:$0xff] %v1104
        %1294 = vst [vmem:[#allocation2 + $0x368] sm:$0xff] %v1106
        %1295 = vst [vmem:[#allocation2 + $0x370] sm:$0xff] %v1177
        %1296 = vst [vmem:[#allocation2 + $0x378] sm:$0xff] %v1179
        %1297 = vst [vmem:[#allocation2 + $0x380] sm:$0xff] %v670
        %1298 = vst [vmem:[#allocation2 + $0x388] sm:$0xff] %v672
        %1299 = vst [vmem:[#allocation2 + $0x390] sm:$0xff] %v743
        %1300 = vst [vmem:[#allocation2 + $0x398] sm:$0xff] %v745
        %1301 = vst [vmem:[#allocation2 + $0x3a0] sm:$0xff] %v816
        %1302 = vst [vmem:[#allocation2 + $0x3a8] sm:$0xff] %v818
        %1303 = vst [vmem:[#allocation2 + $0x3b0] sm:$0xff] %v889
        %1304 = vst [vmem:[#allocation2 + $0x3b8] sm:$0xff] %v891
        %1305 = vst [vmem:[#allocation2 + $0x3c0] sm:$0xff] %v962
        %1306 = vst [vmem:[#allocation2 + $0x3c8] sm:$0xff] %v964
        %1307 = vst [vmem:[#allocation2 + $0x3d0] sm:$0xff] %v1035
        %1308 = vst [vmem:[#allocation2 + $0x3d8] sm:$0xff] %v1037
        %1309 = vst [vmem:[#allocation2 + $0x3e0] sm:$0xff] %v1108
        %1310 = vst [vmem:[#allocation2 + $0x3e8] sm:$0xff] %v1110
        %1311 = vst [vmem:[#allocation2 + $0x3f0] sm:$0xff] %v1181
        %1312 = vst [vmem:[#allocation2 + $0x3f8] sm:$0xff] %v1183
        %vm1313 = vcmask 523264
        %1314 = vst.msk [vmem:[#allocation3] sm:$0xff] %vm1313, 0.0
        %1315 = vst.msk [vmem:[#allocation3 + $0x8] sm:$0xff] %vm1313, 0.0
        %1316 = vst.msk [vmem:[#allocation3 + $0x10] sm:$0xff] %vm1313, 0.0
        %1317 = vst.msk [vmem:[#allocation3 + $0x18] sm:$0xff] %vm1313, 0.0
        %1318 = vst.msk [vmem:[#allocation3 + $0x20] sm:$0xff] %vm1313, 0.0
        %1319 = vst.msk [vmem:[#allocation3 + $0x28] sm:$0xff] %vm1313, 0.0
        %1320 = vst.msk [vmem:[#allocation3 + $0x30] sm:$0xff] %vm1313, 0.0
        %1321 = vst.msk [vmem:[#allocation3 + $0x38] sm:$0xff] %vm1313, 0.0
        %1322 = vst.msk [vmem:[#allocation4] sm:$0xff] %vm1313, 0.0
        %1323 = vst.msk [vmem:[#allocation4 + $0x8] sm:$0xff] %vm1313, 0.0
        %1324 = vst.msk [vmem:[#allocation4 + $0x10] sm:$0xff] %vm1313, 0.0
        %1325 = vst.msk [vmem:[#allocation4 + $0x18] sm:$0xff] %vm1313, 0.0
        %1326 = vst.msk [vmem:[#allocation4 + $0x20] sm:$0xff] %vm1313, 0.0
        %1327 = vst.msk [vmem:[#allocation4 + $0x28] sm:$0xff] %vm1313, 0.0
        %1328 = vst.msk [vmem:[#allocation4 + $0x30] sm:$0xff] %vm1313, 0.0
        %1329 = vst.msk [vmem:[#allocation4 + $0x38] sm:$0xff] %vm1313, 0.0
        %1330 = vst.msk [vmem:[#allocation5] sm:$0xff] %vm1313, 0.0
        %1331 = vst.msk [vmem:[#allocation5 + $0x8] sm:$0xff] %vm1313, 0.0
        %1332 = vst.msk [vmem:[#allocation5 + $0x10] sm:$0xff] %vm1313, 0.0
        %1333 = vst.msk [vmem:[#allocation5 + $0x18] sm:$0xff] %vm1313, 0.0
        %1334 = vst.msk [vmem:[#allocation5 + $0x20] sm:$0xff] %vm1313, 0.0
        %1335 = vst.msk [vmem:[#allocation5 + $0x28] sm:$0xff] %vm1313, 0.0
        %1336 = vst.msk [vmem:[#allocation5 + $0x30] sm:$0xff] %vm1313, 0.0
        %1337 = vst.msk [vmem:[#allocation5 + $0x38] sm:$0xff] %vm1313, 0.0
        %v1338 = vld [vmem:[#allocation2] sm:$0xff]
        %v1339 = vld [vmem:[#allocation2 + $0x8] sm:$0xff]
        %v1340 = vld [vmem:[#allocation2 + $0x80] sm:$0xff]
        %v1341 = vld [vmem:[#allocation2 + $0x88] sm:$0xff]
        %v1342 = vld [vmem:[#allocation2 + $0x100] sm:$0xff]
        %v1343 = vld [vmem:[#allocation2 + $0x108] sm:$0xff]
        %v1344 = vld [vmem:[#allocation2 + $0x180] sm:$0xff]
        %v1345 = vld [vmem:[#allocation2 + $0x188] sm:$0xff]
        %v1346 = vld [vmem:[#allocation2 + $0x200] sm:$0xff]
        %v1347 = vld [vmem:[#allocation2 + $0x208] sm:$0xff]
        %v1348 = vld [vmem:[#allocation2 + $0x280] sm:$0xff]
        %v1349 = vld [vmem:[#allocation2 + $0x288] sm:$0xff]
        %v1350 = vld [vmem:[#allocation2 + $0x300] sm:$0xff]
        %v1351 = vld [vmem:[#allocation2 + $0x308] sm:$0xff]
        %v1352 = vld [vmem:[#allocation2 + $0x380] sm:$0xff]
        %v1353 = vld [vmem:[#allocation2 + $0x388] sm:$0xff]
        %v1354 = vld [vmem:[#allocation3] sm:$0xff]
        %v1355 = vld [vmem:[#allocation3 + $0x8] sm:$0xff]
        %v1356 = vld [vmem:[#allocation3 + $0x10] sm:$0xff]
        %v1357 = vld [vmem:[#allocation3 + $0x18] sm:$0xff]
        %v1358 = vld [vmem:[#allocation3 + $0x20] sm:$0xff]
        %v1359 = vld [vmem:[#allocation3 + $0x28] sm:$0xff]
        %v1360 = vld [vmem:[#allocation3 + $0x30] sm:$0xff]
        %v1361 = vld [vmem:[#allocation3 + $0x38] sm:$0xff]
        %v1362 = vld [vmem:[#allocation9] sm:$0xff]
        %v1363 = vld [vmem:[#allocation9 + $0x8] sm:$0xff]
        %v1364 = vld [vmem:[#allocation9 + $0x10] sm:$0xff]
        %v1365 = vld [vmem:[#allocation9 + $0x18] sm:$0xff]
        %v1366 = vld [vmem:[#allocation9 + $0x20] sm:$0xff]
        %v1367 = vld [vmem:[#allocation9 + $0x28] sm:$0xff]
        %v1368 = vld [vmem:[#allocation9 + $0x30] sm:$0xff]
        %v1369 = vld [vmem:[#allocation9 + $0x38] sm:$0xff]
        %v1370 = vld [vmem:[#allocation9 + $0x40] sm:$0xff]
        %v1371 = vld [vmem:[#allocation9 + $0x48] sm:$0xff]
        %v1372 = vld [vmem:[#allocation9 + $0x50] sm:$0xff]
        %v1373 = vld [vmem:[#allocation9 + $0x58] sm:$0xff]
        %v1374 = vld [vmem:[#allocation9 + $0x60] sm:$0xff]
        %v1375 = vld [vmem:[#allocation9 + $0x68] sm:$0xff]
        %v1376 = vld [vmem:[#allocation9 + $0x70] sm:$0xff]
        %v1377 = vld [vmem:[#allocation9 + $0x78] sm:$0xff]
        %v1379 = vsel %vm1313, %v1354, 0
        %v1382 = vsel %vm1313, %v1355, 0
        %v1385 = vsel %vm1313, %v1356, 0
        %v1388 = vsel %vm1313, %v1357, 0
        %v1391 = vsel %vm1313, %v1358, 0
        %v1394 = vsel %vm1313, %v1359, 0
        %v1397 = vsel %vm1313, %v1360, 0
        %v1400 = vsel %vm1313, %v1361, 0
        %1402 = vmatprep.subr.mxu0 %v1363
        %1403 = vmatpush1.msra.mxu0 %v1362
        %1404 = vmatprep.subr.mxu0 %v1365
        %1405 = vmatpush1.msra.mxu0 %v1364
        %1406 = vmatprep.subr.mxu0 %v1367
        %1407 = vmatpush1.msra.mxu0 %v1366
        %1408 = vmatprep.subr.mxu0 %v1369
        %1409 = vmatpush1.msra.mxu0 %v1368
        %1410 = vmatprep.subr.mxu0 %v1371
        %1411 = vmatpush1.msra.mxu0 %v1370
        %1412 = vmatprep.subr.mxu0 %v1373
        %1413 = vmatpush1.msra.mxu0 %v1372
        %1414 = vmatprep.subr.mxu0 %v1375
        %1415 = vmatpush1.msra.mxu0 %v1374
        %1416 = vmatprep.subr.mxu0 %v1377
        %1417 = vmatpush1.msra.mxu0 %v1376
        %1418 = vmatprep.subr.mxu0 0.0
        %1419 = vmatpush1.msra.mxu0 0.0
        %1420 = vmatprep.subr.mxu0 0.0
        %1421 = vmatpush1.msra.mxu0 0.0
        %1422 = vmatprep.subr.mxu0 0.0
        %1423 = vmatpush1.msra.mxu0 0.0
        %1424 = vmatprep.subr.mxu0 0.0
        %1425 = vmatpush1.msra.mxu0 0.0
        %1426 = vmatprep.subr.mxu0 0.0
        %1427 = vmatpush1.msra.mxu0 0.0
        %1428 = vmatprep.subr.mxu0 0.0
        %1429 = vmatpush1.msra.mxu0 0.0
        %1430 = vmatprep.subr.mxu0 0.0
        %1431 = vmatpush1.msra.mxu0 0.0
        %1432 = vmatprep.subr.mxu0 0.0
        %1433 = vmatpush1.msra.mxu0 0.0
        %1434 = vmatprep.subr.mxu0 0.0
        %1435 = vmatpush1.msra.mxu0 0.0
        %1436 = vmatprep.subr.mxu0 0.0
        %1437 = vmatpush1.msra.mxu0 0.0
        %1438 = vmatprep.subr.mxu0 0.0
        %1439 = vmatpush1.msra.mxu0 0.0
        %1440 = vmatprep.subr.mxu0 0.0
        %1441 = vmatpush1.msra.mxu0 0.0
        %1442 = vmatprep.subr.mxu0 0.0
        %1443 = vmatpush1.msra.mxu0 0.0
        %1444 = vmatprep.subr.mxu0 0.0
        %1445 = vmatpush1.msra.mxu0 0.0
        %1446 = vmatprep.subr.mxu0 0.0
        %1447 = vmatpush1.msra.mxu0 0.0
        %1448 = vmatprep.subr.mxu0 0.0
        %1449 = vmatpush1.msra.mxu0 0.0
        %1450 = vmatprep.subr.mxu0 0.0
        %1451 = vmatpush1.msra.mxu0 0.0
        %1452 = vmatprep.subr.mxu0 0.0
        %1453 = vmatpush1.msra.mxu0 0.0
        %1454 = vmatprep.subr.mxu0 0.0
        %1455 = vmatpush1.msra.mxu0 0.0
        %1456 = vmatprep.subr.mxu0 0.0
        %1457 = vmatpush1.msra.mxu0 0.0
        %1458 = vmatprep.subr.mxu0 0.0
        %1459 = vmatpush1.msra.mxu0 0.0
        %1460 = vmatprep.subr.mxu0 0.0
        %1461 = vmatpush1.msra.mxu0 0.0
        %1462 = vmatprep.subr.mxu0 0.0
        %1463 = vmatpush1.msra.mxu0 0.0
        %1464 = vmatprep.subr.mxu0 0.0
        %1465 = vmatpush1.msra.mxu0 0.0
        %1466 = vmatprep.mubr.f32.mxu0 0.0
        %1467 = vmatmul.mubr.f32.gmra.mrb[0].mxu0 %v1379
        %v1468 = vpop.f32.mrb[0].mxu0
        %v1469 = vadd.f32 0.0, %v1468
        %v1470 = vpop.f32.mrb[0].mxu0
        %v1471 = vadd.f32 0.0, %v1470
        %1472 = vmatprep.mubr.f32.mxu0 0.0
        %1473 = vmatmul.mubr.f32.gmra.mrb[0].mxu0 %v1382
        %v1474 = vpop.f32.mrb[0].mxu0
        %v1475 = vadd.f32 0.0, %v1474
        %v1476 = vpop.f32.mrb[0].mxu0
        %v1477 = vadd.f32 0.0, %v1476
        %1478 = vmatprep.mubr.f32.mxu0 0.0
        %1479 = vmatmul.mubr.f32.gmra.mrb[0].mxu0 %v1385
        %v1480 = vpop.f32.mrb[0].mxu0
        %v1481 = vadd.f32 0.0, %v1480
        %v1482 = vpop.f32.mrb[0].mxu0
        %v1483 = vadd.f32 0.0, %v1482
        %1484 = vmatprep.mubr.f32.mxu0 0.0
        %1485 = vmatmul.mubr.f32.gmra.mrb[0].mxu0 %v1388
        %v1486 = vpop.f32.mrb[0].mxu0
        %v1487 = vadd.f32 0.0, %v1486
        %v1488 = vpop.f32.mrb[0].mxu0
        %v1489 = vadd.f32 0.0, %v1488
        %1490 = vmatprep.mubr.f32.mxu0 0.0
        %1491 = vmatmul.mubr.f32.gmra.mrb[0].mxu0 %v1391
        %v1492 = vpop.f32.mrb[0].mxu0
        %v1493 = vadd.f32 0.0, %v1492
        %v1494 = vpop.f32.mrb[0].mxu0
        %v1495 = vadd.f32 0.0, %v1494
        %1496 = vmatprep.mubr.f32.mxu0 0.0
        %1497 = vmatmul.mubr.f32.gmra.mrb[0].mxu0 %v1394
        %v1498 = vpop.f32.mrb[0].mxu0
        %v1499 = vadd.f32 0.0, %v1498
        %v1500 = vpop.f32.mrb[0].mxu0
        %v1501 = vadd.f32 0.0, %v1500
        %1502 = vmatprep.mubr.f32.mxu0 0.0
        %1503 = vmatmul.mubr.f32.gmra.mrb[0].mxu0 %v1397
        %v1504 = vpop.f32.mrb[0].mxu0
        %v1505 = vadd.f32 0.0, %v1504
        %v1506 = vpop.f32.mrb[0].mxu0
        %v1507 = vadd.f32 0.0, %v1506
        %1508 = vmatprep.mubr.f32.mxu0 0.0
        %1509 = vmatmul.mubr.f32.gmra.mrb[0].mxu0 %v1400
        %v1510 = vpop.f32.mrb[0].mxu0
        %v1511 = vadd.f32 0.0, %v1510
        %v1512 = vpop.f32.mrb[0].mxu0
        %v1513 = vadd.f32 0.0, %v1512
        %1514 = vdwg.mxu0
        %v1515 = vadd.f32 %v1338, %v1469
        %v1516 = vadd.f32 %v1339, %v1471
        %v1517 = vadd.f32 %v1340, %v1475
        %v1518 = vadd.f32 %v1341, %v1477
        %v1519 = vadd.f32 %v1342, %v1481
        %v1520 = vadd.f32 %v1343, %v1483
        %v1521 = vadd.f32 %v1344, %v1487
        %v1522 = vadd.f32 %v1345, %v1489
        %v1523 = vadd.f32 %v1346, %v1493
        %v1524 = vadd.f32 %v1347, %v1495
        %v1525 = vadd.f32 %v1348, %v1499
        %v1526 = vadd.f32 %v1349, %v1501
        %v1527 = vadd.f32 %v1350, %v1505
        %v1528 = vadd.f32 %v1351, %v1507
        %v1529 = vadd.f32 %v1352, %v1511
        %v1530 = vadd.f32 %v1353, %v1513
        %v1531 = vxor.u32 %v1515, 2147483648
        %v1532 = vxor.u32 %v1516, 2147483648
        %v1533 = vxor.u32 %v1517, 2147483648
        %v1534 = vxor.u32 %v1518, 2147483648
        %v1535 = vxor.u32 %v1519, 2147483648
        %v1536 = vxor.u32 %v1520, 2147483648
        %v1537 = vxor.u32 %v1521, 2147483648
        %v1538 = vxor.u32 %v1522, 2147483648
        %v1539 = vxor.u32 %v1523, 2147483648
        %v1540 = vxor.u32 %v1524, 2147483648
        %v1541 = vxor.u32 %v1525, 2147483648
        %v1542 = vxor.u32 %v1526, 2147483648
        %v1543 = vxor.u32 %v1527, 2147483648
        %v1544 = vxor.u32 %v1528, 2147483648
        %v1545 = vxor.u32 %v1529, 2147483648
        %v1546 = vxor.u32 %v1530, 2147483648
        %v1547 = vmul.f32 %v1531, 1.442695
        %v1548 = vpow.pop %v1547
        %v1549 = vmul.f32 %v1532, 1.442695
        %v1550 = vpow.pop %v1549
        %v1551 = vmul.f32 %v1533, 1.442695
        %v1552 = vpow.pop %v1551
        %v1553 = vmul.f32 %v1534, 1.442695
        %v1554 = vpow.pop %v1553
        %v1555 = vmul.f32 %v1535, 1.442695
        %v1556 = vpow.pop %v1555
        %v1557 = vmul.f32 %v1536, 1.442695
        %v1558 = vpow.pop %v1557
        %v1559 = vmul.f32 %v1537, 1.442695
        %v1560 = vpow.pop %v1559
        %v1561 = vmul.f32 %v1538, 1.442695
        %v1562 = vpow.pop %v1561
        %v1563 = vmul.f32 %v1539, 1.442695
        %v1564 = vpow.pop %v1563
        %v1565 = vmul.f32 %v1540, 1.442695
        %v1566 = vpow.pop %v1565
        %v1567 = vmul.f32 %v1541, 1.442695
        %v1568 = vpow.pop %v1567
        %v1569 = vmul.f32 %v1542, 1.442695
        %v1570 = vpow.pop %v1569
        %v1571 = vmul.f32 %v1543, 1.442695
        %v1572 = vpow.pop %v1571
        %v1573 = vmul.f32 %v1544, 1.442695
        %v1574 = vpow.pop %v1573
        %v1575 = vmul.f32 %v1545, 1.442695
        %v1576 = vpow.pop %v1575
        %v1577 = vmul.f32 %v1546, 1.442695
        %v1578 = vpow.pop %v1577
        %v1579 = vadd.f32 %v1548, 1.0
        %v1580 = vadd.f32 %v1550, 1.0
        %v1581 = vadd.f32 %v1552, 1.0
        %v1582 = vadd.f32 %v1554, 1.0
        %v1583 = vadd.f32 %v1556, 1.0
        %v1584 = vadd.f32 %v1558, 1.0
        %v1585 = vadd.f32 %v1560, 1.0
        %v1586 = vadd.f32 %v1562, 1.0
        %v1587 = vadd.f32 %v1564, 1.0
        %v1588 = vadd.f32 %v1566, 1.0
        %v1589 = vadd.f32 %v1568, 1.0
        %v1590 = vadd.f32 %v1570, 1.0
        %v1591 = vadd.f32 %v1572, 1.0
        %v1592 = vadd.f32 %v1574, 1.0
        %v1593 = vadd.f32 %v1576, 1.0
        %v1594 = vadd.f32 %v1578, 1.0
        %v1595 = vrcp.pop %v1579
        %v1596 = vmul.f32 1.0, %v1595
        %v1597 = vrcp.pop %v1580
        %v1598 = vmul.f32 1.0, %v1597
        %v1599 = vrcp.pop %v1581
        %v1600 = vmul.f32 1.0, %v1599
        %v1601 = vrcp.pop %v1582
        %v1602 = vmul.f32 1.0, %v1601
        %v1603 = vrcp.pop %v1583
        %v1604 = vmul.f32 1.0, %v1603
        %v1605 = vrcp.pop %v1584
        %v1606 = vmul.f32 1.0, %v1605
        %v1607 = vrcp.pop %v1585
        %v1608 = vmul.f32 1.0, %v1607
        %v1609 = vrcp.pop %v1586
        %v1610 = vmul.f32 1.0, %v1609
        %v1611 = vrcp.pop %v1587
        %v1612 = vmul.f32 1.0, %v1611
        %v1613 = vrcp.pop %v1588
        %v1614 = vmul.f32 1.0, %v1613
        %v1615 = vrcp.pop %v1589
        %v1616 = vmul.f32 1.0, %v1615
        %v1617 = vrcp.pop %v1590
        %v1618 = vmul.f32 1.0, %v1617
        %v1619 = vrcp.pop %v1591
        %v1620 = vmul.f32 1.0, %v1619
        %v1621 = vrcp.pop %v1592
        %v1622 = vmul.f32 1.0, %v1621
        %v1623 = vrcp.pop %v1593
        %v1624 = vmul.f32 1.0, %v1623
        %v1625 = vrcp.pop %v1594
        %v1626 = vmul.f32 1.0, %v1625
        %v1627 = vtanh.pop %v1516
        %v1628 = vtanh.pop %v1518
        %v1629 = vtanh.pop %v1520
        %v1630 = vtanh.pop %v1522
        %v1631 = vtanh.pop %v1524
        %v1632 = vtanh.pop %v1526
        %v1633 = vtanh.pop %v1528
        %v1634 = vtanh.pop %v1530
        %v1635 = vld [vmem:[#allocation4] sm:$0xff]
        %v1636 = vld [vmem:[#allocation4 + $0x8] sm:$0xff]
        %v1637 = vld [vmem:[#allocation4 + $0x10] sm:$0xff]
        %v1638 = vld [vmem:[#allocation4 + $0x18] sm:$0xff]
        %v1639 = vld [vmem:[#allocation4 + $0x20] sm:$0xff]
        %v1640 = vld [vmem:[#allocation4 + $0x28] sm:$0xff]
        %v1641 = vld [vmem:[#allocation4 + $0x30] sm:$0xff]
        %v1642 = vld [vmem:[#allocation4 + $0x38] sm:$0xff]
        %1651 = vrot.lane.b32.xlu0 %v1635, 64
        %v1652 = vpop.permute.xlu0 %1651
        %1653 = vrot.lane.b32.xlu0 %v1636, 64
        %v1654 = vpop.permute.xlu0 %1653
        %1655 = vrot.lane.b32.xlu0 %v1637, 64
        %v1656 = vpop.permute.xlu0 %1655
        %1657 = vrot.lane.b32.xlu0 %v1638, 64
        %v1658 = vpop.permute.xlu0 %1657
        %1659 = vrot.lane.b32.xlu0 %v1639, 64
        %v1660 = vpop.permute.xlu0 %1659
        %1661 = vrot.lane.b32.xlu0 %v1640, 64
        %v1662 = vpop.permute.xlu0 %1661
        %1663 = vrot.lane.b32.xlu0 %v1641, 64
        %v1664 = vpop.permute.xlu0 %1663
        %1665 = vrot.lane.b32.xlu0 %v1642, 64
        %v1666 = vpop.permute.xlu0 %1665
        %v1675 = vmul.f32 %v1596, %v1652
        %v1676 = vmul.f32 %v1600, %v1654
        %v1677 = vmul.f32 %v1604, %v1656
        %v1678 = vmul.f32 %v1608, %v1658
        %v1679 = vmul.f32 %v1612, %v1660
        %v1680 = vmul.f32 %v1616, %v1662
        %v1681 = vmul.f32 %v1620, %v1664
        %v1682 = vmul.f32 %v1624, %v1666
        %1691 = vrot.lane.b32.xlu0 %v1627, 64
        %v1692 = vpop.permute.xlu0 %1691
        %1693 = vrot.lane.b32.xlu0 %v1628, 64
        %v1694 = vpop.permute.xlu0 %1693
        %1695 = vrot.lane.b32.xlu0 %v1629, 64
        %v1696 = vpop.permute.xlu0 %1695
        %1697 = vrot.lane.b32.xlu0 %v1630, 64
        %v1698 = vpop.permute.xlu0 %1697
        %1699 = vrot.lane.b32.xlu0 %v1631, 64
        %v1700 = vpop.permute.xlu0 %1699
        %1701 = vrot.lane.b32.xlu0 %v1632, 64
        %v1702 = vpop.permute.xlu0 %1701
        %1703 = vrot.lane.b32.xlu0 %v1633, 64
        %v1704 = vpop.permute.xlu0 %1703
        %1705 = vrot.lane.b32.xlu0 %v1634, 64
        %v1706 = vpop.permute.xlu0 %1705
        %v1715 = vmul.f32 %v1596, %v1692
        %v1716 = vmul.f32 %v1600, %v1694
        %v1717 = vmul.f32 %v1604, %v1696
        %v1718 = vmul.f32 %v1608, %v1698
        %v1719 = vmul.f32 %v1612, %v1700
        %v1720 = vmul.f32 %v1616, %v1702
        %v1721 = vmul.f32 %v1620, %v1704
        %v1722 = vmul.f32 %v1624, %v1706
        %1731 = vrot.lane.b32.xlu0 %v1715, 64
        %v1732 = vpop.permute.xlu0 %1731
        %1733 = vrot.lane.b32.xlu0 %v1716, 64
        %v1734 = vpop.permute.xlu0 %1733
        %1735 = vrot.lane.b32.xlu0 %v1717, 64
        %v1736 = vpop.permute.xlu0 %1735
        %1737 = vrot.lane.b32.xlu0 %v1718, 64
        %v1738 = vpop.permute.xlu0 %1737
        %1739 = vrot.lane.b32.xlu0 %v1719, 64
        %v1740 = vpop.permute.xlu0 %1739
        %1741 = vrot.lane.b32.xlu0 %v1720, 64
        %v1742 = vpop.permute.xlu0 %1741
        %1743 = vrot.lane.b32.xlu0 %v1721, 64
        %v1744 = vpop.permute.xlu0 %1743
        %1745 = vrot.lane.b32.xlu0 %v1722, 64
        %v1746 = vpop.permute.xlu0 %1745
        %v1755 = vadd.f32 %v1675, %v1732
        %v1756 = vadd.f32 %v1676, %v1734
        %v1757 = vadd.f32 %v1677, %v1736
        %v1758 = vadd.f32 %v1678, %v1738
        %v1759 = vadd.f32 %v1679, %v1740
        %v1760 = vadd.f32 %v1680, %v1742
        %v1761 = vadd.f32 %v1681, %v1744
        %v1762 = vadd.f32 %v1682, %v1746
        %v1763 = vtanh.pop %v1755
        %v1764 = vtanh.pop %v1756
        %v1765 = vtanh.pop %v1757
        %v1766 = vtanh.pop %v1758
        %v1767 = vtanh.pop %v1759
        %v1768 = vtanh.pop %v1760
        %v1769 = vtanh.pop %v1761
        %v1770 = vtanh.pop %v1762
        %1779 = vrot.lane.b32.xlu0 %v1763, 64
        %v1780 = vpop.permute.xlu0 %1779
        %1781 = vrot.lane.b32.xlu0 %v1764, 64
        %v1782 = vpop.permute.xlu0 %1781
        %1783 = vrot.lane.b32.xlu0 %v1765, 64
        %v1784 = vpop.permute.xlu0 %1783
        %1785 = vrot.lane.b32.xlu0 %v1766, 64
        %v1786 = vpop.permute.xlu0 %1785
        %1787 = vrot.lane.b32.xlu0 %v1767, 64
        %v1788 = vpop.permute.xlu0 %1787
        %1789 = vrot.lane.b32.xlu0 %v1768, 64
        %v1790 = vpop.permute.xlu0 %1789
        %1791 = vrot.lane.b32.xlu0 %v1769, 64
        %v1792 = vpop.permute.xlu0 %1791
        %1793 = vrot.lane.b32.xlu0 %v1770, 64
        %v1794 = vpop.permute.xlu0 %1793
        %v1803 = vmul.f32 %v1598, %v1780
        %v1804 = vmul.f32 %v1602, %v1782
        %v1805 = vmul.f32 %v1606, %v1784
        %v1806 = vmul.f32 %v1610, %v1786
        %v1807 = vmul.f32 %v1614, %v1788
        %v1808 = vmul.f32 %v1618, %v1790
        %v1809 = vmul.f32 %v1622, %v1792
        %v1810 = vmul.f32 %v1626, %v1794
        %1819 = vrot.lane.b32.xlu0 %v1755, 64
        %v1820 = vpop.permute.xlu0 %1819
        %1821 = vrot.lane.b32.xlu0 %v1756, 64
        %v1822 = vpop.permute.xlu0 %1821
        %1823 = vrot.lane.b32.xlu0 %v1757, 64
        %v1824 = vpop.permute.xlu0 %1823
        %1825 = vrot.lane.b32.xlu0 %v1758, 64
        %v1826 = vpop.permute.xlu0 %1825
        %1827 = vrot.lane.b32.xlu0 %v1759, 64
        %v1828 = vpop.permute.xlu0 %1827
        %1829 = vrot.lane.b32.xlu0 %v1760, 64
        %v1830 = vpop.permute.xlu0 %1829
        %1831 = vrot.lane.b32.xlu0 %v1761, 64
        %v1832 = vpop.permute.xlu0 %1831
        %1833 = vrot.lane.b32.xlu0 %v1762, 64
        %v1834 = vpop.permute.xlu0 %1833
        %1843 = vst.msk [vmem:[#allocation4] sm:$0xff] %vm1313, %v1820
        %1844 = vst.msk [vmem:[#allocation4 + $0x8] sm:$0xff] %vm1313, %v1822
        %1845 = vst.msk [vmem:[#allocation4 + $0x10] sm:$0xff] %vm1313, %v1824
        %1846 = vst.msk [vmem:[#allocation4 + $0x18] sm:$0xff] %vm1313, %v1826
        %1847 = vst.msk [vmem:[#allocation4 + $0x20] sm:$0xff] %vm1313, %v1828
        %1848 = vst.msk [vmem:[#allocation4 + $0x28] sm:$0xff] %vm1313, %v1830
        %1849 = vst.msk [vmem:[#allocation4 + $0x30] sm:$0xff] %vm1313, %v1832
        %1850 = vst.msk [vmem:[#allocation4 + $0x38] sm:$0xff] %vm1313, %v1834
        %1851 = vst.msk [vmem:[#allocation3] sm:$0xff] %vm1313, %v1803
        %1852 = vst.msk [vmem:[#allocation3 + $0x8] sm:$0xff] %vm1313, %v1804
        %1853 = vst.msk [vmem:[#allocation3 + $0x10] sm:$0xff] %vm1313, %v1805
        %1854 = vst.msk [vmem:[#allocation3 + $0x18] sm:$0xff] %vm1313, %v1806
        %1855 = vst.msk [vmem:[#allocation3 + $0x20] sm:$0xff] %vm1313, %v1807
        %1856 = vst.msk [vmem:[#allocation3 + $0x28] sm:$0xff] %vm1313, %v1808
        %1857 = vst.msk [vmem:[#allocation3 + $0x30] sm:$0xff] %vm1313, %v1809
        %1858 = vst.msk [vmem:[#allocation3 + $0x38] sm:$0xff] %vm1313, %v1810
        %v1859 = vld [vmem:[#allocation5] sm:$0xff]
        %v1860 = vld [vmem:[#allocation5 + $0x8] sm:$0xff]
        %v1861 = vld [vmem:[#allocation5 + $0x10] sm:$0xff]
        %v1862 = vld [vmem:[#allocation5 + $0x18] sm:$0xff]
        %v1863 = vld [vmem:[#allocation5 + $0x20] sm:$0xff]
        %v1864 = vld [vmem:[#allocation5 + $0x28] sm:$0xff]
        %v1865 = vld [vmem:[#allocation5 + $0x30] sm:$0xff]
        %v1866 = vld [vmem:[#allocation5 + $0x38] sm:$0xff]
        %v1867 = vmax.f32 %v1803, 0.0
        %v1868 = vmax.f32 %v1804, 0.0
        %v1869 = vmax.f32 %v1805, 0.0
        %v1870 = vmax.f32 %v1806, 0.0
        %v1871 = vmax.f32 %v1807, 0.0
        %v1872 = vmax.f32 %v1808, 0.0
        %v1873 = vmax.f32 %v1809, 0.0
        %v1874 = vmax.f32 %v1810, 0.0
        %v1875 = vadd.f32 %v1859, %v1867
        %v1876 = vadd.f32 %v1860, %v1868
        %v1877 = vadd.f32 %v1861, %v1869
        %v1878 = vadd.f32 %v1862, %v1870
        %v1879 = vadd.f32 %v1863, %v1871
        %v1880 = vadd.f32 %v1864, %v1872
        %v1881 = vadd.f32 %v1865, %v1873
        %v1882 = vadd.f32 %v1866, %v1874
        %1883 = vst.msk [vmem:[#allocation5] sm:$0xff] %vm1313, %v1875
        %1884 = vst.msk [vmem:[#allocation5 + $0x8] sm:$0xff] %vm1313, %v1876
        %1885 = vst.msk [vmem:[#allocation5 + $0x10] sm:$0xff] %vm1313, %v1877
        %1886 = vst.msk [vmem:[#allocation5 + $0x18] sm:$0xff] %vm1313, %v1878
        %1887 = vst.msk [vmem:[#allocation5 + $0x20] sm:$0xff] %vm1313, %v1879
        %1888 = vst.msk [vmem:[#allocation5 + $0x28] sm:$0xff] %vm1313, %v1880
        %1889 = vst.msk [vmem:[#allocation5 + $0x30] sm:$0xff] %vm1313, %v1881
        %1890 = vst.msk [vmem:[#allocation5 + $0x38] sm:$0xff] %vm1313, %v1882
        %v1891 = vld [vmem:[#allocation2 + $0x10] sm:$0xff]
        %v1892 = vld [vmem:[#allocation2 + $0x18] sm:$0xff]
        %v1893 = vld [vmem:[#allocation2 + $0x90] sm:$0xff]
        %v1894 = vld [vmem:[#allocation2 + $0x98] sm:$0xff]
        %v1895 = vld [vmem:[#allocation2 + $0x110] sm:$0xff]
        %v1896 = vld [vmem:[#allocation2 + $0x118] sm:$0xff]
        %v1897 = vld [vmem:[#allocation2 + $0x190] sm:$0xff]
        %v1898 = vld [vmem:[#allocation2 + $0x198] sm:$0xff]
        %v1899 = vld [vmem:[#allocation2 + $0x210] sm:$0xff]
        %v1900 = vld [vmem:[#allocation2 + $0x218] sm:$0xff]
        %v1901 = vld [vmem:[#allocation2 + $0x290] sm:$0xff]
        %v1902 = vld [vmem:[#allocation2 + $0x298] sm:$0xff]
        %v1903 = vld [vmem:[#allocation2 + $0x310] sm:$0xff]
        %v1904 = vld [vmem:[#allocation2 + $0x318] sm:$0xff]
        %v1905 = vld [vmem:[#allocation2 + $0x390] sm:$0xff]
        %v1906 = vld [vmem:[#allocation2 + $0x398] sm:$0xff]
        %v1907 = vld [vmem:[#allocation3] sm:$0xff]
        %v1908 = vld [vmem:[#allocation3 + $0x8] sm:$0xff]
        %v1909 = vld [vmem:[#allocation3 + $0x10] sm:$0xff]
        %v1910 = vld [vmem:[#allocation3 + $0x18] sm:$0xff]
        %v1911 = vld [vmem:[#allocation3 + $0x20] sm:$0xff]
        %v1912 = vld [vmem:[#allocation3 + $0x28] sm:$0xff]
        %v1913 = vld [vmem:[#allocation3 + $0x30] sm:$0xff]
        %v1914 = vld [vmem:[#allocation3 + $0x38] sm:$0xff]
        %v1915 = vld [vmem:[#allocation9] sm:$0xff]
        %v1916 = vld [vmem:[#allocation9 + $0x8] sm:$0xff]
        %v1917 = vld [vmem:[#allocation9 + $0x10] sm:$0xff]
        %v1918 = vld [vmem:[#allocation9 + $0x18] sm:$0xff]
        %v1919 = vld [vmem:[#allocation9 + $0x20] sm:$0xff]
        %v1920 = vld [vmem:[#allocation9 + $0x28] sm:$0xff]
        %v1921 = vld [vmem:[#allocation9 + $0x30] sm:$0xff]
        %v1922 = vld [vmem:[#allocation9 + $0x38] sm:$0xff]
        %v1923 = vld [vmem:[#allocation9 + $0x40] sm:$0xff]
        %v1924 = vld [vmem:[#allocation9 + $0x48] sm:$0xff]
        %v1925 = vld [vmem:[#allocation9 + $0x50] sm:$0xff]
        %v1926 = vld [vmem:[#allocation9 + $0x58] sm:$0xff]
        %v1927 = vld [vmem:[#allocation9 + $0x60] sm:$0xff]
        %v1928 = vld [vmem:[#allocation9 + $0x68] sm:$0xff]
        %v1929 = vld [vmem:[#allocation9 + $0x70] sm:$0xff]
        %v1930 = vld [vmem:[#allocation9 + $0x78] sm:$0xff]
        %v1932 = vsel %vm1313, %v1907, 0
        %v1935 = vsel %vm1313, %v1908, 0
        %v1938 = vsel %vm1313, %v1909, 0
        %v1941 = vsel %vm1313, %v1910, 0
        %v1944 = vsel %vm1313, %v1911, 0
        %v1947 = vsel %vm1313, %v1912, 0
        %v1950 = vsel %vm1313, %v1913, 0
        %v1953 = vsel %vm1313, %v1914, 0
        %1955 = vmatprep.subr.mxu0 %v1916
        %1956 = vmatpush1.msra.mxu0 %v1915
        %1957 = vmatprep.subr.mxu0 %v1918
        %1958 = vmatpush1.msra.mxu0 %v1917
        %1959 = vmatprep.subr.mxu0 %v1920
        %1960 = vmatpush1.msra.mxu0 %v1919
        %1961 = vmatprep.subr.mxu0 %v1922
        %1962 = vmatpush1.msra.mxu0 %v1921
        %1963 = vmatprep.subr.mxu0 %v1924
        %1964 = vmatpush1.msra.mxu0 %v1923
        %1965 = vmatprep.subr.mxu0 %v1926
        %1966 = vmatpush1.msra.mxu0 %v1925
        %1967 = vmatprep.subr.mxu0 %v1928
        %1968 = vmatpush1.msra.mxu0 %v1927
        %1969 = vmatprep.subr.mxu0 %v1930
        %1970 = vmatpush1.msra.mxu0 %v1929
        %1971 = vmatprep.subr.mxu0 0.0
        %1972 = vmatpush1.msra.mxu0 0.0
        %1973 = vmatprep.subr.mxu0 0.0
        %1974 = vmatpush1.msra.mxu0 0.0
        %1975 = vmatprep.subr.mxu0 0.0
        %1976 = vmatpush1.msra.mxu0 0.0
        %1977 = vmatprep.subr.mxu0 0.0
        %1978 = vmatpush1.msra.mxu0 0.0
        %1979 = vmatprep.subr.mxu0 0.0
        %1980 = vmatpush1.msra.mxu0 0.0
        %1981 = vmatprep.subr.mxu0 0.0
        %1982 = vmatpush1.msra.mxu0 0.0
        %1983 = vmatprep.subr.mxu0 0.0
        %1984 = vmatpush1.msra.mxu0 0.0
        %1985 = vmatprep.subr.mxu0 0.0
        %1986 = vmatpush1.msra.mxu0 0.0
        %1987 = vmatprep.subr.mxu0 0.0
        %1988 = vmatpush1.msra.mxu0 0.0
        %1989 = vmatprep.subr.mxu0 0.0
        %1990 = vmatpush1.msra.mxu0 0.0
        %1991 = vmatprep.subr.mxu0 0.0
        %1992 = vmatpush1.msra.mxu0 0.0
        %1993 = vmatprep.subr.mxu0 0.0
        %1994 = vmatpush1.msra.mxu0 0.0
        %1995 = vmatprep.subr.mxu0 0.0
        %1996 = vmatpush1.msra.mxu0 0.0
        %1997 = vmatprep.subr.mxu0 0.0
        %1998 = vmatpush1.msra.mxu0 0.0
        %1999 = vmatprep.subr.mxu0 0.0
        %2000 = vmatpush1.msra.mxu0 0.0
        %2001 = vmatprep.subr.mxu0 0.0
        %2002 = vmatpush1.msra.mxu0 0.0
        %2003 = vmatprep.subr.mxu0 0.0
        %2004 = vmatpush1.msra.mxu0 0.0
        %2005 = vmatprep.subr.mxu0 0.0
        %2006 = vmatpush1.msra.mxu0 0.0
        %2007 = vmatprep.subr.mxu0 0.0
        %2008 = vmatpush1.msra.mxu0 0.0
        %2009 = vmatprep.subr.mxu0 0.0
        %2010 = vmatpush1.msra.mxu0 0.0
        %2011 = vmatprep.subr.mxu0 0.0
        %2012 = vmatpush1.msra.mxu0 0.0
        %2013 = vmatprep.subr.mxu0 0.0
        %2014 = vmatpush1.msra.mxu0 0.0
        %2015 = vmatprep.subr.mxu0 0.0
        %2016 = vmatpush1.msra.mxu0 0.0
        %2017 = vmatprep.subr.mxu0 0.0
        %2018 = vmatpush1.msra.mxu0 0.0
        %2019 = vmatprep.mubr.f32.mxu0 0.0
        %2020 = vmatmul.mubr.f32.gmra.mrb[0].mxu0 %v1932
        %v2021 = vpop.f32.mrb[0].mxu0
        %v2022 = vadd.f32 0.0, %v2021
        %v2023 = vpop.f32.mrb[0].mxu0
        %v2024 = vadd.f32 0.0, %v2023
        %2025 = vmatprep.mubr.f32.mxu0 0.0
        %2026 = vmatmul.mubr.f32.gmra.mrb[0].mxu0 %v1935
        %v2027 = vpop.f32.mrb[0].mxu0
        %v2028 = vadd.f32 0.0, %v2027
        %v2029 = vpop.f32.mrb[0].mxu0
        %v2030 = vadd.f32 0.0, %v2029
        %2031 = vmatprep.mubr.f32.mxu0 0.0
        %2032 = vmatmul.mubr.f32.gmra.mrb[0].mxu0 %v1938
        %v2033 = vpop.f32.mrb[0].mxu0
        %v2034 = vadd.f32 0.0, %v2033
        %v2035 = vpop.f32.mrb[0].mxu0
        %v2036 = vadd.f32 0.0, %v2035
        %2037 = vmatprep.mubr.f32.mxu0 0.0
        %2038 = vmatmul.mubr.f32.gmra.mrb[0].mxu0 %v1941
        %v2039 = vpop.f32.mrb[0].mxu0
        %v2040 = vadd.f32 0.0, %v2039
        %v2041 = vpop.f32.mrb[0].mxu0
        %v2042 = vadd.f32 0.0, %v2041
        %2043 = vmatprep.mubr.f32.mxu0 0.0
        %2044 = vmatmul.mubr.f32.gmra.mrb[0].mxu0 %v1944
        %v2045 = vpop.f32.mrb[0].mxu0
        %v2046 = vadd.f32 0.0, %v2045
        %v2047 = vpop.f32.mrb[0].mxu0
        %v2048 = vadd.f32 0.0, %v2047
        %2049 = vmatprep.mubr.f32.mxu0 0.0
        %2050 = vmatmul.mubr.f32.gmra.mrb[0].mxu0 %v1947
        %v2051 = vpop.f32.mrb[0].mxu0
        %v2052 = vadd.f32 0.0, %v2051
        %v2053 = vpop.f32.mrb[0].mxu0
        %v2054 = vadd.f32 0.0, %v2053
        %2055 = vmatprep.mubr.f32.mxu0 0.0
        %2056 = vmatmul.mubr.f32.gmra.mrb[0].mxu0 %v1950
        %v2057 = vpop.f32.mrb[0].mxu0
        %v2058 = vadd.f32 0.0, %v2057
        %v2059 = vpop.f32.mrb[0].mxu0
        %v2060 = vadd.f32 0.0, %v2059
        %2061 = vmatprep.mubr.f32.mxu0 0.0
        %2062 = vmatmul.mubr.f32.gmra.mrb[0].mxu0 %v1953
        %v2063 = vpop.f32.mrb[0].mxu0
        %v2064 = vadd.f32 0.0, %v2063
        %v2065 = vpop.f32.mrb[0].mxu0
        %v2066 = vadd.f32 0.0, %v2065
        %2067 = vdwg.mxu0
        %v2068 = vadd.f32 %v1891, %v2022
        %v2069 = vadd.f32 %v1892, %v2024
        %v2070 = vadd.f32 %v1893, %v2028
        %v2071 = vadd.f32 %v1894, %v2030
        %v2072 = vadd.f32 %v1895, %v2034
        %v2073 = vadd.f32 %v1896, %v2036
        %v2074 = vadd.f32 %v1897, %v2040
        %v2075 = vadd.f32 %v1898, %v2042
        %v2076 = vadd.f32 %v1899, %v2046
        %v2077 = vadd.f32 %v1900, %v2048
        %v2078 = vadd.f32 %v1901, %v2052
        %v2079 = vadd.f32 %v1902, %v2054
        %v2080 = vadd.f32 %v1903, %v2058
        %v2081 = vadd.f32 %v1904, %v2060
        %v2082 = vadd.f32 %v1905, %v2064
        %v2083 = vadd.f32 %v1906, %v2066
        %v2084 = vxor.u32 %v2068, 2147483648
        %v2085 = vxor.u32 %v2069, 2147483648
        %v2086 = vxor.u32 %v2070, 2147483648
        %v2087 = vxor.u32 %v2071, 2147483648
        %v2088 = vxor.u32 %v2072, 2147483648
        %v2089 = vxor.u32 %v2073, 2147483648
        %v2090 = vxor.u32 %v2074, 2147483648
        %v2091 = vxor.u32 %v2075, 2147483648
        %v2092 = vxor.u32 %v2076, 2147483648
        %v2093 = vxor.u32 %v2077, 2147483648
        %v2094 = vxor.u32 %v2078, 2147483648
        %v2095 = vxor.u32 %v2079, 2147483648
        %v2096 = vxor.u32 %v2080, 2147483648
        %v2097 = vxor.u32 %v2081, 2147483648
        %v2098 = vxor.u32 %v2082, 2147483648
        %v2099 = vxor.u32 %v2083, 2147483648
        %v2100 = vmul.f32 %v2084, 1.442695
        %v2101 = vpow.pop %v2100
        %v2102 = vmul.f32 %v2085, 1.442695
        %v2103 = vpow.pop %v2102
        %v2104 = vmul.f32 %v2086, 1.442695
        %v2105 = vpow.pop %v2104
        %v2106 = vmul.f32 %v2087, 1.442695
        %v2107 = vpow.pop %v2106
        %v2108 = vmul.f32 %v2088, 1.442695
        %v2109 = vpow.pop %v2108
        %v2110 = vmul.f32 %v2089, 1.442695
        %v2111 = vpow.pop %v2110
        %v2112 = vmul.f32 %v2090, 1.442695
        %v2113 = vpow.pop %v2112
        %v2114 = vmul.f32 %v2091, 1.442695
        %v2115 = vpow.pop %v2114
        %v2116 = vmul.f32 %v2092, 1.442695
        %v2117 = vpow.pop %v2116
        %v2118 = vmul.f32 %v2093, 1.442695
        %v2119 = vpow.pop %v2118
        %v2120 = vmul.f32 %v2094, 1.442695
        %v2121 = vpow.pop %v2120
        %v2122 = vmul.f32 %v2095, 1.442695
        %v2123 = vpow.pop %v2122
        %v2124 = vmul.f32 %v2096, 1.442695
        %v2125 = vpow.pop %v2124
        %v2126 = vmul.f32 %v2097, 1.442695
        %v2127 = vpow.pop %v2126
        %v2128 = vmul.f32 %v2098, 1.442695
        %v2129 = vpow.pop %v2128
        %v2130 = vmul.f32 %v2099, 1.442695
        %v2131 = vpow.pop %v2130
        %v2132 = vadd.f32 %v2101, 1.0
        %v2133 = vadd.f32 %v2103, 1.0
        %v2134 = vadd.f32 %v2105, 1.0
        %v2135 = vadd.f32 %v2107, 1.0
        %v2136 = vadd.f32 %v2109, 1.0
        %v2137 = vadd.f32 %v2111, 1.0
        %v2138 = vadd.f32 %v2113, 1.0
        %v2139 = vadd.f32 %v2115, 1.0
        %v2140 = vadd.f32 %v2117, 1.0
        %v2141 = vadd.f32 %v2119, 1.0
        %v2142 = vadd.f32 %v2121, 1.0
        %v2143 = vadd.f32 %v2123, 1.0
        %v2144 = vadd.f32 %v2125, 1.0
        %v2145 = vadd.f32 %v2127, 1.0
        %v2146 = vadd.f32 %v2129, 1.0
        %v2147 = vadd.f32 %v2131, 1.0
        %v2148 = vrcp.pop %v2132
        %v2149 = vmul.f32 1.0, %v2148
        %v2150 = vrcp.pop %v2133
        %v2151 = vmul.f32 1.0, %v2150
        %v2152 = vrcp.pop %v2134
        %v2153 = vmul.f32 1.0, %v2152
        %v2154 = vrcp.pop %v2135
        %v2155 = vmul.f32 1.0, %v2154
        %v2156 = vrcp.pop %v2136
        %v2157 = vmul.f32 1.0, %v2156
        %v2158 = vrcp.pop %v2137
        %v2159 = vmul.f32 1.0, %v2158
        %v2160 = vrcp.pop %v2138
        %v2161 = vmul.f32 1.0, %v2160
        %v2162 = vrcp.pop %v2139
        %v2163 = vmul.f32 1.0, %v2162
        %v2164 = vrcp.pop %v2140
        %v2165 = vmul.f32 1.0, %v2164
        %v2166 = vrcp.pop %v2141
        %v2167 = vmul.f32 1.0, %v2166
        %v2168 = vrcp.pop %v2142
        %v2169 = vmul.f32 1.0, %v2168
        %v2170 = vrcp.pop %v2143
        %v2171 = vmul.f32 1.0, %v2170
        %v2172 = vrcp.pop %v2144
        %v2173 = vmul.f32 1.0, %v2172
        %v2174 = vrcp.pop %v2145
        %v2175 = vmul.f32 1.0, %v2174
        %v2176 = vrcp.pop %v2146
        %v2177 = vmul.f32 1.0, %v2176
        %v2178 = vrcp.pop %v2147
        %v2179 = vmul.f32 1.0, %v2178
        %v2180 = vtanh.pop %v2069
        %v2181 = vtanh.pop %v2071
        %v2182 = vtanh.pop %v2073
        %v2183 = vtanh.pop %v2075
        %v2184 = vtanh.pop %v2077
        %v2185 = vtanh.pop %v2079
        %v2186 = vtanh.pop %v2081
        %v2187 = vtanh.pop %v2083
        %v2188 = vld [vmem:[#allocation4] sm:$0xff]
        %v2189 = vld [vmem:[#allocation4 + $0x8] sm:$0xff]
        %v2190 = vld [vmem:[#allocation4 + $0x10] sm:$0xff]
        %v2191 = vld [vmem:[#allocation4 + $0x18] sm:$0xff]
        %v2192 = vld [vmem:[#allocation4 + $0x20] sm:$0xff]
        %v2193 = vld [vmem:[#allocation4 + $0x28] sm:$0xff]
        %v2194 = vld [vmem:[#allocation4 + $0x30] sm:$0xff]
        %v2195 = vld [vmem:[#allocation4 + $0x38] sm:$0xff]
        %2204 = vrot.lane.b32.xlu0 %v2188, 64
        %v2205 = vpop.permute.xlu0 %2204
        %2206 = vrot.lane.b32.xlu0 %v2189, 64
        %v2207 = vpop.permute.xlu0 %2206
        %2208 = vrot.lane.b32.xlu0 %v2190, 64
        %v2209 = vpop.permute.xlu0 %2208
        %2210 = vrot.lane.b32.xlu0 %v2191, 64
        %v2211 = vpop.permute.xlu0 %2210
        %2212 = vrot.lane.b32.xlu0 %v2192, 64
        %v2213 = vpop.permute.xlu0 %2212
        %2214 = vrot.lane.b32.xlu0 %v2193, 64
        %v2215 = vpop.permute.xlu0 %2214
        %2216 = vrot.lane.b32.xlu0 %v2194, 64
        %v2217 = vpop.permute.xlu0 %2216
        %2218 = vrot.lane.b32.xlu0 %v2195, 64
        %v2219 = vpop.permute.xlu0 %2218
        %v2228 = vmul.f32 %v2149, %v2205
        %v2229 = vmul.f32 %v2153, %v2207
        %v2230 = vmul.f32 %v2157, %v2209
        %v2231 = vmul.f32 %v2161, %v2211
        %v2232 = vmul.f32 %v2165, %v2213
        %v2233 = vmul.f32 %v2169, %v2215
        %v2234 = vmul.f32 %v2173, %v2217
        %v2235 = vmul.f32 %v2177, %v2219
        %2244 = vrot.lane.b32.xlu0 %v2180, 64
        %v2245 = vpop.permute.xlu0 %2244
        %2246 = vrot.lane.b32.xlu0 %v2181, 64
        %v2247 = vpop.permute.xlu0 %2246
        %2248 = vrot.lane.b32.xlu0 %v2182, 64
        %v2249 = vpop.permute.xlu0 %2248
        %2250 = vrot.lane.b32.xlu0 %v2183, 64
        %v2251 = vpop.permute.xlu0 %2250
        %2252 = vrot.lane.b32.xlu0 %v2184, 64
        %v2253 = vpop.permute.xlu0 %2252
        %2254 = vrot.lane.b32.xlu0 %v2185, 64
        %v2255 = vpop.permute.xlu0 %2254
        %2256 = vrot.lane.b32.xlu0 %v2186, 64
        %v2257 = vpop.permute.xlu0 %2256
        %2258 = vrot.lane.b32.xlu0 %v2187, 64
        %v2259 = vpop.permute.xlu0 %2258
        %v2268 = vmul.f32 %v2149, %v2245
        %v2269 = vmul.f32 %v2153, %v2247
        %v2270 = vmul.f32 %v2157, %v2249
        %v2271 = vmul.f32 %v2161, %v2251
        %v2272 = vmul.f32 %v2165, %v2253
        %v2273 = vmul.f32 %v2169, %v2255
        %v2274 = vmul.f32 %v2173, %v2257
        %v2275 = vmul.f32 %v2177, %v2259
        %2284 = vrot.lane.b32.xlu0 %v2268, 64
        %v2285 = vpop.permute.xlu0 %2284
        %2286 = vrot.lane.b32.xlu0 %v2269, 64
        %v2287 = vpop.permute.xlu0 %2286
        %2288 = vrot.lane.b32.xlu0 %v2270, 64
        %v2289 = vpop.permute.xlu0 %2288
        %2290 = vrot.lane.b32.xlu0 %v2271, 64
        %v2291 = vpop.permute.xlu0 %2290
        %2292 = vrot.lane.b32.xlu0 %v2272, 64
        %v2293 = vpop.permute.xlu0 %2292
        %2294 = vrot.lane.b32.xlu0 %v2273, 64
        %v2295 = vpop.permute.xlu0 %2294
        %2296 = vrot.lane.b32.xlu0 %v2274, 64
        %v2297 = vpop.permute.xlu0 %2296
        %2298 = vrot.lane.b32.xlu0 %v2275, 64
        %v2299 = vpop.permute.xlu0 %2298
        %v2308 = vadd.f32 %v2228, %v2285
        %v2309 = vadd.f32 %v2229, %v2287
        %v2310 = vadd.f32 %v2230, %v2289
        %v2311 = vadd.f32 %v2231, %v2291
        %v2312 = vadd.f32 %v2232, %v2293
        %v2313 = vadd.f32 %v2233, %v2295
        %v2314 = vadd.f32 %v2234, %v2297
        %v2315 = vadd.f32 %v2235, %v2299
        %v2316 = vtanh.pop %v2308
        %v2317 = vtanh.pop %v2309
        %v2318 = vtanh.pop %v2310
        %v2319 = vtanh.pop %v2311
        %v2320 = vtanh.pop %v2312
        %v2321 = vtanh.pop %v2313
        %v2322 = vtanh.pop %v2314
        %v2323 = vtanh.pop %v2315
        %2332 = vrot.lane.b32.xlu0 %v2316, 64
        %v2333 = vpop.permute.xlu0 %2332
        %2334 = vrot.lane.b32.xlu0 %v2317, 64
        %v2335 = vpop.permute.xlu0 %2334
        %2336 = vrot.lane.b32.xlu0 %v2318, 64
        %v2337 = vpop.permute.xlu0 %2336
        %2338 = vrot.lane.b32.xlu0 %v2319, 64
        %v2339 = vpop.permute.xlu0 %2338
        %2340 = vrot.lane.b32.xlu0 %v2320, 64
        %v2341 = vpop.permute.xlu0 %2340
        %2342 = vrot.lane.b32.xlu0 %v2321, 64
        %v2343 = vpop.permute.xlu0 %2342
        %2344 = vrot.lane.b32.xlu0 %v2322, 64
        %v2345 = vpop.permute.xlu0 %2344
        %2346 = vrot.lane.b32.xlu0 %v2323, 64
        %v2347 = vpop.permute.xlu0 %2346
        %v2356 = vmul.f32 %v2151, %v2333
        %v2357 = vmul.f32 %v2155, %v2335
        %v2358 = vmul.f32 %v2159, %v2337
        %v2359 = vmul.f32 %v2163, %v2339
        %v2360 = vmul.f32 %v2167, %v2341
        %v2361 = vmul.f32 %v2171, %v2343
        %v2362 = vmul.f32 %v2175, %v2345
        %v2363 = vmul.f32 %v2179, %v2347
        %2372 = vrot.lane.b32.xlu0 %v2308, 64
        %v2373 = vpop.permute.xlu0 %2372
        %2374 = vrot.lane.b32.xlu0 %v2309, 64
        %v2375 = vpop.permute.xlu0 %2374
        %2376 = vrot.lane.b32.xlu0 %v2310, 64
        %v2377 = vpop.permute.xlu0 %2376
        %2378 = vrot.lane.b32.xlu0 %v2311, 64
        %v2379 = vpop.permute.xlu0 %2378
        %2380 = vrot.lane.b32.xlu0 %v2312, 64
        %v2381 = vpop.permute.xlu0 %2380
        %2382 = vrot.lane.b32.xlu0 %v2313, 64
        %v2383 = vpop.permute.xlu0 %2382
        %2384 = vrot.lane.b32.xlu0 %v2314, 64
        %v2385 = vpop.permute.xlu0 %2384
        %2386 = vrot.lane.b32.xlu0 %v2315, 64
        %v2387 = vpop.permute.xlu0 %2386
        %2396 = vst.msk [vmem:[#allocation4] sm:$0xff] %vm1313, %v2373
        %2397 = vst.msk [vmem:[#allocation4 + $0x8] sm:$0xff] %vm1313, %v2375
        %2398 = vst.msk [vmem:[#allocation4 + $0x10] sm:$0xff] %vm1313, %v2377
        %2399 = vst.msk [vmem:[#allocation4 + $0x18] sm:$0xff] %vm1313, %v2379
        %2400 = vst.msk [vmem:[#allocation4 + $0x20] sm:$0xff] %vm1313, %v2381
        %2401 = vst.msk [vmem:[#allocation4 + $0x28] sm:$0xff] %vm1313, %v2383
        %2402 = vst.msk [vmem:[#allocation4 + $0x30] sm:$0xff] %vm1313, %v2385
        %2403 = vst.msk [vmem:[#allocation4 + $0x38] sm:$0xff] %vm1313, %v2387
        %2404 = vst.msk [vmem:[#allocation3] sm:$0xff] %vm1313, %v2356
        %2405 = vst.msk [vmem:[#allocation3 + $0x8] sm:$0xff] %vm1313, %v2357
        %2406 = vst.msk [vmem:[#allocation3 + $0x10] sm:$0xff] %vm1313, %v2358
        %2407 = vst.msk [vmem:[#allocation3 + $0x18] sm:$0xff] %vm1313, %v2359
        %2408 = vst.msk [vmem:[#allocation3 + $0x20] sm:$0xff] %vm1313, %v2360
        %2409 = vst.msk [vmem:[#allocation3 + $0x28] sm:$0xff] %vm1313, %v2361
        %2410 = vst.msk [vmem:[#allocation3 + $0x30] sm:$0xff] %vm1313, %v2362
        %2411 = vst.msk [vmem:[#allocation3 + $0x38] sm:$0xff] %vm1313, %v2363
        %v2412 = vld [vmem:[#allocation5] sm:$0xff]
        %v2413 = vld [vmem:[#allocation5 + $0x8] sm:$0xff]
        %v2414 = vld [vmem:[#allocation5 + $0x10] sm:$0xff]
        %v2415 = vld [vmem:[#allocation5 + $0x18] sm:$0xff]
        %v2416 = vld [vmem:[#allocation5 + $0x20] sm:$0xff]
        %v2417 = vld [vmem:[#allocation5 + $0x28] sm:$0xff]
        %v2418 = vld [vmem:[#allocation5 + $0x30] sm:$0xff]
        %v2419 = vld [vmem:[#allocation5 + $0x38] sm:$0xff]
        %v2420 = vmax.f32 %v2356, 0.0
        %v2421 = vmax.f32 %v2357, 0.0
        %v2422 = vmax.f32 %v2358, 0.0
        %v2423 = vmax.f32 %v2359, 0.0
        %v2424 = vmax.f32 %v2360, 0.0
        %v2425 = vmax.f32 %v2361, 0.0
        %v2426 = vmax.f32 %v2362, 0.0
        %v2427 = vmax.f32 %v2363, 0.0
        %v2428 = vadd.f32 %v2412, %v2420
        %v2429 = vadd.f32 %v2413, %v2421
        %v2430 = vadd.f32 %v2414, %v2422
        %v2431 = vadd.f32 %v2415, %v2423
        %v2432 = vadd.f32 %v2416, %v2424
        %v2433 = vadd.f32 %v2417, %v2425
        %v2434 = vadd.f32 %v2418, %v2426
        %v2435 = vadd.f32 %v2419, %v2427
        %2436 = vst.msk [vmem:[#allocation5] sm:$0xff] %vm1313, %v2428
        %2437 = vst.msk [vmem:[#allocation5 + $0x8] sm:$0xff] %vm1313, %v2429
        %2438 = vst.msk [vmem:[#allocation5 + $0x10] sm:$0xff] %vm1313, %v2430
        %2439 = vst.msk [vmem:[#allocation5 + $0x18] sm:$0xff] %vm1313, %v2431
        %2440 = vst.msk [vmem:[#allocation5 + $0x20] sm:$0xff] %vm1313, %v2432
        %2441 = vst.msk [vmem:[#allocation5 + $0x28] sm:$0xff] %vm1313, %v2433
        %2442 = vst.msk [vmem:[#allocation5 + $0x30] sm:$0xff] %vm1313, %v2434
        %2443 = vst.msk [vmem:[#allocation5 + $0x38] sm:$0xff] %vm1313, %v2435
        %v2444 = vld [vmem:[#allocation2 + $0x20] sm:$0xff]
        %v2445 = vld [vmem:[#allocation2 + $0x28] sm:$0xff]
        %v2446 = vld [vmem:[#allocation2 + $0xa0] sm:$0xff]
        %v2447 = vld [vmem:[#allocation2 + $0xa8] sm:$0xff]
        %v2448 = vld [vmem:[#allocation2 + $0x120] sm:$0xff]
        %v2449 = vld [vmem:[#allocation2 + $0x128] sm:$0xff]
        %v2450 = vld [vmem:[#allocation2 + $0x1a0] sm:$0xff]
        %v2451 = vld [vmem:[#allocation2 + $0x1a8] sm:$0xff]
        %v2452 = vld [vmem:[#allocation2 + $0x220] sm:$0xff]
        %v2453 = vld [vmem:[#allocation2 + $0x228] sm:$0xff]
        %v2454 = vld [vmem:[#allocation2 + $0x2a0] sm:$0xff]
        %v2455 = vld [vmem:[#allocation2 + $0x2a8] sm:$0xff]
        %v2456 = vld [vmem:[#allocation2 + $0x320] sm:$0xff]
        %v2457 = vld [vmem:[#allocation2 + $0x328] sm:$0xff]
        %v2458 = vld [vmem:[#allocation2 + $0x3a0] sm:$0xff]
        %v2459 = vld [vmem:[#allocation2 + $0x3a8] sm:$0xff]
        %v2460 = vld [vmem:[#allocation3] sm:$0xff]
        %v2461 = vld [vmem:[#allocation3 + $0x8] sm:$0xff]
        %v2462 = vld [vmem:[#allocation3 + $0x10] sm:$0xff]
        %v2463 = vld [vmem:[#allocation3 + $0x18] sm:$0xff]
        %v2464 = vld [vmem:[#allocation3 + $0x20] sm:$0xff]
        %v2465 = vld [vmem:[#allocation3 + $0x28] sm:$0xff]
        %v2466 = vld [vmem:[#allocation3 + $0x30] sm:$0xff]
        %v2467 = vld [vmem:[#allocation3 + $0x38] sm:$0xff]
        %v2468 = vld [vmem:[#allocation9] sm:$0xff]
        %v2469 = vld [vmem:[#allocation9 + $0x8] sm:$0xff]
        %v2470 = vld [vmem:[#allocation9 + $0x10] sm:$0xff]
        %v2471 = vld [vmem:[#allocation9 + $0x18] sm:$0xff]
        %v2472 = vld [vmem:[#allocation9 + $0x20] sm:$0xff]
        %v2473 = vld [vmem:[#allocation9 + $0x28] sm:$0xff]
        %v2474 = vld [vmem:[#allocation9 + $0x30] sm:$0xff]
        %v2475 = vld [vmem:[#allocation9 + $0x38] sm:$0xff]
        %v2476 = vld [vmem:[#allocation9 + $0x40] sm:$0xff]
        %v2477 = vld [vmem:[#allocation9 + $0x48] sm:$0xff]
        %v2478 = vld [vmem:[#allocation9 + $0x50] sm:$0xff]
        %v2479 = vld [vmem:[#allocation9 + $0x58] sm:$0xff]
        %v2480 = vld [vmem:[#allocation9 + $0x60] sm:$0xff]
        %v2481 = vld [vmem:[#allocation9 + $0x68] sm:$0xff]
        %v2482 = vld [vmem:[#allocation9 + $0x70] sm:$0xff]
        %v2483 = vld [vmem:[#allocation9 + $0x78] sm:$0xff]
        %v2485 = vsel %vm1313, %v2460, 0
        %v2488 = vsel %vm1313, %v2461, 0
        %v2491 = vsel %vm1313, %v2462, 0
        %v2494 = vsel %vm1313, %v2463, 0
        %v2497 = vsel %vm1313, %v2464, 0
        %v2500 = vsel %vm1313, %v2465, 0
        %v2503 = vsel %vm1313, %v2466, 0
        %v2506 = vsel %vm1313, %v2467, 0
        %2508 = vmatprep.subr.mxu0 %v2469
        %2509 = vmatpush1.msra.mxu0 %v2468
        %2510 = vmatprep.subr.mxu0 %v2471
        %2511 = vmatpush1.msra.mxu0 %v2470
        %2512 = vmatprep.subr.mxu0 %v2473
        %2513 = vmatpush1.msra.mxu0 %v2472
        %2514 = vmatprep.subr.mxu0 %v2475
        %2515 = vmatpush1.msra.mxu0 %v2474
        %2516 = vmatprep.subr.mxu0 %v2477
        %2517 = vmatpush1.msra.mxu0 %v2476
        %2518 = vmatprep.subr.mxu0 %v2479
        %2519 = vmatpush1.msra.mxu0 %v2478
        %2520 = vmatprep.subr.mxu0 %v2481
        %2521 = vmatpush1.msra.mxu0 %v2480
        %2522 = vmatprep.subr.mxu0 %v2483
        %2523 = vmatpush1.msra.mxu0 %v2482
        %2524 = vmatprep.subr.mxu0 0.0
        %2525 = vmatpush1.msra.mxu0 0.0
        %2526 = vmatprep.subr.mxu0 0.0
        %2527 = vmatpush1.msra.mxu0 0.0
        %2528 = vmatprep.subr.mxu0 0.0
        %2529 = vmatpush1.msra.mxu0 0.0
        %2530 = vmatprep.subr.mxu0 0.0
        %2531 = vmatpush1.msra.mxu0 0.0
        %2532 = vmatprep.subr.mxu0 0.0
        %2533 = vmatpush1.msra.mxu0 0.0
        %2534 = vmatprep.subr.mxu0 0.0
        %2535 = vmatpush1.msra.mxu0 0.0
        %2536 = vmatprep.subr.mxu0 0.0
        %2537 = vmatpush1.msra.mxu0 0.0
        %2538 = vmatprep.subr.mxu0 0.0
        %2539 = vmatpush1.msra.mxu0 0.0
        %2540 = vmatprep.subr.mxu0 0.0
        %2541 = vmatpush1.msra.mxu0 0.0
        %2542 = vmatprep.subr.mxu0 0.0
        %2543 = vmatpush1.msra.mxu0 0.0
        %2544 = vmatprep.subr.mxu0 0.0
        %2545 = vmatpush1.msra.mxu0 0.0
        %2546 = vmatprep.subr.mxu0 0.0
        %2547 = vmatpush1.msra.mxu0 0.0
        %2548 = vmatprep.subr.mxu0 0.0
        %2549 = vmatpush1.msra.mxu0 0.0
        %2550 = vmatprep.subr.mxu0 0.0
        %2551 = vmatpush1.msra.mxu0 0.0
        %2552 = vmatprep.subr.mxu0 0.0
        %2553 = vmatpush1.msra.mxu0 0.0
        %2554 = vmatprep.subr.mxu0 0.0
        %2555 = vmatpush1.msra.mxu0 0.0
        %2556 = vmatprep.subr.mxu0 0.0
        %2557 = vmatpush1.msra.mxu0 0.0
        %2558 = vmatprep.subr.mxu0 0.0
        %2559 = vmatpush1.msra.mxu0 0.0
        %2560 = vmatprep.subr.mxu0 0.0
        %2561 = vmatpush1.msra.mxu0 0.0
        %2562 = vmatprep.subr.mxu0 0.0
        %2563 = vmatpush1.msra.mxu0 0.0
        %2564 = vmatprep.subr.mxu0 0.0
        %2565 = vmatpush1.msra.mxu0 0.0
        %2566 = vmatprep.subr.mxu0 0.0
        %2567 = vmatpush1.msra.mxu0 0.0
        %2568 = vmatprep.subr.mxu0 0.0
        %2569 = vmatpush1.msra.mxu0 0.0
        %2570 = vmatprep.subr.mxu0 0.0
        %2571 = vmatpush1.msra.mxu0 0.0
        %2572 = vmatprep.mubr.f32.mxu0 0.0
        %2573 = vmatmul.mubr.f32.gmra.mrb[0].mxu0 %v2485
        %v2574 = vpop.f32.mrb[0].mxu0
        %v2575 = vadd.f32 0.0, %v2574
        %v2576 = vpop.f32.mrb[0].mxu0
        %v2577 = vadd.f32 0.0, %v2576
        %2578 = vmatprep.mubr.f32.mxu0 0.0
        %2579 = vmatmul.mubr.f32.gmra.mrb[0].mxu0 %v2488
        %v2580 = vpop.f32.mrb[0].mxu0
        %v2581 = vadd.f32 0.0, %v2580
        %v2582 = vpop.f32.mrb[0].mxu0
        %v2583 = vadd.f32 0.0, %v2582
        %2584 = vmatprep.mubr.f32.mxu0 0.0
        %2585 = vmatmul.mubr.f32.gmra.mrb[0].mxu0 %v2491
        %v2586 = vpop.f32.mrb[0].mxu0
        %v2587 = vadd.f32 0.0, %v2586
        %v2588 = vpop.f32.mrb[0].mxu0
        %v2589 = vadd.f32 0.0, %v2588
        %2590 = vmatprep.mubr.f32.mxu0 0.0
        %2591 = vmatmul.mubr.f32.gmra.mrb[0].mxu0 %v2494
        %v2592 = vpop.f32.mrb[0].mxu0
        %v2593 = vadd.f32 0.0, %v2592
        %v2594 = vpop.f32.mrb[0].mxu0
        %v2595 = vadd.f32 0.0, %v2594
        %2596 = vmatprep.mubr.f32.mxu0 0.0
        %2597 = vmatmul.mubr.f32.gmra.mrb[0].mxu0 %v2497
        %v2598 = vpop.f32.mrb[0].mxu0
        %v2599 = vadd.f32 0.0, %v2598
        %v2600 = vpop.f32.mrb[0].mxu0
        %v2601 = vadd.f32 0.0, %v2600
        %2602 = vmatprep.mubr.f32.mxu0 0.0
        %2603 = vmatmul.mubr.f32.gmra.mrb[0].mxu0 %v2500
        %v2604 = vpop.f32.mrb[0].mxu0
        %v2605 = vadd.f32 0.0, %v2604
        %v2606 = vpop.f32.mrb[0].mxu0
        %v2607 = vadd.f32 0.0, %v2606
        %2608 = vmatprep.mubr.f32.mxu0 0.0
        %2609 = vmatmul.mubr.f32.gmra.mrb[0].mxu0 %v2503
        %v2610 = vpop.f32.mrb[0].mxu0
        %v2611 = vadd.f32 0.0, %v2610
        %v2612 = vpop.f32.mrb[0].mxu0
        %v2613 = vadd.f32 0.0, %v2612
        %2614 = vmatprep.mubr.f32.mxu0 0.0
        %2615 = vmatmul.mubr.f32.gmra.mrb[0].mxu0 %v2506
        %v2616 = vpop.f32.mrb[0].mxu0
        %v2617 = vadd.f32 0.0, %v2616
        %v2618 = vpop.f32.mrb[0].mxu0
        %v2619 = vadd.f32 0.0, %v2618
        %2620 = vdwg.mxu0
        %v2621 = vadd.f32 %v2444, %v2575
        %v2622 = vadd.f32 %v2445, %v2577
        %v2623 = vadd.f32 %v2446, %v2581
        %v2624 = vadd.f32 %v2447, %v2583
        %v2625 = vadd.f32 %v2448, %v2587
        %v2626 = vadd.f32 %v2449, %v2589
        %v2627 = vadd.f32 %v2450, %v2593
        %v2628 = vadd.f32 %v2451, %v2595
        %v2629 = vadd.f32 %v2452, %v2599
        %v2630 = vadd.f32 %v2453, %v2601
        %v2631 = vadd.f32 %v2454, %v2605
        %v2632 = vadd.f32 %v2455, %v2607
        %v2633 = vadd.f32 %v2456, %v2611
        %v2634 = vadd.f32 %v2457, %v2613
        %v2635 = vadd.f32 %v2458, %v2617
        %v2636 = vadd.f32 %v2459, %v2619
        %v2637 = vxor.u32 %v2621, 2147483648
        %v2638 = vxor.u32 %v2622, 2147483648
        %v2639 = vxor.u32 %v2623, 2147483648
        %v2640 = vxor.u32 %v2624, 2147483648
        %v2641 = vxor.u32 %v2625, 2147483648
        %v2642 = vxor.u32 %v2626, 2147483648
        %v2643 = vxor.u32 %v2627, 2147483648
        %v2644 = vxor.u32 %v2628, 2147483648
        %v2645 = vxor.u32 %v2629, 2147483648
        %v2646 = vxor.u32 %v2630, 2147483648
        %v2647 = vxor.u32 %v2631, 2147483648
        %v2648 = vxor.u32 %v2632, 2147483648
        %v2649 = vxor.u32 %v2633, 2147483648
        %v2650 = vxor.u32 %v2634, 2147483648
        %v2651 = vxor.u32 %v2635, 2147483648
        %v2652 = vxor.u32 %v2636, 2147483648
        %v2653 = vmul.f32 %v2637, 1.442695
        %v2654 = vpow.pop %v2653
        %v2655 = vmul.f32 %v2638, 1.442695
        %v2656 = vpow.pop %v2655
        %v2657 = vmul.f32 %v2639, 1.442695
        %v2658 = vpow.pop %v2657
        %v2659 = vmul.f32 %v2640, 1.442695
        %v2660 = vpow.pop %v2659
        %v2661 = vmul.f32 %v2641, 1.442695
        %v2662 = vpow.pop %v2661
        %v2663 = vmul.f32 %v2642, 1.442695
        %v2664 = vpow.pop %v2663
        %v2665 = vmul.f32 %v2643, 1.442695
        %v2666 = vpow.pop %v2665
        %v2667 = vmul.f32 %v2644, 1.442695
        %v2668 = vpow.pop %v2667
        %v2669 = vmul.f32 %v2645, 1.442695
        %v2670 = vpow.pop %v2669
        %v2671 = vmul.f32 %v2646, 1.442695
        %v2672 = vpow.pop %v2671
        %v2673 = vmul.f32 %v2647, 1.442695
        %v2674 = vpow.pop %v2673
        %v2675 = vmul.f32 %v2648, 1.442695
        %v2676 = vpow.pop %v2675
        %v2677 = vmul.f32 %v2649, 1.442695
        %v2678 = vpow.pop %v2677
        %v2679 = vmul.f32 %v2650, 1.442695
        %v2680 = vpow.pop %v2679
        %v2681 = vmul.f32 %v2651, 1.442695
        %v2682 = vpow.pop %v2681
        %v2683 = vmul.f32 %v2652, 1.442695
        %v2684 = vpow.pop %v2683
        %v2685 = vadd.f32 %v2654, 1.0
        %v2686 = vadd.f32 %v2656, 1.0
        %v2687 = vadd.f32 %v2658, 1.0
        %v2688 = vadd.f32 %v2660, 1.0
        %v2689 = vadd.f32 %v2662, 1.0
        %v2690 = vadd.f32 %v2664, 1.0
        %v2691 = vadd.f32 %v2666, 1.0
        %v2692 = vadd.f32 %v2668, 1.0
        %v2693 = vadd.f32 %v2670, 1.0
        %v2694 = vadd.f32 %v2672, 1.0
        %v2695 = vadd.f32 %v2674, 1.0
        %v2696 = vadd.f32 %v2676, 1.0
        %v2697 = vadd.f32 %v2678, 1.0
        %v2698 = vadd.f32 %v2680, 1.0
        %v2699 = vadd.f32 %v2682, 1.0
        %v2700 = vadd.f32 %v2684, 1.0
        %v2701 = vrcp.pop %v2685
        %v2702 = vmul.f32 1.0, %v2701
        %v2703 = vrcp.pop %v2686
        %v2704 = vmul.f32 1.0, %v2703
        %v2705 = vrcp.pop %v2687
        %v2706 = vmul.f32 1.0, %v2705
        %v2707 = vrcp.pop %v2688
        %v2708 = vmul.f32 1.0, %v2707
        %v2709 = vrcp.pop %v2689
        %v2710 = vmul.f32 1.0, %v2709
        %v2711 = vrcp.pop %v2690
        %v2712 = vmul.f32 1.0, %v2711
        %v2713 = vrcp.pop %v2691
        %v2714 = vmul.f32 1.0, %v2713
        %v2715 = vrcp.pop %v2692
        %v2716 = vmul.f32 1.0, %v2715
        %v2717 = vrcp.pop %v2693
        %v2718 = vmul.f32 1.0, %v2717
        %v2719 = vrcp.pop %v2694
        %v2720 = vmul.f32 1.0, %v2719
        %v2721 = vrcp.pop %v2695
        %v2722 = vmul.f32 1.0, %v2721
        %v2723 = vrcp.pop %v2696
        %v2724 = vmul.f32 1.0, %v2723
        %v2725 = vrcp.pop %v2697
        %v2726 = vmul.f32 1.0, %v2725
        %v2727 = vrcp.pop %v2698
        %v2728 = vmul.f32 1.0, %v2727
        %v2729 = vrcp.pop %v2699
        %v2730 = vmul.f32 1.0, %v2729
        %v2731 = vrcp.pop %v2700
        %v2732 = vmul.f32 1.0, %v2731
        %v2733 = vtanh.pop %v2622
        %v2734 = vtanh.pop %v2624
        %v2735 = vtanh.pop %v2626
        %v2736 = vtanh.pop %v2628
        %v2737 = vtanh.pop %v2630
        %v2738 = vtanh.pop %v2632
        %v2739 = vtanh.pop %v2634
        %v2740 = vtanh.pop %v2636
        %v2741 = vld [vmem:[#allocation4] sm:$0xff]
        %v2742 = vld [vmem:[#allocation4 + $0x8] sm:$0xff]
        %v2743 = vld [vmem:[#allocation4 + $0x10] sm:$0xff]
        %v2744 = vld [vmem:[#allocation4 + $0x18] sm:$0xff]
        %v2745 = vld [vmem:[#allocation4 + $0x20] sm:$0xff]
        %v2746 = vld [vmem:[#allocation4 + $0x28] sm:$0xff]
        %v2747 = vld [vmem:[#allocation4 + $0x30] sm:$0xff]
        %v2748 = vld [vmem:[#allocation4 + $0x38] sm:$0xff]
        %2757 = vrot.lane.b32.xlu0 %v2741, 64
        %v2758 = vpop.permute.xlu0 %2757
        %2759 = vrot.lane.b32.xlu0 %v2742, 64
        %v2760 = vpop.permute.xlu0 %2759
        %2761 = vrot.lane.b32.xlu0 %v2743, 64
        %v2762 = vpop.permute.xlu0 %2761
        %2763 = vrot.lane.b32.xlu0 %v2744, 64
        %v2764 = vpop.permute.xlu0 %2763
        %2765 = vrot.lane.b32.xlu0 %v2745, 64
        %v2766 = vpop.permute.xlu0 %2765
        %2767 = vrot.lane.b32.xlu0 %v2746, 64
        %v2768 = vpop.permute.xlu0 %2767
        %2769 = vrot.lane.b32.xlu0 %v2747, 64
        %v2770 = vpop.permute.xlu0 %2769
        %2771 = vrot.lane.b32.xlu0 %v2748, 64
        %v2772 = vpop.permute.xlu0 %2771
        %v2781 = vmul.f32 %v2702, %v2758
        %v2782 = vmul.f32 %v2706, %v2760
        %v2783 = vmul.f32 %v2710, %v2762
        %v2784 = vmul.f32 %v2714, %v2764
        %v2785 = vmul.f32 %v2718, %v2766
        %v2786 = vmul.f32 %v2722, %v2768
        %v2787 = vmul.f32 %v2726, %v2770
        %v2788 = vmul.f32 %v2730, %v2772
        %2797 = vrot.lane.b32.xlu0 %v2733, 64
        %v2798 = vpop.permute.xlu0 %2797
        %2799 = vrot.lane.b32.xlu0 %v2734, 64
        %v2800 = vpop.permute.xlu0 %2799
        %2801 = vrot.lane.b32.xlu0 %v2735, 64
        %v2802 = vpop.permute.xlu0 %2801
        %2803 = vrot.lane.b32.xlu0 %v2736, 64
        %v2804 = vpop.permute.xlu0 %2803
        %2805 = vrot.lane.b32.xlu0 %v2737, 64
        %v2806 = vpop.permute.xlu0 %2805
        %2807 = vrot.lane.b32.xlu0 %v2738, 64
        %v2808 = vpop.permute.xlu0 %2807
        %2809 = vrot.lane.b32.xlu0 %v2739, 64
        %v2810 = vpop.permute.xlu0 %2809
        %2811 = vrot.lane.b32.xlu0 %v2740, 64
        %v2812 = vpop.permute.xlu0 %2811
        %v2821 = vmul.f32 %v2702, %v2798
        %v2822 = vmul.f32 %v2706, %v2800
        %v2823 = vmul.f32 %v2710, %v2802
        %v2824 = vmul.f32 %v2714, %v2804
        %v2825 = vmul.f32 %v2718, %v2806
        %v2826 = vmul.f32 %v2722, %v2808
        %v2827 = vmul.f32 %v2726, %v2810
        %v2828 = vmul.f32 %v2730, %v2812
        %2837 = vrot.lane.b32.xlu0 %v2821, 64
        %v2838 = vpop.permute.xlu0 %2837
        %2839 = vrot.lane.b32.xlu0 %v2822, 64
        %v2840 = vpop.permute.xlu0 %2839
        %2841 = vrot.lane.b32.xlu0 %v2823, 64
        %v2842 = vpop.permute.xlu0 %2841
        %2843 = vrot.lane.b32.xlu0 %v2824, 64
        %v2844 = vpop.permute.xlu0 %2843
        %2845 = vrot.lane.b32.xlu0 %v2825, 64
        %v2846 = vpop.permute.xlu0 %2845
        %2847 = vrot.lane.b32.xlu0 %v2826, 64
        %v2848 = vpop.permute.xlu0 %2847
        %2849 = vrot.lane.b32.xlu0 %v2827, 64
        %v2850 = vpop.permute.xlu0 %2849
        %2851 = vrot.lane.b32.xlu0 %v2828, 64
        %v2852 = vpop.permute.xlu0 %2851
        %v2861 = vadd.f32 %v2781, %v2838
        %v2862 = vadd.f32 %v2782, %v2840
        %v2863 = vadd.f32 %v2783, %v2842
        %v2864 = vadd.f32 %v2784, %v2844
        %v2865 = vadd.f32 %v2785, %v2846
        %v2866 = vadd.f32 %v2786, %v2848
        %v2867 = vadd.f32 %v2787, %v2850
        %v2868 = vadd.f32 %v2788, %v2852
        %v2869 = vtanh.pop %v2861
        %v2870 = vtanh.pop %v2862
        %v2871 = vtanh.pop %v2863
        %v2872 = vtanh.pop %v2864
        %v2873 = vtanh.pop %v2865
        %v2874 = vtanh.pop %v2866
        %v2875 = vtanh.pop %v2867
        %v2876 = vtanh.pop %v2868
        %2885 = vrot.lane.b32.xlu0 %v2869, 64
        %v2886 = vpop.permute.xlu0 %2885
        %2887 = vrot.lane.b32.xlu0 %v2870, 64
        %v2888 = vpop.permute.xlu0 %2887
        %2889 = vrot.lane.b32.xlu0 %v2871, 64
        %v2890 = vpop.permute.xlu0 %2889
        %2891 = vrot.lane.b32.xlu0 %v2872, 64
        %v2892 = vpop.permute.xlu0 %2891
        %2893 = vrot.lane.b32.xlu0 %v2873, 64
        %v2894 = vpop.permute.xlu0 %2893
        %2895 = vrot.lane.b32.xlu0 %v2874, 64
        %v2896 = vpop.permute.xlu0 %2895
        %2897 = vrot.lane.b32.xlu0 %v2875, 64
        %v2898 = vpop.permute.xlu0 %2897
        %2899 = vrot.lane.b32.xlu0 %v2876, 64
        %v2900 = vpop.permute.xlu0 %2899
        %v2909 = vmul.f32 %v2704, %v2886
        %v2910 = vmul.f32 %v2708, %v2888
        %v2911 = vmul.f32 %v2712, %v2890
        %v2912 = vmul.f32 %v2716, %v2892
        %v2913 = vmul.f32 %v2720, %v2894
        %v2914 = vmul.f32 %v2724, %v2896
        %v2915 = vmul.f32 %v2728, %v2898
        %v2916 = vmul.f32 %v2732, %v2900
        %2925 = vrot.lane.b32.xlu0 %v2861, 64
        %v2926 = vpop.permute.xlu0 %2925
        %2927 = vrot.lane.b32.xlu0 %v2862, 64
        %v2928 = vpop.permute.xlu0 %2927
        %2929 = vrot.lane.b32.xlu0 %v2863, 64
        %v2930 = vpop.permute.xlu0 %2929
        %2931 = vrot.lane.b32.xlu0 %v2864, 64
        %v2932 = vpop.permute.xlu0 %2931
        %2933 = vrot.lane.b32.xlu0 %v2865, 64
        %v2934 = vpop.permute.xlu0 %2933
        %2935 = vrot.lane.b32.xlu0 %v2866, 64
        %v2936 = vpop.permute.xlu0 %2935
        %2937 = vrot.lane.b32.xlu0 %v2867, 64
        %v2938 = vpop.permute.xlu0 %2937
        %2939 = vrot.lane.b32.xlu0 %v2868, 64
        %v2940 = vpop.permute.xlu0 %2939
        %2949 = vst.msk [vmem:[#allocation4] sm:$0xff] %vm1313, %v2926
        %2950 = vst.msk [vmem:[#allocation4 + $0x8] sm:$0xff] %vm1313, %v2928
        %2951 = vst.msk [vmem:[#allocation4 + $0x10] sm:$0xff] %vm1313, %v2930
        %2952 = vst.msk [vmem:[#allocation4 + $0x18] sm:$0xff] %vm1313, %v2932
        %2953 = vst.msk [vmem:[#allocation4 + $0x20] sm:$0xff] %vm1313, %v2934
        %2954 = vst.msk [vmem:[#allocation4 + $0x28] sm:$0xff] %vm1313, %v2936
        %2955 = vst.msk [vmem:[#allocation4 + $0x30] sm:$0xff] %vm1313, %v2938
        %2956 = vst.msk [vmem:[#allocation4 + $0x38] sm:$0xff] %vm1313, %v2940
        %2957 = vst.msk [vmem:[#allocation3] sm:$0xff] %vm1313, %v2909
        %2958 = vst.msk [vmem:[#allocation3 + $0x8] sm:$0xff] %vm1313, %v2910
        %2959 = vst.msk [vmem:[#allocation3 + $0x10] sm:$0xff] %vm1313, %v2911
        %2960 = vst.msk [vmem:[#allocation3 + $0x18] sm:$0xff] %vm1313, %v2912
        %2961 = vst.msk [vmem:[#allocation3 + $0x20] sm:$0xff] %vm1313, %v2913
        %2962 = vst.msk [vmem:[#allocation3 + $0x28] sm:$0xff] %vm1313, %v2914
        %2963 = vst.msk [vmem:[#allocation3 + $0x30] sm:$0xff] %vm1313, %v2915
        %2964 = vst.msk [vmem:[#allocation3 + $0x38] sm:$0xff] %vm1313, %v2916
        %v2965 = vld [vmem:[#allocation5] sm:$0xff]
        %v2966 = vld [vmem:[#allocation5 + $0x8] sm:$0xff]
        %v2967 = vld [vmem:[#allocation5 + $0x10] sm:$0xff]
        %v2968 = vld [vmem:[#allocation5 + $0x18] sm:$0xff]
        %v2969 = vld [vmem:[#allocation5 + $0x20] sm:$0xff]
        %v2970 = vld [vmem:[#allocation5 + $0x28] sm:$0xff]
        %v2971 = vld [vmem:[#allocation5 + $0x30] sm:$0xff]
        %v2972 = vld [vmem:[#allocation5 + $0x38] sm:$0xff]
        %v2973 = vmax.f32 %v2909, 0.0
        %v2974 = vmax.f32 %v2910, 0.0
        %v2975 = vmax.f32 %v2911, 0.0
        %v2976 = vmax.f32 %v2912, 0.0
        %v2977 = vmax.f32 %v2913, 0.0
        %v2978 = vmax.f32 %v2914, 0.0
        %v2979 = vmax.f32 %v2915, 0.0
        %v2980 = vmax.f32 %v2916, 0.0
        %v2981 = vadd.f32 %v2965, %v2973
        %v2982 = vadd.f32 %v2966, %v2974
        %v2983 = vadd.f32 %v2967, %v2975
        %v2984 = vadd.f32 %v2968, %v2976
        %v2985 = vadd.f32 %v2969, %v2977
        %v2986 = vadd.f32 %v2970, %v2978
        %v2987 = vadd.f32 %v2971, %v2979
        %v2988 = vadd.f32 %v2972, %v2980
        %2989 = vst.msk [vmem:[#allocation5] sm:$0xff] %vm1313, %v2981
        %2990 = vst.msk [vmem:[#allocation5 + $0x8] sm:$0xff] %vm1313, %v2982
        %2991 = vst.msk [vmem:[#allocation5 + $0x10] sm:$0xff] %vm1313, %v2983
        %2992 = vst.msk [vmem:[#allocation5 + $0x18] sm:$0xff] %vm1313, %v2984
        %2993 = vst.msk [vmem:[#allocation5 + $0x20] sm:$0xff] %vm1313, %v2985
        %2994 = vst.msk [vmem:[#allocation5 + $0x28] sm:$0xff] %vm1313, %v2986
        %2995 = vst.msk [vmem:[#allocation5 + $0x30] sm:$0xff] %vm1313, %v2987
        %2996 = vst.msk [vmem:[#allocation5 + $0x38] sm:$0xff] %vm1313, %v2988
        %v2997 = vld [vmem:[#allocation2 + $0x30] sm:$0xff]
        %v2998 = vld [vmem:[#allocation2 + $0x38] sm:$0xff]
        %v2999 = vld [vmem:[#allocation2 + $0xb0] sm:$0xff]
        %v3000 = vld [vmem:[#allocation2 + $0xb8] sm:$0xff]
        %v3001 = vld [vmem:[#allocation2 + $0x130] sm:$0xff]
        %v3002 = vld [vmem:[#allocation2 + $0x138] sm:$0xff]
        %v3003 = vld [vmem:[#allocation2 + $0x1b0] sm:$0xff]
        %v3004 = vld [vmem:[#allocation2 + $0x1b8] sm:$0xff]
        %v3005 = vld [vmem:[#allocation2 + $0x230] sm:$0xff]
        %v3006 = vld [vmem:[#allocation2 + $0x238] sm:$0xff]
        %v3007 = vld [vmem:[#allocation2 + $0x2b0] sm:$0xff]
        %v3008 = vld [vmem:[#allocation2 + $0x2b8] sm:$0xff]
        %v3009 = vld [vmem:[#allocation2 + $0x330] sm:$0xff]
        %v3010 = vld [vmem:[#allocation2 + $0x338] sm:$0xff]
        %v3011 = vld [vmem:[#allocation2 + $0x3b0] sm:$0xff]
        %v3012 = vld [vmem:[#allocation2 + $0x3b8] sm:$0xff]
        %v3013 = vld [vmem:[#allocation3] sm:$0xff]
        %v3014 = vld [vmem:[#allocation3 + $0x8] sm:$0xff]
        %v3015 = vld [vmem:[#allocation3 + $0x10] sm:$0xff]
        %v3016 = vld [vmem:[#allocation3 + $0x18] sm:$0xff]
        %v3017 = vld [vmem:[#allocation3 + $0x20] sm:$0xff]
        %v3018 = vld [vmem:[#allocation3 + $0x28] sm:$0xff]
        %v3019 = vld [vmem:[#allocation3 + $0x30] sm:$0xff]
        %v3020 = vld [vmem:[#allocation3 + $0x38] sm:$0xff]
        %v3021 = vld [vmem:[#allocation9] sm:$0xff]
        %v3022 = vld [vmem:[#allocation9 + $0x8] sm:$0xff]
        %v3023 = vld [vmem:[#allocation9 + $0x10] sm:$0xff]
        %v3024 = vld [vmem:[#allocation9 + $0x18] sm:$0xff]
        %v3025 = vld [vmem:[#allocation9 + $0x20] sm:$0xff]
        %v3026 = vld [vmem:[#allocation9 + $0x28] sm:$0xff]
        %v3027 = vld [vmem:[#allocation9 + $0x30] sm:$0xff]
        %v3028 = vld [vmem:[#allocation9 + $0x38] sm:$0xff]
        %v3029 = vld [vmem:[#allocation9 + $0x40] sm:$0xff]
        %v3030 = vld [vmem:[#allocation9 + $0x48] sm:$0xff]
        %v3031 = vld [vmem:[#allocation9 + $0x50] sm:$0xff]
        %v3032 = vld [vmem:[#allocation9 + $0x58] sm:$0xff]
        %v3033 = vld [vmem:[#allocation9 + $0x60] sm:$0xff]
        %v3034 = vld [vmem:[#allocation9 + $0x68] sm:$0xff]
        %v3035 = vld [vmem:[#allocation9 + $0x70] sm:$0xff]
        %v3036 = vld [vmem:[#allocation9 + $0x78] sm:$0xff]
        %v3038 = vsel %vm1313, %v3013, 0
        %v3041 = vsel %vm1313, %v3014, 0
        %v3044 = vsel %vm1313, %v3015, 0
        %v3047 = vsel %vm1313, %v3016, 0
        %v3050 = vsel %vm1313, %v3017, 0
        %v3053 = vsel %vm1313, %v3018, 0
        %v3056 = vsel %vm1313, %v3019, 0
        %v3059 = vsel %vm1313, %v3020, 0
        %3061 = vmatprep.subr.mxu0 %v3022
        %3062 = vmatpush1.msra.mxu0 %v3021
        %3063 = vmatprep.subr.mxu0 %v3024
        %3064 = vmatpush1.msra.mxu0 %v3023
        %3065 = vmatprep.subr.mxu0 %v3026
        %3066 = vmatpush1.msra.mxu0 %v3025
        %3067 = vmatprep.subr.mxu0 %v3028
        %3068 = vmatpush1.msra.mxu0 %v3027
        %3069 = vmatprep.subr.mxu0 %v3030
        %3070 = vmatpush1.msra.mxu0 %v3029
        %3071 = vmatprep.subr.mxu0 %v3032
        %3072 = vmatpush1.msra.mxu0 %v3031
        %3073 = vmatprep.subr.mxu0 %v3034
        %3074 = vmatpush1.msra.mxu0 %v3033
        %3075 = vmatprep.subr.mxu0 %v3036
        %3076 = vmatpush1.msra.mxu0 %v3035
        %3077 = vmatprep.subr.mxu0 0.0
        %3078 = vmatpush1.msra.mxu0 0.0
        %3079 = vmatprep.subr.mxu0 0.0
        %3080 = vmatpush1.msra.mxu0 0.0
        %3081 = vmatprep.subr.mxu0 0.0
        %3082 = vmatpush1.msra.mxu0 0.0
        %3083 = vmatprep.subr.mxu0 0.0
        %3084 = vmatpush1.msra.mxu0 0.0
        %3085 = vmatprep.subr.mxu0 0.0
        %3086 = vmatpush1.msra.mxu0 0.0
        %3087 = vmatprep.subr.mxu0 0.0
        %3088 = vmatpush1.msra.mxu0 0.0
        %3089 = vmatprep.subr.mxu0 0.0
        %3090 = vmatpush1.msra.mxu0 0.0
        %3091 = vmatprep.subr.mxu0 0.0
        %3092 = vmatpush1.msra.mxu0 0.0
        %3093 = vmatprep.subr.mxu0 0.0
        %3094 = vmatpush1.msra.mxu0 0.0
        %3095 = vmatprep.subr.mxu0 0.0
        %3096 = vmatpush1.msra.mxu0 0.0
        %3097 = vmatprep.subr.mxu0 0.0
        %3098 = vmatpush1.msra.mxu0 0.0
        %3099 = vmatprep.subr.mxu0 0.0
        %3100 = vmatpush1.msra.mxu0 0.0
        %3101 = vmatprep.subr.mxu0 0.0
        %3102 = vmatpush1.msra.mxu0 0.0
        %3103 = vmatprep.subr.mxu0 0.0
        %3104 = vmatpush1.msra.mxu0 0.0
        %3105 = vmatprep.subr.mxu0 0.0
        %3106 = vmatpush1.msra.mxu0 0.0
        %3107 = vmatprep.subr.mxu0 0.0
        %3108 = vmatpush1.msra.mxu0 0.0
        %3109 = vmatprep.subr.mxu0 0.0
        %3110 = vmatpush1.msra.mxu0 0.0
        %3111 = vmatprep.subr.mxu0 0.0
        %3112 = vmatpush1.msra.mxu0 0.0
        %3113 = vmatprep.subr.mxu0 0.0
        %3114 = vmatpush1.msra.mxu0 0.0
        %3115 = vmatprep.subr.mxu0 0.0
        %3116 = vmatpush1.msra.mxu0 0.0
        %3117 = vmatprep.subr.mxu0 0.0
        %3118 = vmatpush1.msra.mxu0 0.0
        %3119 = vmatprep.subr.mxu0 0.0
        %3120 = vmatpush1.msra.mxu0 0.0
        %3121 = vmatprep.subr.mxu0 0.0
        %3122 = vmatpush1.msra.mxu0 0.0
        %3123 = vmatprep.subr.mxu0 0.0
        %3124 = vmatpush1.msra.mxu0 0.0
        %3125 = vmatprep.mubr.f32.mxu0 0.0
        %3126 = vmatmul.mubr.f32.gmra.mrb[0].mxu0 %v3038
        %v3127 = vpop.f32.mrb[0].mxu0
        %v3128 = vadd.f32 0.0, %v3127
        %v3129 = vpop.f32.mrb[0].mxu0
        %v3130 = vadd.f32 0.0, %v3129
        %3131 = vmatprep.mubr.f32.mxu0 0.0
        %3132 = vmatmul.mubr.f32.gmra.mrb[0].mxu0 %v3041
        %v3133 = vpop.f32.mrb[0].mxu0
        %v3134 = vadd.f32 0.0, %v3133
        %v3135 = vpop.f32.mrb[0].mxu0
        %v3136 = vadd.f32 0.0, %v3135
        %3137 = vmatprep.mubr.f32.mxu0 0.0
        %3138 = vmatmul.mubr.f32.gmra.mrb[0].mxu0 %v3044
        %v3139 = vpop.f32.mrb[0].mxu0
        %v3140 = vadd.f32 0.0, %v3139
        %v3141 = vpop.f32.mrb[0].mxu0
        %v3142 = vadd.f32 0.0, %v3141
        %3143 = vmatprep.mubr.f32.mxu0 0.0
        %3144 = vmatmul.mubr.f32.gmra.mrb[0].mxu0 %v3047
        %v3145 = vpop.f32.mrb[0].mxu0
        %v3146 = vadd.f32 0.0, %v3145
        %v3147 = vpop.f32.mrb[0].mxu0
        %v3148 = vadd.f32 0.0, %v3147
        %3149 = vmatprep.mubr.f32.mxu0 0.0
        %3150 = vmatmul.mubr.f32.gmra.mrb[0].mxu0 %v3050
        %v3151 = vpop.f32.mrb[0].mxu0
        %v3152 = vadd.f32 0.0, %v3151
        %v3153 = vpop.f32.mrb[0].mxu0
        %v3154 = vadd.f32 0.0, %v3153
        %3155 = vmatprep.mubr.f32.mxu0 0.0
        %3156 = vmatmul.mubr.f32.gmra.mrb[0].mxu0 %v3053
        %v3157 = vpop.f32.mrb[0].mxu0
        %v3158 = vadd.f32 0.0, %v3157
        %v3159 = vpop.f32.mrb[0].mxu0
        %v3160 = vadd.f32 0.0, %v3159
        %3161 = vmatprep.mubr.f32.mxu0 0.0
        %3162 = vmatmul.mubr.f32.gmra.mrb[0].mxu0 %v3056
        %v3163 = vpop.f32.mrb[0].mxu0
        %v3164 = vadd.f32 0.0, %v3163
        %v3165 = vpop.f32.mrb[0].mxu0
        %v3166 = vadd.f32 0.0, %v3165
        %3167 = vmatprep.mubr.f32.mxu0 0.0
        %3168 = vmatmul.mubr.f32.gmra.mrb[0].mxu0 %v3059
        %v3169 = vpop.f32.mrb[0].mxu0
        %v3170 = vadd.f32 0.0, %v3169
        %v3171 = vpop.f32.mrb[0].mxu0
        %v3172 = vadd.f32 0.0, %v3171
        %3173 = vdwg.mxu0
        %v3174 = vadd.f32 %v2997, %v3128
        %v3175 = vadd.f32 %v2998, %v3130
        %v3176 = vadd.f32 %v2999, %v3134
        %v3177 = vadd.f32 %v3000, %v3136
        %v3178 = vadd.f32 %v3001, %v3140
        %v3179 = vadd.f32 %v3002, %v3142
        %v3180 = vadd.f32 %v3003, %v3146
        %v3181 = vadd.f32 %v3004, %v3148
        %v3182 = vadd.f32 %v3005, %v3152
        %v3183 = vadd.f32 %v3006, %v3154
        %v3184 = vadd.f32 %v3007, %v3158
        %v3185 = vadd.f32 %v3008, %v3160
        %v3186 = vadd.f32 %v3009, %v3164
        %v3187 = vadd.f32 %v3010, %v3166
        %v3188 = vadd.f32 %v3011, %v3170
        %v3189 = vadd.f32 %v3012, %v3172
        %v3190 = vxor.u32 %v3174, 2147483648
        %v3191 = vxor.u32 %v3175, 2147483648
        %v3192 = vxor.u32 %v3176, 2147483648
        %v3193 = vxor.u32 %v3177, 2147483648
        %v3194 = vxor.u32 %v3178, 2147483648
        %v3195 = vxor.u32 %v3179, 2147483648
        %v3196 = vxor.u32 %v3180, 2147483648
        %v3197 = vxor.u32 %v3181, 2147483648
        %v3198 = vxor.u32 %v3182, 2147483648
        %v3199 = vxor.u32 %v3183, 2147483648
        %v3200 = vxor.u32 %v3184, 2147483648
        %v3201 = vxor.u32 %v3185, 2147483648
        %v3202 = vxor.u32 %v3186, 2147483648
        %v3203 = vxor.u32 %v3187, 2147483648
        %v3204 = vxor.u32 %v3188, 2147483648
        %v3205 = vxor.u32 %v3189, 2147483648
        %v3206 = vmul.f32 %v3190, 1.442695
        %v3207 = vpow.pop %v3206
        %v3208 = vmul.f32 %v3191, 1.442695
        %v3209 = vpow.pop %v3208
        %v3210 = vmul.f32 %v3192, 1.442695
        %v3211 = vpow.pop %v3210
        %v3212 = vmul.f32 %v3193, 1.442695
        %v3213 = vpow.pop %v3212
        %v3214 = vmul.f32 %v3194, 1.442695
        %v3215 = vpow.pop %v3214
        %v3216 = vmul.f32 %v3195, 1.442695
        %v3217 = vpow.pop %v3216
        %v3218 = vmul.f32 %v3196, 1.442695
        %v3219 = vpow.pop %v3218
        %v3220 = vmul.f32 %v3197, 1.442695
        %v3221 = vpow.pop %v3220
        %v3222 = vmul.f32 %v3198, 1.442695
        %v3223 = vpow.pop %v3222
        %v3224 = vmul.f32 %v3199, 1.442695
        %v3225 = vpow.pop %v3224
        %v3226 = vmul.f32 %v3200, 1.442695
        %v3227 = vpow.pop %v3226
        %v3228 = vmul.f32 %v3201, 1.442695
        %v3229 = vpow.pop %v3228
        %v3230 = vmul.f32 %v3202, 1.442695
        %v3231 = vpow.pop %v3230
        %v3232 = vmul.f32 %v3203, 1.442695
        %v3233 = vpow.pop %v3232
        %v3234 = vmul.f32 %v3204, 1.442695
        %v3235 = vpow.pop %v3234
        %v3236 = vmul.f32 %v3205, 1.442695
        %v3237 = vpow.pop %v3236
        %v3238 = vadd.f32 %v3207, 1.0
        %v3239 = vadd.f32 %v3209, 1.0
        %v3240 = vadd.f32 %v3211, 1.0
        %v3241 = vadd.f32 %v3213, 1.0
        %v3242 = vadd.f32 %v3215, 1.0
        %v3243 = vadd.f32 %v3217, 1.0
        %v3244 = vadd.f32 %v3219, 1.0
        %v3245 = vadd.f32 %v3221, 1.0
        %v3246 = vadd.f32 %v3223, 1.0
        %v3247 = vadd.f32 %v3225, 1.0
        %v3248 = vadd.f32 %v3227, 1.0
        %v3249 = vadd.f32 %v3229, 1.0
        %v3250 = vadd.f32 %v3231, 1.0
        %v3251 = vadd.f32 %v3233, 1.0
        %v3252 = vadd.f32 %v3235, 1.0
        %v3253 = vadd.f32 %v3237, 1.0
        %v3254 = vrcp.pop %v3238
        %v3255 = vmul.f32 1.0, %v3254
        %v3256 = vrcp.pop %v3239
        %v3257 = vmul.f32 1.0, %v3256
        %v3258 = vrcp.pop %v3240
        %v3259 = vmul.f32 1.0, %v3258
        %v3260 = vrcp.pop %v3241
        %v3261 = vmul.f32 1.0, %v3260
        %v3262 = vrcp.pop %v3242
        %v3263 = vmul.f32 1.0, %v3262
        %v3264 = vrcp.pop %v3243
        %v3265 = vmul.f32 1.0, %v3264
        %v3266 = vrcp.pop %v3244
        %v3267 = vmul.f32 1.0, %v3266
        %v3268 = vrcp.pop %v3245
        %v3269 = vmul.f32 1.0, %v3268
        %v3270 = vrcp.pop %v3246
        %v3271 = vmul.f32 1.0, %v3270
        %v3272 = vrcp.pop %v3247
        %v3273 = vmul.f32 1.0, %v3272
        %v3274 = vrcp.pop %v3248
        %v3275 = vmul.f32 1.0, %v3274
        %v3276 = vrcp.pop %v3249
        %v3277 = vmul.f32 1.0, %v3276
        %v3278 = vrcp.pop %v3250
        %v3279 = vmul.f32 1.0, %v3278
        %v3280 = vrcp.pop %v3251
        %v3281 = vmul.f32 1.0, %v3280
        %v3282 = vrcp.pop %v3252
        %v3283 = vmul.f32 1.0, %v3282
        %v3284 = vrcp.pop %v3253
        %v3285 = vmul.f32 1.0, %v3284
        %v3286 = vtanh.pop %v3175
        %v3287 = vtanh.pop %v3177
        %v3288 = vtanh.pop %v3179
        %v3289 = vtanh.pop %v3181
        %v3290 = vtanh.pop %v3183
        %v3291 = vtanh.pop %v3185
        %v3292 = vtanh.pop %v3187
        %v3293 = vtanh.pop %v3189
        %v3294 = vld [vmem:[#allocation4] sm:$0xff]
        %v3295 = vld [vmem:[#allocation4 + $0x8] sm:$0xff]
        %v3296 = vld [vmem:[#allocation4 + $0x10] sm:$0xff]
        %v3297 = vld [vmem:[#allocation4 + $0x18] sm:$0xff]
        %v3298 = vld [vmem:[#allocation4 + $0x20] sm:$0xff]
        %v3299 = vld [vmem:[#allocation4 + $0x28] sm:$0xff]
        %v3300 = vld [vmem:[#allocation4 + $0x30] sm:$0xff]
        %v3301 = vld [vmem:[#allocation4 + $0x38] sm:$0xff]
        %3310 = vrot.lane.b32.xlu0 %v3294, 64
        %v3311 = vpop.permute.xlu0 %3310
        %3312 = vrot.lane.b32.xlu0 %v3295, 64
        %v3313 = vpop.permute.xlu0 %3312
        %3314 = vrot.lane.b32.xlu0 %v3296, 64
        %v3315 = vpop.permute.xlu0 %3314
        %3316 = vrot.lane.b32.xlu0 %v3297, 64
        %v3317 = vpop.permute.xlu0 %3316
        %3318 = vrot.lane.b32.xlu0 %v3298, 64
        %v3319 = vpop.permute.xlu0 %3318
        %3320 = vrot.lane.b32.xlu0 %v3299, 64
        %v3321 = vpop.permute.xlu0 %3320
        %3322 = vrot.lane.b32.xlu0 %v3300, 64
        %v3323 = vpop.permute.xlu0 %3322
        %3324 = vrot.lane.b32.xlu0 %v3301, 64
        %v3325 = vpop.permute.xlu0 %3324
        %v3334 = vmul.f32 %v3255, %v3311
        %v3335 = vmul.f32 %v3259, %v3313
        %v3336 = vmul.f32 %v3263, %v3315
        %v3337 = vmul.f32 %v3267, %v3317
        %v3338 = vmul.f32 %v3271, %v3319
        %v3339 = vmul.f32 %v3275, %v3321
        %v3340 = vmul.f32 %v3279, %v3323
        %v3341 = vmul.f32 %v3283, %v3325
        %3350 = vrot.lane.b32.xlu0 %v3286, 64
        %v3351 = vpop.permute.xlu0 %3350
        %3352 = vrot.lane.b32.xlu0 %v3287, 64
        %v3353 = vpop.permute.xlu0 %3352
        %3354 = vrot.lane.b32.xlu0 %v3288, 64
        %v3355 = vpop.permute.xlu0 %3354
        %3356 = vrot.lane.b32.xlu0 %v3289, 64
        %v3357 = vpop.permute.xlu0 %3356
        %3358 = vrot.lane.b32.xlu0 %v3290, 64
        %v3359 = vpop.permute.xlu0 %3358
        %3360 = vrot.lane.b32.xlu0 %v3291, 64
        %v3361 = vpop.permute.xlu0 %3360
        %3362 = vrot.lane.b32.xlu0 %v3292, 64
        %v3363 = vpop.permute.xlu0 %3362
        %3364 = vrot.lane.b32.xlu0 %v3293, 64
        %v3365 = vpop.permute.xlu0 %3364
        %v3374 = vmul.f32 %v3255, %v3351
        %v3375 = vmul.f32 %v3259, %v3353
        %v3376 = vmul.f32 %v3263, %v3355
        %v3377 = vmul.f32 %v3267, %v3357
        %v3378 = vmul.f32 %v3271, %v3359
        %v3379 = vmul.f32 %v3275, %v3361
        %v3380 = vmul.f32 %v3279, %v3363
        %v3381 = vmul.f32 %v3283, %v3365
        %3390 = vrot.lane.b32.xlu0 %v3374, 64
        %v3391 = vpop.permute.xlu0 %3390
        %3392 = vrot.lane.b32.xlu0 %v3375, 64
        %v3393 = vpop.permute.xlu0 %3392
        %3394 = vrot.lane.b32.xlu0 %v3376, 64
        %v3395 = vpop.permute.xlu0 %3394
        %3396 = vrot.lane.b32.xlu0 %v3377, 64
        %v3397 = vpop.permute.xlu0 %3396
        %3398 = vrot.lane.b32.xlu0 %v3378, 64
        %v3399 = vpop.permute.xlu0 %3398
        %3400 = vrot.lane.b32.xlu0 %v3379, 64
        %v3401 = vpop.permute.xlu0 %3400
        %3402 = vrot.lane.b32.xlu0 %v3380, 64
        %v3403 = vpop.permute.xlu0 %3402
        %3404 = vrot.lane.b32.xlu0 %v3381, 64
        %v3405 = vpop.permute.xlu0 %3404
        %v3414 = vadd.f32 %v3334, %v3391
        %v3415 = vadd.f32 %v3335, %v3393
        %v3416 = vadd.f32 %v3336, %v3395
        %v3417 = vadd.f32 %v3337, %v3397
        %v3418 = vadd.f32 %v3338, %v3399
        %v3419 = vadd.f32 %v3339, %v3401
        %v3420 = vadd.f32 %v3340, %v3403
        %v3421 = vadd.f32 %v3341, %v3405
        %v3422 = vtanh.pop %v3414
        %v3423 = vtanh.pop %v3415
        %v3424 = vtanh.pop %v3416
        %v3425 = vtanh.pop %v3417
        %v3426 = vtanh.pop %v3418
        %v3427 = vtanh.pop %v3419
        %v3428 = vtanh.pop %v3420
        %v3429 = vtanh.pop %v3421
        %3438 = vrot.lane.b32.xlu0 %v3422, 64
        %v3439 = vpop.permute.xlu0 %3438
        %3440 = vrot.lane.b32.xlu0 %v3423, 64
        %v3441 = vpop.permute.xlu0 %3440
        %3442 = vrot.lane.b32.xlu0 %v3424, 64
        %v3443 = vpop.permute.xlu0 %3442
        %3444 = vrot.lane.b32.xlu0 %v3425, 64
        %v3445 = vpop.permute.xlu0 %3444
        %3446 = vrot.lane.b32.xlu0 %v3426, 64
        %v3447 = vpop.permute.xlu0 %3446
        %3448 = vrot.lane.b32.xlu0 %v3427, 64
        %v3449 = vpop.permute.xlu0 %3448
        %3450 = vrot.lane.b32.xlu0 %v3428, 64
        %v3451 = vpop.permute.xlu0 %3450
        %3452 = vrot.lane.b32.xlu0 %v3429, 64
        %v3453 = vpop.permute.xlu0 %3452
        %v3462 = vmul.f32 %v3257, %v3439
        %v3463 = vmul.f32 %v3261, %v3441
        %v3464 = vmul.f32 %v3265, %v3443
        %v3465 = vmul.f32 %v3269, %v3445
        %v3466 = vmul.f32 %v3273, %v3447
        %v3467 = vmul.f32 %v3277, %v3449
        %v3468 = vmul.f32 %v3281, %v3451
        %v3469 = vmul.f32 %v3285, %v3453
        %3478 = vrot.lane.b32.xlu0 %v3414, 64
        %v3479 = vpop.permute.xlu0 %3478
        %3480 = vrot.lane.b32.xlu0 %v3415, 64
        %v3481 = vpop.permute.xlu0 %3480
        %3482 = vrot.lane.b32.xlu0 %v3416, 64
        %v3483 = vpop.permute.xlu0 %3482
        %3484 = vrot.lane.b32.xlu0 %v3417, 64
        %v3485 = vpop.permute.xlu0 %3484
        %3486 = vrot.lane.b32.xlu0 %v3418, 64
        %v3487 = vpop.permute.xlu0 %3486
        %3488 = vrot.lane.b32.xlu0 %v3419, 64
        %v3489 = vpop.permute.xlu0 %3488
        %3490 = vrot.lane.b32.xlu0 %v3420, 64
        %v3491 = vpop.permute.xlu0 %3490
        %3492 = vrot.lane.b32.xlu0 %v3421, 64
        %v3493 = vpop.permute.xlu0 %3492
        %3502 = vst.msk [vmem:[#allocation4] sm:$0xff] %vm1313, %v3479
        %3503 = vst.msk [vmem:[#allocation4 + $0x8] sm:$0xff] %vm1313, %v3481
        %3504 = vst.msk [vmem:[#allocation4 + $0x10] sm:$0xff] %vm1313, %v3483
        %3505 = vst.msk [vmem:[#allocation4 + $0x18] sm:$0xff] %vm1313, %v3485
        %3506 = vst.msk [vmem:[#allocation4 + $0x20] sm:$0xff] %vm1313, %v3487
        %3507 = vst.msk [vmem:[#allocation4 + $0x28] sm:$0xff] %vm1313, %v3489
        %3508 = vst.msk [vmem:[#allocation4 + $0x30] sm:$0xff] %vm1313, %v3491
        %3509 = vst.msk [vmem:[#allocation4 + $0x38] sm:$0xff] %vm1313, %v3493
        %3510 = vst.msk [vmem:[#allocation3] sm:$0xff] %vm1313, %v3462
        %3511 = vst.msk [vmem:[#allocation3 + $0x8] sm:$0xff] %vm1313, %v3463
        %3512 = vst.msk [vmem:[#allocation3 + $0x10] sm:$0xff] %vm1313, %v3464
        %3513 = vst.msk [vmem:[#allocation3 + $0x18] sm:$0xff] %vm1313, %v3465
        %3514 = vst.msk [vmem:[#allocation3 + $0x20] sm:$0xff] %vm1313, %v3466
        %3515 = vst.msk [vmem:[#allocation3 + $0x28] sm:$0xff] %vm1313, %v3467
        %3516 = vst.msk [vmem:[#allocation3 + $0x30] sm:$0xff] %vm1313, %v3468
        %3517 = vst.msk [vmem:[#allocation3 + $0x38] sm:$0xff] %vm1313, %v3469
        %v3518 = vld [vmem:[#allocation5] sm:$0xff]
        %v3519 = vld [vmem:[#allocation5 + $0x8] sm:$0xff]
        %v3520 = vld [vmem:[#allocation5 + $0x10] sm:$0xff]
        %v3521 = vld [vmem:[#allocation5 + $0x18] sm:$0xff]
        %v3522 = vld [vmem:[#allocation5 + $0x20] sm:$0xff]
        %v3523 = vld [vmem:[#allocation5 + $0x28] sm:$0xff]
        %v3524 = vld [vmem:[#allocation5 + $0x30] sm:$0xff]
        %v3525 = vld [vmem:[#allocation5 + $0x38] sm:$0xff]
        %v3526 = vmax.f32 %v3462, 0.0
        %v3527 = vmax.f32 %v3463, 0.0
        %v3528 = vmax.f32 %v3464, 0.0
        %v3529 = vmax.f32 %v3465, 0.0
        %v3530 = vmax.f32 %v3466, 0.0
        %v3531 = vmax.f32 %v3467, 0.0
        %v3532 = vmax.f32 %v3468, 0.0
        %v3533 = vmax.f32 %v3469, 0.0
        %v3534 = vadd.f32 %v3518, %v3526
        %v3535 = vadd.f32 %v3519, %v3527
        %v3536 = vadd.f32 %v3520, %v3528
        %v3537 = vadd.f32 %v3521, %v3529
        %v3538 = vadd.f32 %v3522, %v3530
        %v3539 = vadd.f32 %v3523, %v3531
        %v3540 = vadd.f32 %v3524, %v3532
        %v3541 = vadd.f32 %v3525, %v3533
        %3542 = vst.msk [vmem:[#allocation5] sm:$0xff] %vm1313, %v3534
        %3543 = vst.msk [vmem:[#allocation5 + $0x8] sm:$0xff] %vm1313, %v3535
        %3544 = vst.msk [vmem:[#allocation5 + $0x10] sm:$0xff] %vm1313, %v3536
        %3545 = vst.msk [vmem:[#allocation5 + $0x18] sm:$0xff] %vm1313, %v3537
        %3546 = vst.msk [vmem:[#allocation5 + $0x20] sm:$0xff] %vm1313, %v3538
        %3547 = vst.msk [vmem:[#allocation5 + $0x28] sm:$0xff] %vm1313, %v3539
        %3548 = vst.msk [vmem:[#allocation5 + $0x30] sm:$0xff] %vm1313, %v3540
        %3549 = vst.msk [vmem:[#allocation5 + $0x38] sm:$0xff] %vm1313, %v3541
        %v3550 = vld [vmem:[#allocation2 + $0x40] sm:$0xff]
        %v3551 = vld [vmem:[#allocation2 + $0x48] sm:$0xff]
        %v3552 = vld [vmem:[#allocation2 + $0xc0] sm:$0xff]
        %v3553 = vld [vmem:[#allocation2 + $0xc8] sm:$0xff]
        %v3554 = vld [vmem:[#allocation2 + $0x140] sm:$0xff]
        %v3555 = vld [vmem:[#allocation2 + $0x148] sm:$0xff]
        %v3556 = vld [vmem:[#allocation2 + $0x1c0] sm:$0xff]
        %v3557 = vld [vmem:[#allocation2 + $0x1c8] sm:$0xff]
        %v3558 = vld [vmem:[#allocation2 + $0x240] sm:$0xff]
        %v3559 = vld [vmem:[#allocation2 + $0x248] sm:$0xff]
        %v3560 = vld [vmem:[#allocation2 + $0x2c0] sm:$0xff]
        %v3561 = vld [vmem:[#allocation2 + $0x2c8] sm:$0xff]
        %v3562 = vld [vmem:[#allocation2 + $0x340] sm:$0xff]
        %v3563 = vld [vmem:[#allocation2 + $0x348] sm:$0xff]
        %v3564 = vld [vmem:[#allocation2 + $0x3c0] sm:$0xff]
        %v3565 = vld [vmem:[#allocation2 + $0x3c8] sm:$0xff]
        %v3566 = vld [vmem:[#allocation3] sm:$0xff]
        %v3567 = vld [vmem:[#allocation3 + $0x8] sm:$0xff]
        %v3568 = vld [vmem:[#allocation3 + $0x10] sm:$0xff]
        %v3569 = vld [vmem:[#allocation3 + $0x18] sm:$0xff]
        %v3570 = vld [vmem:[#allocation3 + $0x20] sm:$0xff]
        %v3571 = vld [vmem:[#allocation3 + $0x28] sm:$0xff]
        %v3572 = vld [vmem:[#allocation3 + $0x30] sm:$0xff]
        %v3573 = vld [vmem:[#allocation3 + $0x38] sm:$0xff]
        %v3574 = vld [vmem:[#allocation9] sm:$0xff]
        %v3575 = vld [vmem:[#allocation9 + $0x8] sm:$0xff]
        %v3576 = vld [vmem:[#allocation9 + $0x10] sm:$0xff]
        %v3577 = vld [vmem:[#allocation9 + $0x18] sm:$0xff]
        %v3578 = vld [vmem:[#allocation9 + $0x20] sm:$0xff]
        %v3579 = vld [vmem:[#allocation9 + $0x28] sm:$0xff]
        %v3580 = vld [vmem:[#allocation9 + $0x30] sm:$0xff]
        %v3581 = vld [vmem:[#allocation9 + $0x38] sm:$0xff]
        %v3582 = vld [vmem:[#allocation9 + $0x40] sm:$0xff]
        %v3583 = vld [vmem:[#allocation9 + $0x48] sm:$0xff]
        %v3584 = vld [vmem:[#allocation9 + $0x50] sm:$0xff]
        %v3585 = vld [vmem:[#allocation9 + $0x58] sm:$0xff]
        %v3586 = vld [vmem:[#allocation9 + $0x60] sm:$0xff]
        %v3587 = vld [vmem:[#allocation9 + $0x68] sm:$0xff]
        %v3588 = vld [vmem:[#allocation9 + $0x70] sm:$0xff]
        %v3589 = vld [vmem:[#allocation9 + $0x78] sm:$0xff]
        %v3591 = vsel %vm1313, %v3566, 0
        %v3594 = vsel %vm1313, %v3567, 0
        %v3597 = vsel %vm1313, %v3568, 0
        %v3600 = vsel %vm1313, %v3569, 0
        %v3603 = vsel %vm1313, %v3570, 0
        %v3606 = vsel %vm1313, %v3571, 0
        %v3609 = vsel %vm1313, %v3572, 0
        %v3612 = vsel %vm1313, %v3573, 0
        %3614 = vmatprep.subr.mxu0 %v3575
        %3615 = vmatpush1.msra.mxu0 %v3574
        %3616 = vmatprep.subr.mxu0 %v3577
        %3617 = vmatpush1.msra.mxu0 %v3576
        %3618 = vmatprep.subr.mxu0 %v3579
        %3619 = vmatpush1.msra.mxu0 %v3578
        %3620 = vmatprep.subr.mxu0 %v3581
        %3621 = vmatpush1.msra.mxu0 %v3580
        %3622 = vmatprep.subr.mxu0 %v3583
        %3623 = vmatpush1.msra.mxu0 %v3582
        %3624 = vmatprep.subr.mxu0 %v3585
        %3625 = vmatpush1.msra.mxu0 %v3584
        %3626 = vmatprep.subr.mxu0 %v3587
        %3627 = vmatpush1.msra.mxu0 %v3586
        %3628 = vmatprep.subr.mxu0 %v3589
        %3629 = vmatpush1.msra.mxu0 %v3588
        %3630 = vmatprep.subr.mxu0 0.0
        %3631 = vmatpush1.msra.mxu0 0.0
        %3632 = vmatprep.subr.mxu0 0.0
        %3633 = vmatpush1.msra.mxu0 0.0
        %3634 = vmatprep.subr.mxu0 0.0
        %3635 = vmatpush1.msra.mxu0 0.0
        %3636 = vmatprep.subr.mxu0 0.0
        %3637 = vmatpush1.msra.mxu0 0.0
        %3638 = vmatprep.subr.mxu0 0.0
        %3639 = vmatpush1.msra.mxu0 0.0
        %3640 = vmatprep.subr.mxu0 0.0
        %3641 = vmatpush1.msra.mxu0 0.0
        %3642 = vmatprep.subr.mxu0 0.0
        %3643 = vmatpush1.msra.mxu0 0.0
        %3644 = vmatprep.subr.mxu0 0.0
        %3645 = vmatpush1.msra.mxu0 0.0
        %3646 = vmatprep.subr.mxu0 0.0
        %3647 = vmatpush1.msra.mxu0 0.0
        %3648 = vmatprep.subr.mxu0 0.0
        %3649 = vmatpush1.msra.mxu0 0.0
        %3650 = vmatprep.subr.mxu0 0.0
        %3651 = vmatpush1.msra.mxu0 0.0
        %3652 = vmatprep.subr.mxu0 0.0
        %3653 = vmatpush1.msra.mxu0 0.0
        %3654 = vmatprep.subr.mxu0 0.0
        %3655 = vmatpush1.msra.mxu0 0.0
        %3656 = vmatprep.subr.mxu0 0.0
        %3657 = vmatpush1.msra.mxu0 0.0
        %3658 = vmatprep.subr.mxu0 0.0
        %3659 = vmatpush1.msra.mxu0 0.0
        %3660 = vmatprep.subr.mxu0 0.0
        %3661 = vmatpush1.msra.mxu0 0.0
        %3662 = vmatprep.subr.mxu0 0.0
        %3663 = vmatpush1.msra.mxu0 0.0
        %3664 = vmatprep.subr.mxu0 0.0
        %3665 = vmatpush1.msra.mxu0 0.0
        %3666 = vmatprep.subr.mxu0 0.0
        %3667 = vmatpush1.msra.mxu0 0.0
        %3668 = vmatprep.subr.mxu0 0.0
        %3669 = vmatpush1.msra.mxu0 0.0
        %3670 = vmatprep.subr.mxu0 0.0
        %3671 = vmatpush1.msra.mxu0 0.0
        %3672 = vmatprep.subr.mxu0 0.0
        %3673 = vmatpush1.msra.mxu0 0.0
        %3674 = vmatprep.subr.mxu0 0.0
        %3675 = vmatpush1.msra.mxu0 0.0
        %3676 = vmatprep.subr.mxu0 0.0
        %3677 = vmatpush1.msra.mxu0 0.0
        %3678 = vmatprep.mubr.f32.mxu0 0.0
        %3679 = vmatmul.mubr.f32.gmra.mrb[0].mxu0 %v3591
        %v3680 = vpop.f32.mrb[0].mxu0
        %v3681 = vadd.f32 0.0, %v3680
        %v3682 = vpop.f32.mrb[0].mxu0
        %v3683 = vadd.f32 0.0, %v3682
        %3684 = vmatprep.mubr.f32.mxu0 0.0
        %3685 = vmatmul.mubr.f32.gmra.mrb[0].mxu0 %v3594
        %v3686 = vpop.f32.mrb[0].mxu0
        %v3687 = vadd.f32 0.0, %v3686
        %v3688 = vpop.f32.mrb[0].mxu0
        %v3689 = vadd.f32 0.0, %v3688
        %3690 = vmatprep.mubr.f32.mxu0 0.0
        %3691 = vmatmul.mubr.f32.gmra.mrb[0].mxu0 %v3597
        %v3692 = vpop.f32.mrb[0].mxu0
        %v3693 = vadd.f32 0.0, %v3692
        %v3694 = vpop.f32.mrb[0].mxu0
        %v3695 = vadd.f32 0.0, %v3694
        %3696 = vmatprep.mubr.f32.mxu0 0.0
        %3697 = vmatmul.mubr.f32.gmra.mrb[0].mxu0 %v3600
        %v3698 = vpop.f32.mrb[0].mxu0
        %v3699 = vadd.f32 0.0, %v3698
        %v3700 = vpop.f32.mrb[0].mxu0
        %v3701 = vadd.f32 0.0, %v3700
        %3702 = vmatprep.mubr.f32.mxu0 0.0
        %3703 = vmatmul.mubr.f32.gmra.mrb[0].mxu0 %v3603
        %v3704 = vpop.f32.mrb[0].mxu0
        %v3705 = vadd.f32 0.0, %v3704
        %v3706 = vpop.f32.mrb[0].mxu0
        %v3707 = vadd.f32 0.0, %v3706
        %3708 = vmatprep.mubr.f32.mxu0 0.0
        %3709 = vmatmul.mubr.f32.gmra.mrb[0].mxu0 %v3606
        %v3710 = vpop.f32.mrb[0].mxu0
        %v3711 = vadd.f32 0.0, %v3710
        %v3712 = vpop.f32.mrb[0].mxu0
        %v3713 = vadd.f32 0.0, %v3712
        %3714 = vmatprep.mubr.f32.mxu0 0.0
        %3715 = vmatmul.mubr.f32.gmra.mrb[0].mxu0 %v3609
        %v3716 = vpop.f32.mrb[0].mxu0
        %v3717 = vadd.f32 0.0, %v3716
        %v3718 = vpop.f32.mrb[0].mxu0
        %v3719 = vadd.f32 0.0, %v3718
        %3720 = vmatprep.mubr.f32.mxu0 0.0
        %3721 = vmatmul.mubr.f32.gmra.mrb[0].mxu0 %v3612
        %v3722 = vpop.f32.mrb[0].mxu0
        %v3723 = vadd.f32 0.0, %v3722
        %v3724 = vpop.f32.mrb[0].mxu0
        %v3725 = vadd.f32 0.0, %v3724
        %3726 = vdwg.mxu0
        %v3727 = vadd.f32 %v3550, %v3681
        %v3728 = vadd.f32 %v3551, %v3683
        %v3729 = vadd.f32 %v3552, %v3687
        %v3730 = vadd.f32 %v3553, %v3689
        %v3731 = vadd.f32 %v3554, %v3693
        %v3732 = vadd.f32 %v3555, %v3695
        %v3733 = vadd.f32 %v3556, %v3699
        %v3734 = vadd.f32 %v3557, %v3701
        %v3735 = vadd.f32 %v3558, %v3705
        %v3736 = vadd.f32 %v3559, %v3707
        %v3737 = vadd.f32 %v3560, %v3711
        %v3738 = vadd.f32 %v3561, %v3713
        %v3739 = vadd.f32 %v3562, %v3717
        %v3740 = vadd.f32 %v3563, %v3719
        %v3741 = vadd.f32 %v3564, %v3723
        %v3742 = vadd.f32 %v3565, %v3725
        %v3743 = vxor.u32 %v3727, 2147483648
        %v3744 = vxor.u32 %v3728, 2147483648
        %v3745 = vxor.u32 %v3729, 2147483648
        %v3746 = vxor.u32 %v3730, 2147483648
        %v3747 = vxor.u32 %v3731, 2147483648
        %v3748 = vxor.u32 %v3732, 2147483648
        %v3749 = vxor.u32 %v3733, 2147483648
        %v3750 = vxor.u32 %v3734, 2147483648
        %v3751 = vxor.u32 %v3735, 2147483648
        %v3752 = vxor.u32 %v3736, 2147483648
        %v3753 = vxor.u32 %v3737, 2147483648
        %v3754 = vxor.u32 %v3738, 2147483648
        %v3755 = vxor.u32 %v3739, 2147483648
        %v3756 = vxor.u32 %v3740, 2147483648
        %v3757 = vxor.u32 %v3741, 2147483648
        %v3758 = vxor.u32 %v3742, 2147483648
        %v3759 = vmul.f32 %v3743, 1.442695
        %v3760 = vpow.pop %v3759
        %v3761 = vmul.f32 %v3744, 1.442695
        %v3762 = vpow.pop %v3761
        %v3763 = vmul.f32 %v3745, 1.442695
        %v3764 = vpow.pop %v3763
        %v3765 = vmul.f32 %v3746, 1.442695
        %v3766 = vpow.pop %v3765
        %v3767 = vmul.f32 %v3747, 1.442695
        %v3768 = vpow.pop %v3767
        %v3769 = vmul.f32 %v3748, 1.442695
        %v3770 = vpow.pop %v3769
        %v3771 = vmul.f32 %v3749, 1.442695
        %v3772 = vpow.pop %v3771
        %v3773 = vmul.f32 %v3750, 1.442695
        %v3774 = vpow.pop %v3773
        %v3775 = vmul.f32 %v3751, 1.442695
        %v3776 = vpow.pop %v3775
        %v3777 = vmul.f32 %v3752, 1.442695
        %v3778 = vpow.pop %v3777
        %v3779 = vmul.f32 %v3753, 1.442695
        %v3780 = vpow.pop %v3779
        %v3781 = vmul.f32 %v3754, 1.442695
        %v3782 = vpow.pop %v3781
        %v3783 = vmul.f32 %v3755, 1.442695
        %v3784 = vpow.pop %v3783
        %v3785 = vmul.f32 %v3756, 1.442695
        %v3786 = vpow.pop %v3785
        %v3787 = vmul.f32 %v3757, 1.442695
        %v3788 = vpow.pop %v3787
        %v3789 = vmul.f32 %v3758, 1.442695
        %v3790 = vpow.pop %v3789
        %v3791 = vadd.f32 %v3760, 1.0
        %v3792 = vadd.f32 %v3762, 1.0
        %v3793 = vadd.f32 %v3764, 1.0
        %v3794 = vadd.f32 %v3766, 1.0
        %v3795 = vadd.f32 %v3768, 1.0
        %v3796 = vadd.f32 %v3770, 1.0
        %v3797 = vadd.f32 %v3772, 1.0
        %v3798 = vadd.f32 %v3774, 1.0
        %v3799 = vadd.f32 %v3776, 1.0
        %v3800 = vadd.f32 %v3778, 1.0
        %v3801 = vadd.f32 %v3780, 1.0
        %v3802 = vadd.f32 %v3782, 1.0
        %v3803 = vadd.f32 %v3784, 1.0
        %v3804 = vadd.f32 %v3786, 1.0
        %v3805 = vadd.f32 %v3788, 1.0
        %v3806 = vadd.f32 %v3790, 1.0
        %v3807 = vrcp.pop %v3791
        %v3808 = vmul.f32 1.0, %v3807
        %v3809 = vrcp.pop %v3792
        %v3810 = vmul.f32 1.0, %v3809
        %v3811 = vrcp.pop %v3793
        %v3812 = vmul.f32 1.0, %v3811
        %v3813 = vrcp.pop %v3794
        %v3814 = vmul.f32 1.0, %v3813
        %v3815 = vrcp.pop %v3795
        %v3816 = vmul.f32 1.0, %v3815
        %v3817 = vrcp.pop %v3796
        %v3818 = vmul.f32 1.0, %v3817
        %v3819 = vrcp.pop %v3797
        %v3820 = vmul.f32 1.0, %v3819
        %v3821 = vrcp.pop %v3798
        %v3822 = vmul.f32 1.0, %v3821
        %v3823 = vrcp.pop %v3799
        %v3824 = vmul.f32 1.0, %v3823
        %v3825 = vrcp.pop %v3800
        %v3826 = vmul.f32 1.0, %v3825
        %v3827 = vrcp.pop %v3801
        %v3828 = vmul.f32 1.0, %v3827
        %v3829 = vrcp.pop %v3802
        %v3830 = vmul.f32 1.0, %v3829
        %v3831 = vrcp.pop %v3803
        %v3832 = vmul.f32 1.0, %v3831
        %v3833 = vrcp.pop %v3804
        %v3834 = vmul.f32 1.0, %v3833
        %v3835 = vrcp.pop %v3805
        %v3836 = vmul.f32 1.0, %v3835
        %v3837 = vrcp.pop %v3806
        %v3838 = vmul.f32 1.0, %v3837
        %v3839 = vtanh.pop %v3728
        %v3840 = vtanh.pop %v3730
        %v3841 = vtanh.pop %v3732
        %v3842 = vtanh.pop %v3734
        %v3843 = vtanh.pop %v3736
        %v3844 = vtanh.pop %v3738
        %v3845 = vtanh.pop %v3740
        %v3846 = vtanh.pop %v3742
        %v3847 = vld [vmem:[#allocation4] sm:$0xff]
        %v3848 = vld [vmem:[#allocation4 + $0x8] sm:$0xff]
        %v3849 = vld [vmem:[#allocation4 + $0x10] sm:$0xff]
        %v3850 = vld [vmem:[#allocation4 + $0x18] sm:$0xff]
        %v3851 = vld [vmem:[#allocation4 + $0x20] sm:$0xff]
        %v3852 = vld [vmem:[#allocation4 + $0x28] sm:$0xff]
        %v3853 = vld [vmem:[#allocation4 + $0x30] sm:$0xff]
        %v3854 = vld [vmem:[#allocation4 + $0x38] sm:$0xff]
        %3863 = vrot.lane.b32.xlu0 %v3847, 64
        %v3864 = vpop.permute.xlu0 %3863
        %3865 = vrot.lane.b32.xlu0 %v3848, 64
        %v3866 = vpop.permute.xlu0 %3865
        %3867 = vrot.lane.b32.xlu0 %v3849, 64
        %v3868 = vpop.permute.xlu0 %3867
        %3869 = vrot.lane.b32.xlu0 %v3850, 64
        %v3870 = vpop.permute.xlu0 %3869
        %3871 = vrot.lane.b32.xlu0 %v3851, 64
        %v3872 = vpop.permute.xlu0 %3871
        %3873 = vrot.lane.b32.xlu0 %v3852, 64
        %v3874 = vpop.permute.xlu0 %3873
        %3875 = vrot.lane.b32.xlu0 %v3853, 64
        %v3876 = vpop.permute.xlu0 %3875
        %3877 = vrot.lane.b32.xlu0 %v3854, 64
        %v3878 = vpop.permute.xlu0 %3877
        %v3887 = vmul.f32 %v3808, %v3864
        %v3888 = vmul.f32 %v3812, %v3866
        %v3889 = vmul.f32 %v3816, %v3868
        %v3890 = vmul.f32 %v3820, %v3870
        %v3891 = vmul.f32 %v3824, %v3872
        %v3892 = vmul.f32 %v3828, %v3874
        %v3893 = vmul.f32 %v3832, %v3876
        %v3894 = vmul.f32 %v3836, %v3878
        %3903 = vrot.lane.b32.xlu0 %v3839, 64
        %v3904 = vpop.permute.xlu0 %3903
        %3905 = vrot.lane.b32.xlu0 %v3840, 64
        %v3906 = vpop.permute.xlu0 %3905
        %3907 = vrot.lane.b32.xlu0 %v3841, 64
        %v3908 = vpop.permute.xlu0 %3907
        %3909 = vrot.lane.b32.xlu0 %v3842, 64
        %v3910 = vpop.permute.xlu0 %3909
        %3911 = vrot.lane.b32.xlu0 %v3843, 64
        %v3912 = vpop.permute.xlu0 %3911
        %3913 = vrot.lane.b32.xlu0 %v3844, 64
        %v3914 = vpop.permute.xlu0 %3913
        %3915 = vrot.lane.b32.xlu0 %v3845, 64
        %v3916 = vpop.permute.xlu0 %3915
        %3917 = vrot.lane.b32.xlu0 %v3846, 64
        %v3918 = vpop.permute.xlu0 %3917
        %v3927 = vmul.f32 %v3808, %v3904
        %v3928 = vmul.f32 %v3812, %v3906
        %v3929 = vmul.f32 %v3816, %v3908
        %v3930 = vmul.f32 %v3820, %v3910
        %v3931 = vmul.f32 %v3824, %v3912
        %v3932 = vmul.f32 %v3828, %v3914
        %v3933 = vmul.f32 %v3832, %v3916
        %v3934 = vmul.f32 %v3836, %v3918
        %3943 = vrot.lane.b32.xlu0 %v3927, 64
        %v3944 = vpop.permute.xlu0 %3943
        %3945 = vrot.lane.b32.xlu0 %v3928, 64
        %v3946 = vpop.permute.xlu0 %3945
        %3947 = vrot.lane.b32.xlu0 %v3929, 64
        %v3948 = vpop.permute.xlu0 %3947
        %3949 = vrot.lane.b32.xlu0 %v3930, 64
        %v3950 = vpop.permute.xlu0 %3949
        %3951 = vrot.lane.b32.xlu0 %v3931, 64
        %v3952 = vpop.permute.xlu0 %3951
        %3953 = vrot.lane.b32.xlu0 %v3932, 64
        %v3954 = vpop.permute.xlu0 %3953
        %3955 = vrot.lane.b32.xlu0 %v3933, 64
        %v3956 = vpop.permute.xlu0 %3955
        %3957 = vrot.lane.b32.xlu0 %v3934, 64
        %v3958 = vpop.permute.xlu0 %3957
        %v3967 = vadd.f32 %v3887, %v3944
        %v3968 = vadd.f32 %v3888, %v3946
        %v3969 = vadd.f32 %v3889, %v3948
        %v3970 = vadd.f32 %v3890, %v3950
        %v3971 = vadd.f32 %v3891, %v3952
        %v3972 = vadd.f32 %v3892, %v3954
        %v3973 = vadd.f32 %v3893, %v3956
        %v3974 = vadd.f32 %v3894, %v3958
        %v3975 = vtanh.pop %v3967
        %v3976 = vtanh.pop %v3968
        %v3977 = vtanh.pop %v3969
        %v3978 = vtanh.pop %v3970
        %v3979 = vtanh.pop %v3971
        %v3980 = vtanh.pop %v3972
        %v3981 = vtanh.pop %v3973
        %v3982 = vtanh.pop %v3974
        %3991 = vrot.lane.b32.xlu0 %v3975, 64
        %v3992 = vpop.permute.xlu0 %3991
        %3993 = vrot.lane.b32.xlu0 %v3976, 64
        %v3994 = vpop.permute.xlu0 %3993
        %3995 = vrot.lane.b32.xlu0 %v3977, 64
        %v3996 = vpop.permute.xlu0 %3995
        %3997 = vrot.lane.b32.xlu0 %v3978, 64
        %v3998 = vpop.permute.xlu0 %3997
        %3999 = vrot.lane.b32.xlu0 %v3979, 64
        %v4000 = vpop.permute.xlu0 %3999
        %4001 = vrot.lane.b32.xlu0 %v3980, 64
        %v4002 = vpop.permute.xlu0 %4001
        %4003 = vrot.lane.b32.xlu0 %v3981, 64
        %v4004 = vpop.permute.xlu0 %4003
        %4005 = vrot.lane.b32.xlu0 %v3982, 64
        %v4006 = vpop.permute.xlu0 %4005
        %v4015 = vmul.f32 %v3810, %v3992
        %v4016 = vmul.f32 %v3814, %v3994
        %v4017 = vmul.f32 %v3818, %v3996
        %v4018 = vmul.f32 %v3822, %v3998
        %v4019 = vmul.f32 %v3826, %v4000
        %v4020 = vmul.f32 %v3830, %v4002
        %v4021 = vmul.f32 %v3834, %v4004
        %v4022 = vmul.f32 %v3838, %v4006
        %4031 = vrot.lane.b32.xlu0 %v3967, 64
        %v4032 = vpop.permute.xlu0 %4031
        %4033 = vrot.lane.b32.xlu0 %v3968, 64
        %v4034 = vpop.permute.xlu0 %4033
        %4035 = vrot.lane.b32.xlu0 %v3969, 64
        %v4036 = vpop.permute.xlu0 %4035
        %4037 = vrot.lane.b32.xlu0 %v3970, 64
        %v4038 = vpop.permute.xlu0 %4037
        %4039 = vrot.lane.b32.xlu0 %v3971, 64
        %v4040 = vpop.permute.xlu0 %4039
        %4041 = vrot.lane.b32.xlu0 %v3972, 64
        %v4042 = vpop.permute.xlu0 %4041
        %4043 = vrot.lane.b32.xlu0 %v3973, 64
        %v4044 = vpop.permute.xlu0 %4043
        %4045 = vrot.lane.b32.xlu0 %v3974, 64
        %v4046 = vpop.permute.xlu0 %4045
        %4055 = vst.msk [vmem:[#allocation4] sm:$0xff] %vm1313, %v4032
        %4056 = vst.msk [vmem:[#allocation4 + $0x8] sm:$0xff] %vm1313, %v4034
        %4057 = vst.msk [vmem:[#allocation4 + $0x10] sm:$0xff] %vm1313, %v4036
        %4058 = vst.msk [vmem:[#allocation4 + $0x18] sm:$0xff] %vm1313, %v4038
        %4059 = vst.msk [vmem:[#allocation4 + $0x20] sm:$0xff] %vm1313, %v4040
        %4060 = vst.msk [vmem:[#allocation4 + $0x28] sm:$0xff] %vm1313, %v4042
        %4061 = vst.msk [vmem:[#allocation4 + $0x30] sm:$0xff] %vm1313, %v4044
        %4062 = vst.msk [vmem:[#allocation4 + $0x38] sm:$0xff] %vm1313, %v4046
        %4063 = vst.msk [vmem:[#allocation3] sm:$0xff] %vm1313, %v4015
        %4064 = vst.msk [vmem:[#allocation3 + $0x8] sm:$0xff] %vm1313, %v4016
        %4065 = vst.msk [vmem:[#allocation3 + $0x10] sm:$0xff] %vm1313, %v4017
        %4066 = vst.msk [vmem:[#allocation3 + $0x18] sm:$0xff] %vm1313, %v4018
        %4067 = vst.msk [vmem:[#allocation3 + $0x20] sm:$0xff] %vm1313, %v4019
        %4068 = vst.msk [vmem:[#allocation3 + $0x28] sm:$0xff] %vm1313, %v4020
        %4069 = vst.msk [vmem:[#allocation3 + $0x30] sm:$0xff] %vm1313, %v4021
        %4070 = vst.msk [vmem:[#allocation3 + $0x38] sm:$0xff] %vm1313, %v4022
        %v4071 = vld [vmem:[#allocation5] sm:$0xff]
        %v4072 = vld [vmem:[#allocation5 + $0x8] sm:$0xff]
        %v4073 = vld [vmem:[#allocation5 + $0x10] sm:$0xff]
        %v4074 = vld [vmem:[#allocation5 + $0x18] sm:$0xff]
        %v4075 = vld [vmem:[#allocation5 + $0x20] sm:$0xff]
        %v4076 = vld [vmem:[#allocation5 + $0x28] sm:$0xff]
        %v4077 = vld [vmem:[#allocation5 + $0x30] sm:$0xff]
        %v4078 = vld [vmem:[#allocation5 + $0x38] sm:$0xff]
        %v4079 = vmax.f32 %v4015, 0.0
        %v4080 = vmax.f32 %v4016, 0.0
        %v4081 = vmax.f32 %v4017, 0.0
        %v4082 = vmax.f32 %v4018, 0.0
        %v4083 = vmax.f32 %v4019, 0.0
        %v4084 = vmax.f32 %v4020, 0.0
        %v4085 = vmax.f32 %v4021, 0.0
        %v4086 = vmax.f32 %v4022, 0.0
        %v4087 = vadd.f32 %v4071, %v4079
        %v4088 = vadd.f32 %v4072, %v4080
        %v4089 = vadd.f32 %v4073, %v4081
        %v4090 = vadd.f32 %v4074, %v4082
        %v4091 = vadd.f32 %v4075, %v4083
        %v4092 = vadd.f32 %v4076, %v4084
        %v4093 = vadd.f32 %v4077, %v4085
        %v4094 = vadd.f32 %v4078, %v4086
        %4095 = vst.msk [vmem:[#allocation5] sm:$0xff] %vm1313, %v4087
        %4096 = vst.msk [vmem:[#allocation5 + $0x8] sm:$0xff] %vm1313, %v4088
        %4097 = vst.msk [vmem:[#allocation5 + $0x10] sm:$0xff] %vm1313, %v4089
        %4098 = vst.msk [vmem:[#allocation5 + $0x18] sm:$0xff] %vm1313, %v4090
        %4099 = vst.msk [vmem:[#allocation5 + $0x20] sm:$0xff] %vm1313, %v4091
        %4100 = vst.msk [vmem:[#allocation5 + $0x28] sm:$0xff] %vm1313, %v4092
        %4101 = vst.msk [vmem:[#allocation5 + $0x30] sm:$0xff] %vm1313, %v4093
        %4102 = vst.msk [vmem:[#allocation5 + $0x38] sm:$0xff] %vm1313, %v4094
        %v4103 = vld [vmem:[#allocation2 + $0x50] sm:$0xff]
        %v4104 = vld [vmem:[#allocation2 + $0x58] sm:$0xff]
        %v4105 = vld [vmem:[#allocation2 + $0xd0] sm:$0xff]
        %v4106 = vld [vmem:[#allocation2 + $0xd8] sm:$0xff]
        %v4107 = vld [vmem:[#allocation2 + $0x150] sm:$0xff]
        %v4108 = vld [vmem:[#allocation2 + $0x158] sm:$0xff]
        %v4109 = vld [vmem:[#allocation2 + $0x1d0] sm:$0xff]
        %v4110 = vld [vmem:[#allocation2 + $0x1d8] sm:$0xff]
        %v4111 = vld [vmem:[#allocation2 + $0x250] sm:$0xff]
        %v4112 = vld [vmem:[#allocation2 + $0x258] sm:$0xff]
        %v4113 = vld [vmem:[#allocation2 + $0x2d0] sm:$0xff]
        %v4114 = vld [vmem:[#allocation2 + $0x2d8] sm:$0xff]
        %v4115 = vld [vmem:[#allocation2 + $0x350] sm:$0xff]
        %v4116 = vld [vmem:[#allocation2 + $0x358] sm:$0xff]
        %v4117 = vld [vmem:[#allocation2 + $0x3d0] sm:$0xff]
        %v4118 = vld [vmem:[#allocation2 + $0x3d8] sm:$0xff]
        %v4119 = vld [vmem:[#allocation3] sm:$0xff]
        %v4120 = vld [vmem:[#allocation3 + $0x8] sm:$0xff]
        %v4121 = vld [vmem:[#allocation3 + $0x10] sm:$0xff]
        %v4122 = vld [vmem:[#allocation3 + $0x18] sm:$0xff]
        %v4123 = vld [vmem:[#allocation3 + $0x20] sm:$0xff]
        %v4124 = vld [vmem:[#allocation3 + $0x28] sm:$0xff]
        %v4125 = vld [vmem:[#allocation3 + $0x30] sm:$0xff]
        %v4126 = vld [vmem:[#allocation3 + $0x38] sm:$0xff]
        %v4127 = vld [vmem:[#allocation9] sm:$0xff]
        %v4128 = vld [vmem:[#allocation9 + $0x8] sm:$0xff]
        %v4129 = vld [vmem:[#allocation9 + $0x10] sm:$0xff]
        %v4130 = vld [vmem:[#allocation9 + $0x18] sm:$0xff]
        %v4131 = vld [vmem:[#allocation9 + $0x20] sm:$0xff]
        %v4132 = vld [vmem:[#allocation9 + $0x28] sm:$0xff]
        %v4133 = vld [vmem:[#allocation9 + $0x30] sm:$0xff]
        %v4134 = vld [vmem:[#allocation9 + $0x38] sm:$0xff]
        %v4135 = vld [vmem:[#allocation9 + $0x40] sm:$0xff]
        %v4136 = vld [vmem:[#allocation9 + $0x48] sm:$0xff]
        %v4137 = vld [vmem:[#allocation9 + $0x50] sm:$0xff]
        %v4138 = vld [vmem:[#allocation9 + $0x58] sm:$0xff]
        %v4139 = vld [vmem:[#allocation9 + $0x60] sm:$0xff]
        %v4140 = vld [vmem:[#allocation9 + $0x68] sm:$0xff]
        %v4141 = vld [vmem:[#allocation9 + $0x70] sm:$0xff]
        %v4142 = vld [vmem:[#allocation9 + $0x78] sm:$0xff]
        %v4144 = vsel %vm1313, %v4119, 0
        %v4147 = vsel %vm1313, %v4120, 0
        %v4150 = vsel %vm1313, %v4121, 0
        %v4153 = vsel %vm1313, %v4122, 0
        %v4156 = vsel %vm1313, %v4123, 0
        %v4159 = vsel %vm1313, %v4124, 0
        %v4162 = vsel %vm1313, %v4125, 0
        %v4165 = vsel %vm1313, %v4126, 0
        %4167 = vmatprep.subr.mxu0 %v4128
        %4168 = vmatpush1.msra.mxu0 %v4127
        %4169 = vmatprep.subr.mxu0 %v4130
        %4170 = vmatpush1.msra.mxu0 %v4129
        %4171 = vmatprep.subr.mxu0 %v4132
        %4172 = vmatpush1.msra.mxu0 %v4131
        %4173 = vmatprep.subr.mxu0 %v4134
        %4174 = vmatpush1.msra.mxu0 %v4133
        %4175 = vmatprep.subr.mxu0 %v4136
        %4176 = vmatpush1.msra.mxu0 %v4135
        %4177 = vmatprep.subr.mxu0 %v4138
        %4178 = vmatpush1.msra.mxu0 %v4137
        %4179 = vmatprep.subr.mxu0 %v4140
        %4180 = vmatpush1.msra.mxu0 %v4139
        %4181 = vmatprep.subr.mxu0 %v4142
        %4182 = vmatpush1.msra.mxu0 %v4141
        %4183 = vmatprep.subr.mxu0 0.0
        %4184 = vmatpush1.msra.mxu0 0.0
        %4185 = vmatprep.subr.mxu0 0.0
        %4186 = vmatpush1.msra.mxu0 0.0
        %4187 = vmatprep.subr.mxu0 0.0
        %4188 = vmatpush1.msra.mxu0 0.0
        %4189 = vmatprep.subr.mxu0 0.0
        %4190 = vmatpush1.msra.mxu0 0.0
        %4191 = vmatprep.subr.mxu0 0.0
        %4192 = vmatpush1.msra.mxu0 0.0
        %4193 = vmatprep.subr.mxu0 0.0
        %4194 = vmatpush1.msra.mxu0 0.0
        %4195 = vmatprep.subr.mxu0 0.0
        %4196 = vmatpush1.msra.mxu0 0.0
        %4197 = vmatprep.subr.mxu0 0.0
        %4198 = vmatpush1.msra.mxu0 0.0
        %4199 = vmatprep.subr.mxu0 0.0
        %4200 = vmatpush1.msra.mxu0 0.0
        %4201 = vmatprep.subr.mxu0 0.0
        %4202 = vmatpush1.msra.mxu0 0.0
        %4203 = vmatprep.subr.mxu0 0.0
        %4204 = vmatpush1.msra.mxu0 0.0
        %4205 = vmatprep.subr.mxu0 0.0
        %4206 = vmatpush1.msra.mxu0 0.0
        %4207 = vmatprep.subr.mxu0 0.0
        %4208 = vmatpush1.msra.mxu0 0.0
        %4209 = vmatprep.subr.mxu0 0.0
        %4210 = vmatpush1.msra.mxu0 0.0
        %4211 = vmatprep.subr.mxu0 0.0
        %4212 = vmatpush1.msra.mxu0 0.0
        %4213 = vmatprep.subr.mxu0 0.0
        %4214 = vmatpush1.msra.mxu0 0.0
        %4215 = vmatprep.subr.mxu0 0.0
        %4216 = vmatpush1.msra.mxu0 0.0
        %4217 = vmatprep.subr.mxu0 0.0
        %4218 = vmatpush1.msra.mxu0 0.0
        %4219 = vmatprep.subr.mxu0 0.0
        %4220 = vmatpush1.msra.mxu0 0.0
        %4221 = vmatprep.subr.mxu0 0.0
        %4222 = vmatpush1.msra.mxu0 0.0
        %4223 = vmatprep.subr.mxu0 0.0
        %4224 = vmatpush1.msra.mxu0 0.0
        %4225 = vmatprep.subr.mxu0 0.0
        %4226 = vmatpush1.msra.mxu0 0.0
        %4227 = vmatprep.subr.mxu0 0.0
        %4228 = vmatpush1.msra.mxu0 0.0
        %4229 = vmatprep.subr.mxu0 0.0
        %4230 = vmatpush1.msra.mxu0 0.0
        %4231 = vmatprep.mubr.f32.mxu0 0.0
        %4232 = vmatmul.mubr.f32.gmra.mrb[0].mxu0 %v4144
        %v4233 = vpop.f32.mrb[0].mxu0
        %v4234 = vadd.f32 0.0, %v4233
        %v4235 = vpop.f32.mrb[0].mxu0
        %v4236 = vadd.f32 0.0, %v4235
        %4237 = vmatprep.mubr.f32.mxu0 0.0
        %4238 = vmatmul.mubr.f32.gmra.mrb[0].mxu0 %v4147
        %v4239 = vpop.f32.mrb[0].mxu0
        %v4240 = vadd.f32 0.0, %v4239
        %v4241 = vpop.f32.mrb[0].mxu0
        %v4242 = vadd.f32 0.0, %v4241
        %4243 = vmatprep.mubr.f32.mxu0 0.0
        %4244 = vmatmul.mubr.f32.gmra.mrb[0].mxu0 %v4150
        %v4245 = vpop.f32.mrb[0].mxu0
        %v4246 = vadd.f32 0.0, %v4245
        %v4247 = vpop.f32.mrb[0].mxu0
        %v4248 = vadd.f32 0.0, %v4247
        %4249 = vmatprep.mubr.f32.mxu0 0.0
        %4250 = vmatmul.mubr.f32.gmra.mrb[0].mxu0 %v4153
        %v4251 = vpop.f32.mrb[0].mxu0
        %v4252 = vadd.f32 0.0, %v4251
        %v4253 = vpop.f32.mrb[0].mxu0
        %v4254 = vadd.f32 0.0, %v4253
        %4255 = vmatprep.mubr.f32.mxu0 0.0
        %4256 = vmatmul.mubr.f32.gmra.mrb[0].mxu0 %v4156
        %v4257 = vpop.f32.mrb[0].mxu0
        %v4258 = vadd.f32 0.0, %v4257
        %v4259 = vpop.f32.mrb[0].mxu0
        %v4260 = vadd.f32 0.0, %v4259
        %4261 = vmatprep.mubr.f32.mxu0 0.0
        %4262 = vmatmul.mubr.f32.gmra.mrb[0].mxu0 %v4159
        %v4263 = vpop.f32.mrb[0].mxu0
        %v4264 = vadd.f32 0.0, %v4263
        %v4265 = vpop.f32.mrb[0].mxu0
        %v4266 = vadd.f32 0.0, %v4265
        %4267 = vmatprep.mubr.f32.mxu0 0.0
        %4268 = vmatmul.mubr.f32.gmra.mrb[0].mxu0 %v4162
        %v4269 = vpop.f32.mrb[0].mxu0
        %v4270 = vadd.f32 0.0, %v4269
        %v4271 = vpop.f32.mrb[0].mxu0
        %v4272 = vadd.f32 0.0, %v4271
        %4273 = vmatprep.mubr.f32.mxu0 0.0
        %4274 = vmatmul.mubr.f32.gmra.mrb[0].mxu0 %v4165
        %v4275 = vpop.f32.mrb[0].mxu0
        %v4276 = vadd.f32 0.0, %v4275
        %v4277 = vpop.f32.mrb[0].mxu0
        %v4278 = vadd.f32 0.0, %v4277
        %4279 = vdwg.mxu0
        %v4280 = vadd.f32 %v4103, %v4234
        %v4281 = vadd.f32 %v4104, %v4236
        %v4282 = vadd.f32 %v4105, %v4240
        %v4283 = vadd.f32 %v4106, %v4242
        %v4284 = vadd.f32 %v4107, %v4246
        %v4285 = vadd.f32 %v4108, %v4248
        %v4286 = vadd.f32 %v4109, %v4252
        %v4287 = vadd.f32 %v4110, %v4254
        %v4288 = vadd.f32 %v4111, %v4258
        %v4289 = vadd.f32 %v4112, %v4260
        %v4290 = vadd.f32 %v4113, %v4264
        %v4291 = vadd.f32 %v4114, %v4266
        %v4292 = vadd.f32 %v4115, %v4270
        %v4293 = vadd.f32 %v4116, %v4272
        %v4294 = vadd.f32 %v4117, %v4276
        %v4295 = vadd.f32 %v4118, %v4278
        %v4296 = vxor.u32 %v4280, 2147483648
        %v4297 = vxor.u32 %v4281, 2147483648
        %v4298 = vxor.u32 %v4282, 2147483648
        %v4299 = vxor.u32 %v4283, 2147483648
        %v4300 = vxor.u32 %v4284, 2147483648
        %v4301 = vxor.u32 %v4285, 2147483648
        %v4302 = vxor.u32 %v4286, 2147483648
        %v4303 = vxor.u32 %v4287, 2147483648
        %v4304 = vxor.u32 %v4288, 2147483648
        %v4305 = vxor.u32 %v4289, 2147483648
        %v4306 = vxor.u32 %v4290, 2147483648
        %v4307 = vxor.u32 %v4291, 2147483648
        %v4308 = vxor.u32 %v4292, 2147483648
        %v4309 = vxor.u32 %v4293, 2147483648
        %v4310 = vxor.u32 %v4294, 2147483648
        %v4311 = vxor.u32 %v4295, 2147483648
        %v4312 = vmul.f32 %v4296, 1.442695
        %v4313 = vpow.pop %v4312
        %v4314 = vmul.f32 %v4297, 1.442695
        %v4315 = vpow.pop %v4314
        %v4316 = vmul.f32 %v4298, 1.442695
        %v4317 = vpow.pop %v4316
        %v4318 = vmul.f32 %v4299, 1.442695
        %v4319 = vpow.pop %v4318
        %v4320 = vmul.f32 %v4300, 1.442695
        %v4321 = vpow.pop %v4320
        %v4322 = vmul.f32 %v4301, 1.442695
        %v4323 = vpow.pop %v4322
        %v4324 = vmul.f32 %v4302, 1.442695
        %v4325 = vpow.pop %v4324
        %v4326 = vmul.f32 %v4303, 1.442695
        %v4327 = vpow.pop %v4326
        %v4328 = vmul.f32 %v4304, 1.442695
        %v4329 = vpow.pop %v4328
        %v4330 = vmul.f32 %v4305, 1.442695
        %v4331 = vpow.pop %v4330
        %v4332 = vmul.f32 %v4306, 1.442695
        %v4333 = vpow.pop %v4332
        %v4334 = vmul.f32 %v4307, 1.442695
        %v4335 = vpow.pop %v4334
        %v4336 = vmul.f32 %v4308, 1.442695
        %v4337 = vpow.pop %v4336
        %v4338 = vmul.f32 %v4309, 1.442695
        %v4339 = vpow.pop %v4338
        %v4340 = vmul.f32 %v4310, 1.442695
        %v4341 = vpow.pop %v4340
        %v4342 = vmul.f32 %v4311, 1.442695
        %v4343 = vpow.pop %v4342
        %v4344 = vadd.f32 %v4313, 1.0
        %v4345 = vadd.f32 %v4315, 1.0
        %v4346 = vadd.f32 %v4317, 1.0
        %v4347 = vadd.f32 %v4319, 1.0
        %v4348 = vadd.f32 %v4321, 1.0
        %v4349 = vadd.f32 %v4323, 1.0
        %v4350 = vadd.f32 %v4325, 1.0
        %v4351 = vadd.f32 %v4327, 1.0
        %v4352 = vadd.f32 %v4329, 1.0
        %v4353 = vadd.f32 %v4331, 1.0
        %v4354 = vadd.f32 %v4333, 1.0
        %v4355 = vadd.f32 %v4335, 1.0
        %v4356 = vadd.f32 %v4337, 1.0
        %v4357 = vadd.f32 %v4339, 1.0
        %v4358 = vadd.f32 %v4341, 1.0
        %v4359 = vadd.f32 %v4343, 1.0
        %v4360 = vrcp.pop %v4344
        %v4361 = vmul.f32 1.0, %v4360
        %v4362 = vrcp.pop %v4345
        %v4363 = vmul.f32 1.0, %v4362
        %v4364 = vrcp.pop %v4346
        %v4365 = vmul.f32 1.0, %v4364
        %v4366 = vrcp.pop %v4347
        %v4367 = vmul.f32 1.0, %v4366
        %v4368 = vrcp.pop %v4348
        %v4369 = vmul.f32 1.0, %v4368
        %v4370 = vrcp.pop %v4349
        %v4371 = vmul.f32 1.0, %v4370
        %v4372 = vrcp.pop %v4350
        %v4373 = vmul.f32 1.0, %v4372
        %v4374 = vrcp.pop %v4351
        %v4375 = vmul.f32 1.0, %v4374
        %v4376 = vrcp.pop %v4352
        %v4377 = vmul.f32 1.0, %v4376
        %v4378 = vrcp.pop %v4353
        %v4379 = vmul.f32 1.0, %v4378
        %v4380 = vrcp.pop %v4354
        %v4381 = vmul.f32 1.0, %v4380
        %v4382 = vrcp.pop %v4355
        %v4383 = vmul.f32 1.0, %v4382
        %v4384 = vrcp.pop %v4356
        %v4385 = vmul.f32 1.0, %v4384
        %v4386 = vrcp.pop %v4357
        %v4387 = vmul.f32 1.0, %v4386
        %v4388 = vrcp.pop %v4358
        %v4389 = vmul.f32 1.0, %v4388
        %v4390 = vrcp.pop %v4359
        %v4391 = vmul.f32 1.0, %v4390
        %v4392 = vtanh.pop %v4281
        %v4393 = vtanh.pop %v4283
        %v4394 = vtanh.pop %v4285
        %v4395 = vtanh.pop %v4287
        %v4396 = vtanh.pop %v4289
        %v4397 = vtanh.pop %v4291
        %v4398 = vtanh.pop %v4293
        %v4399 = vtanh.pop %v4295
        %v4400 = vld [vmem:[#allocation4] sm:$0xff]
        %v4401 = vld [vmem:[#allocation4 + $0x8] sm:$0xff]
        %v4402 = vld [vmem:[#allocation4 + $0x10] sm:$0xff]
        %v4403 = vld [vmem:[#allocation4 + $0x18] sm:$0xff]
        %v4404 = vld [vmem:[#allocation4 + $0x20] sm:$0xff]
        %v4405 = vld [vmem:[#allocation4 + $0x28] sm:$0xff]
        %v4406 = vld [vmem:[#allocation4 + $0x30] sm:$0xff]
        %v4407 = vld [vmem:[#allocation4 + $0x38] sm:$0xff]
        %4416 = vrot.lane.b32.xlu0 %v4400, 64
        %v4417 = vpop.permute.xlu0 %4416
        %4418 = vrot.lane.b32.xlu0 %v4401, 64
        %v4419 = vpop.permute.xlu0 %4418
        %4420 = vrot.lane.b32.xlu0 %v4402, 64
        %v4421 = vpop.permute.xlu0 %4420
        %4422 = vrot.lane.b32.xlu0 %v4403, 64
        %v4423 = vpop.permute.xlu0 %4422
        %4424 = vrot.lane.b32.xlu0 %v4404, 64
        %v4425 = vpop.permute.xlu0 %4424
        %4426 = vrot.lane.b32.xlu0 %v4405, 64
        %v4427 = vpop.permute.xlu0 %4426
        %4428 = vrot.lane.b32.xlu0 %v4406, 64
        %v4429 = vpop.permute.xlu0 %4428
        %4430 = vrot.lane.b32.xlu0 %v4407, 64
        %v4431 = vpop.permute.xlu0 %4430
        %v4440 = vmul.f32 %v4361, %v4417
        %v4441 = vmul.f32 %v4365, %v4419
        %v4442 = vmul.f32 %v4369, %v4421
        %v4443 = vmul.f32 %v4373, %v4423
        %v4444 = vmul.f32 %v4377, %v4425
        %v4445 = vmul.f32 %v4381, %v4427
        %v4446 = vmul.f32 %v4385, %v4429
        %v4447 = vmul.f32 %v4389, %v4431
        %4456 = vrot.lane.b32.xlu0 %v4392, 64
        %v4457 = vpop.permute.xlu0 %4456
        %4458 = vrot.lane.b32.xlu0 %v4393, 64
        %v4459 = vpop.permute.xlu0 %4458
        %4460 = vrot.lane.b32.xlu0 %v4394, 64
        %v4461 = vpop.permute.xlu0 %4460
        %4462 = vrot.lane.b32.xlu0 %v4395, 64
        %v4463 = vpop.permute.xlu0 %4462
        %4464 = vrot.lane.b32.xlu0 %v4396, 64
        %v4465 = vpop.permute.xlu0 %4464
        %4466 = vrot.lane.b32.xlu0 %v4397, 64
        %v4467 = vpop.permute.xlu0 %4466
        %4468 = vrot.lane.b32.xlu0 %v4398, 64
        %v4469 = vpop.permute.xlu0 %4468
        %4470 = vrot.lane.b32.xlu0 %v4399, 64
        %v4471 = vpop.permute.xlu0 %4470
        %v4480 = vmul.f32 %v4361, %v4457
        %v4481 = vmul.f32 %v4365, %v4459
        %v4482 = vmul.f32 %v4369, %v4461
        %v4483 = vmul.f32 %v4373, %v4463
        %v4484 = vmul.f32 %v4377, %v4465
        %v4485 = vmul.f32 %v4381, %v4467
        %v4486 = vmul.f32 %v4385, %v4469
        %v4487 = vmul.f32 %v4389, %v4471
        %4496 = vrot.lane.b32.xlu0 %v4480, 64
        %v4497 = vpop.permute.xlu0 %4496
        %4498 = vrot.lane.b32.xlu0 %v4481, 64
        %v4499 = vpop.permute.xlu0 %4498
        %4500 = vrot.lane.b32.xlu0 %v4482, 64
        %v4501 = vpop.permute.xlu0 %4500
        %4502 = vrot.lane.b32.xlu0 %v4483, 64
        %v4503 = vpop.permute.xlu0 %4502
        %4504 = vrot.lane.b32.xlu0 %v4484, 64
        %v4505 = vpop.permute.xlu0 %4504
        %4506 = vrot.lane.b32.xlu0 %v4485, 64
        %v4507 = vpop.permute.xlu0 %4506
        %4508 = vrot.lane.b32.xlu0 %v4486, 64
        %v4509 = vpop.permute.xlu0 %4508
        %4510 = vrot.lane.b32.xlu0 %v4487, 64
        %v4511 = vpop.permute.xlu0 %4510
        %v4520 = vadd.f32 %v4440, %v4497
        %v4521 = vadd.f32 %v4441, %v4499
        %v4522 = vadd.f32 %v4442, %v4501
        %v4523 = vadd.f32 %v4443, %v4503
        %v4524 = vadd.f32 %v4444, %v4505
        %v4525 = vadd.f32 %v4445, %v4507
        %v4526 = vadd.f32 %v4446, %v4509
        %v4527 = vadd.f32 %v4447, %v4511
        %v4528 = vtanh.pop %v4520
        %v4529 = vtanh.pop %v4521
        %v4530 = vtanh.pop %v4522
        %v4531 = vtanh.pop %v4523
        %v4532 = vtanh.pop %v4524
        %v4533 = vtanh.pop %v4525
        %v4534 = vtanh.pop %v4526
        %v4535 = vtanh.pop %v4527
        %4544 = vrot.lane.b32.xlu0 %v4528, 64
        %v4545 = vpop.permute.xlu0 %4544
        %4546 = vrot.lane.b32.xlu0 %v4529, 64
        %v4547 = vpop.permute.xlu0 %4546
        %4548 = vrot.lane.b32.xlu0 %v4530, 64
        %v4549 = vpop.permute.xlu0 %4548
        %4550 = vrot.lane.b32.xlu0 %v4531, 64
        %v4551 = vpop.permute.xlu0 %4550
        %4552 = vrot.lane.b32.xlu0 %v4532, 64
        %v4553 = vpop.permute.xlu0 %4552
        %4554 = vrot.lane.b32.xlu0 %v4533, 64
        %v4555 = vpop.permute.xlu0 %4554
        %4556 = vrot.lane.b32.xlu0 %v4534, 64
        %v4557 = vpop.permute.xlu0 %4556
        %4558 = vrot.lane.b32.xlu0 %v4535, 64
        %v4559 = vpop.permute.xlu0 %4558
        %v4568 = vmul.f32 %v4363, %v4545
        %v4569 = vmul.f32 %v4367, %v4547
        %v4570 = vmul.f32 %v4371, %v4549
        %v4571 = vmul.f32 %v4375, %v4551
        %v4572 = vmul.f32 %v4379, %v4553
        %v4573 = vmul.f32 %v4383, %v4555
        %v4574 = vmul.f32 %v4387, %v4557
        %v4575 = vmul.f32 %v4391, %v4559
        %4584 = vrot.lane.b32.xlu0 %v4520, 64
        %v4585 = vpop.permute.xlu0 %4584
        %4586 = vrot.lane.b32.xlu0 %v4521, 64
        %v4587 = vpop.permute.xlu0 %4586
        %4588 = vrot.lane.b32.xlu0 %v4522, 64
        %v4589 = vpop.permute.xlu0 %4588
        %4590 = vrot.lane.b32.xlu0 %v4523, 64
        %v4591 = vpop.permute.xlu0 %4590
        %4592 = vrot.lane.b32.xlu0 %v4524, 64
        %v4593 = vpop.permute.xlu0 %4592
        %4594 = vrot.lane.b32.xlu0 %v4525, 64
        %v4595 = vpop.permute.xlu0 %4594
        %4596 = vrot.lane.b32.xlu0 %v4526, 64
        %v4597 = vpop.permute.xlu0 %4596
        %4598 = vrot.lane.b32.xlu0 %v4527, 64
        %v4599 = vpop.permute.xlu0 %4598
        %4608 = vst.msk [vmem:[#allocation4] sm:$0xff] %vm1313, %v4585
        %4609 = vst.msk [vmem:[#allocation4 + $0x8] sm:$0xff] %vm1313, %v4587
        %4610 = vst.msk [vmem:[#allocation4 + $0x10] sm:$0xff] %vm1313, %v4589
        %4611 = vst.msk [vmem:[#allocation4 + $0x18] sm:$0xff] %vm1313, %v4591
        %4612 = vst.msk [vmem:[#allocation4 + $0x20] sm:$0xff] %vm1313, %v4593
        %4613 = vst.msk [vmem:[#allocation4 + $0x28] sm:$0xff] %vm1313, %v4595
        %4614 = vst.msk [vmem:[#allocation4 + $0x30] sm:$0xff] %vm1313, %v4597
        %4615 = vst.msk [vmem:[#allocation4 + $0x38] sm:$0xff] %vm1313, %v4599
        %4616 = vst.msk [vmem:[#allocation3] sm:$0xff] %vm1313, %v4568
        %4617 = vst.msk [vmem:[#allocation3 + $0x8] sm:$0xff] %vm1313, %v4569
        %4618 = vst.msk [vmem:[#allocation3 + $0x10] sm:$0xff] %vm1313, %v4570
        %4619 = vst.msk [vmem:[#allocation3 + $0x18] sm:$0xff] %vm1313, %v4571
        %4620 = vst.msk [vmem:[#allocation3 + $0x20] sm:$0xff] %vm1313, %v4572
        %4621 = vst.msk [vmem:[#allocation3 + $0x28] sm:$0xff] %vm1313, %v4573
        %4622 = vst.msk [vmem:[#allocation3 + $0x30] sm:$0xff] %vm1313, %v4574
        %4623 = vst.msk [vmem:[#allocation3 + $0x38] sm:$0xff] %vm1313, %v4575
        %v4624 = vld [vmem:[#allocation5] sm:$0xff]
        %v4625 = vld [vmem:[#allocation5 + $0x8] sm:$0xff]
        %v4626 = vld [vmem:[#allocation5 + $0x10] sm:$0xff]
        %v4627 = vld [vmem:[#allocation5 + $0x18] sm:$0xff]
        %v4628 = vld [vmem:[#allocation5 + $0x20] sm:$0xff]
        %v4629 = vld [vmem:[#allocation5 + $0x28] sm:$0xff]
        %v4630 = vld [vmem:[#allocation5 + $0x30] sm:$0xff]
        %v4631 = vld [vmem:[#allocation5 + $0x38] sm:$0xff]
        %v4632 = vmax.f32 %v4568, 0.0
        %v4633 = vmax.f32 %v4569, 0.0
        %v4634 = vmax.f32 %v4570, 0.0
        %v4635 = vmax.f32 %v4571, 0.0
        %v4636 = vmax.f32 %v4572, 0.0
        %v4637 = vmax.f32 %v4573, 0.0
        %v4638 = vmax.f32 %v4574, 0.0
        %v4639 = vmax.f32 %v4575, 0.0
        %v4640 = vadd.f32 %v4624, %v4632
        %v4641 = vadd.f32 %v4625, %v4633
        %v4642 = vadd.f32 %v4626, %v4634
        %v4643 = vadd.f32 %v4627, %v4635
        %v4644 = vadd.f32 %v4628, %v4636
        %v4645 = vadd.f32 %v4629, %v4637
        %v4646 = vadd.f32 %v4630, %v4638
        %v4647 = vadd.f32 %v4631, %v4639
        %4648 = vst.msk [vmem:[#allocation5] sm:$0xff] %vm1313, %v4640
        %4649 = vst.msk [vmem:[#allocation5 + $0x8] sm:$0xff] %vm1313, %v4641
        %4650 = vst.msk [vmem:[#allocation5 + $0x10] sm:$0xff] %vm1313, %v4642
        %4651 = vst.msk [vmem:[#allocation5 + $0x18] sm:$0xff] %vm1313, %v4643
        %4652 = vst.msk [vmem:[#allocation5 + $0x20] sm:$0xff] %vm1313, %v4644
        %4653 = vst.msk [vmem:[#allocation5 + $0x28] sm:$0xff] %vm1313, %v4645
        %4654 = vst.msk [vmem:[#allocation5 + $0x30] sm:$0xff] %vm1313, %v4646
        %4655 = vst.msk [vmem:[#allocation5 + $0x38] sm:$0xff] %vm1313, %v4647
        %v4656 = vld [vmem:[#allocation2 + $0x60] sm:$0xff]
        %v4657 = vld [vmem:[#allocation2 + $0x68] sm:$0xff]
        %v4658 = vld [vmem:[#allocation2 + $0xe0] sm:$0xff]
        %v4659 = vld [vmem:[#allocation2 + $0xe8] sm:$0xff]
        %v4660 = vld [vmem:[#allocation2 + $0x160] sm:$0xff]
        %v4661 = vld [vmem:[#allocation2 + $0x168] sm:$0xff]
        %v4662 = vld [vmem:[#allocation2 + $0x1e0] sm:$0xff]
        %v4663 = vld [vmem:[#allocation2 + $0x1e8] sm:$0xff]
        %v4664 = vld [vmem:[#allocation2 + $0x260] sm:$0xff]
        %v4665 = vld [vmem:[#allocation2 + $0x268] sm:$0xff]
        %v4666 = vld [vmem:[#allocation2 + $0x2e0] sm:$0xff]
        %v4667 = vld [vmem:[#allocation2 + $0x2e8] sm:$0xff]
        %v4668 = vld [vmem:[#allocation2 + $0x360] sm:$0xff]
        %v4669 = vld [vmem:[#allocation2 + $0x368] sm:$0xff]
        %v4670 = vld [vmem:[#allocation2 + $0x3e0] sm:$0xff]
        %v4671 = vld [vmem:[#allocation2 + $0x3e8] sm:$0xff]
        %v4672 = vld [vmem:[#allocation3] sm:$0xff]
        %v4673 = vld [vmem:[#allocation3 + $0x8] sm:$0xff]
        %v4674 = vld [vmem:[#allocation3 + $0x10] sm:$0xff]
        %v4675 = vld [vmem:[#allocation3 + $0x18] sm:$0xff]
        %v4676 = vld [vmem:[#allocation3 + $0x20] sm:$0xff]
        %v4677 = vld [vmem:[#allocation3 + $0x28] sm:$0xff]
        %v4678 = vld [vmem:[#allocation3 + $0x30] sm:$0xff]
        %v4679 = vld [vmem:[#allocation3 + $0x38] sm:$0xff]
        %v4680 = vld [vmem:[#allocation9] sm:$0xff]
        %v4681 = vld [vmem:[#allocation9 + $0x8] sm:$0xff]
        %v4682 = vld [vmem:[#allocation9 + $0x10] sm:$0xff]
        %v4683 = vld [vmem:[#allocation9 + $0x18] sm:$0xff]
        %v4684 = vld [vmem:[#allocation9 + $0x20] sm:$0xff]
        %v4685 = vld [vmem:[#allocation9 + $0x28] sm:$0xff]
        %v4686 = vld [vmem:[#allocation9 + $0x30] sm:$0xff]
        %v4687 = vld [vmem:[#allocation9 + $0x38] sm:$0xff]
        %v4688 = vld [vmem:[#allocation9 + $0x40] sm:$0xff]
        %v4689 = vld [vmem:[#allocation9 + $0x48] sm:$0xff]
        %v4690 = vld [vmem:[#allocation9 + $0x50] sm:$0xff]
        %v4691 = vld [vmem:[#allocation9 + $0x58] sm:$0xff]
        %v4692 = vld [vmem:[#allocation9 + $0x60] sm:$0xff]
        %v4693 = vld [vmem:[#allocation9 + $0x68] sm:$0xff]
        %v4694 = vld [vmem:[#allocation9 + $0x70] sm:$0xff]
        %v4695 = vld [vmem:[#allocation9 + $0x78] sm:$0xff]
        %v4697 = vsel %vm1313, %v4672, 0
        %v4700 = vsel %vm1313, %v4673, 0
        %v4703 = vsel %vm1313, %v4674, 0
        %v4706 = vsel %vm1313, %v4675, 0
        %v4709 = vsel %vm1313, %v4676, 0
        %v4712 = vsel %vm1313, %v4677, 0
        %v4715 = vsel %vm1313, %v4678, 0
        %v4718 = vsel %vm1313, %v4679, 0
        %4720 = vmatprep.subr.mxu0 %v4681
        %4721 = vmatpush1.msra.mxu0 %v4680
        %4722 = vmatprep.subr.mxu0 %v4683
        %4723 = vmatpush1.msra.mxu0 %v4682
        %4724 = vmatprep.subr.mxu0 %v4685
        %4725 = vmatpush1.msra.mxu0 %v4684
        %4726 = vmatprep.subr.mxu0 %v4687
        %4727 = vmatpush1.msra.mxu0 %v4686
        %4728 = vmatprep.subr.mxu0 %v4689
        %4729 = vmatpush1.msra.mxu0 %v4688
        %4730 = vmatprep.subr.mxu0 %v4691
        %4731 = vmatpush1.msra.mxu0 %v4690
        %4732 = vmatprep.subr.mxu0 %v4693
        %4733 = vmatpush1.msra.mxu0 %v4692
        %4734 = vmatprep.subr.mxu0 %v4695
        %4735 = vmatpush1.msra.mxu0 %v4694
        %4736 = vmatprep.subr.mxu0 0.0
        %4737 = vmatpush1.msra.mxu0 0.0
        %4738 = vmatprep.subr.mxu0 0.0
        %4739 = vmatpush1.msra.mxu0 0.0
        %4740 = vmatprep.subr.mxu0 0.0
        %4741 = vmatpush1.msra.mxu0 0.0
        %4742 = vmatprep.subr.mxu0 0.0
        %4743 = vmatpush1.msra.mxu0 0.0
        %4744 = vmatprep.subr.mxu0 0.0
        %4745 = vmatpush1.msra.mxu0 0.0
        %4746 = vmatprep.subr.mxu0 0.0
        %4747 = vmatpush1.msra.mxu0 0.0
        %4748 = vmatprep.subr.mxu0 0.0
        %4749 = vmatpush1.msra.mxu0 0.0
        %4750 = vmatprep.subr.mxu0 0.0
        %4751 = vmatpush1.msra.mxu0 0.0
        %4752 = vmatprep.subr.mxu0 0.0
        %4753 = vmatpush1.msra.mxu0 0.0
        %4754 = vmatprep.subr.mxu0 0.0
        %4755 = vmatpush1.msra.mxu0 0.0
        %4756 = vmatprep.subr.mxu0 0.0
        %4757 = vmatpush1.msra.mxu0 0.0
        %4758 = vmatprep.subr.mxu0 0.0
        %4759 = vmatpush1.msra.mxu0 0.0
        %4760 = vmatprep.subr.mxu0 0.0
        %4761 = vmatpush1.msra.mxu0 0.0
        %4762 = vmatprep.subr.mxu0 0.0
        %4763 = vmatpush1.msra.mxu0 0.0
        %4764 = vmatprep.subr.mxu0 0.0
        %4765 = vmatpush1.msra.mxu0 0.0
        %4766 = vmatprep.subr.mxu0 0.0
        %4767 = vmatpush1.msra.mxu0 0.0
        %4768 = vmatprep.subr.mxu0 0.0
        %4769 = vmatpush1.msra.mxu0 0.0
        %4770 = vmatprep.subr.mxu0 0.0
        %4771 = vmatpush1.msra.mxu0 0.0
        %4772 = vmatprep.subr.mxu0 0.0
        %4773 = vmatpush1.msra.mxu0 0.0
        %4774 = vmatprep.subr.mxu0 0.0
        %4775 = vmatpush1.msra.mxu0 0.0
        %4776 = vmatprep.subr.mxu0 0.0
        %4777 = vmatpush1.msra.mxu0 0.0
        %4778 = vmatprep.subr.mxu0 0.0
        %4779 = vmatpush1.msra.mxu0 0.0
        %4780 = vmatprep.subr.mxu0 0.0
        %4781 = vmatpush1.msra.mxu0 0.0
        %4782 = vmatprep.subr.mxu0 0.0
        %4783 = vmatpush1.msra.mxu0 0.0
        %4784 = vmatprep.mubr.f32.mxu0 0.0
        %4785 = vmatmul.mubr.f32.gmra.mrb[0].mxu0 %v4697
        %v4786 = vpop.f32.mrb[0].mxu0
        %v4787 = vadd.f32 0.0, %v4786
        %v4788 = vpop.f32.mrb[0].mxu0
        %v4789 = vadd.f32 0.0, %v4788
        %4790 = vmatprep.mubr.f32.mxu0 0.0
        %4791 = vmatmul.mubr.f32.gmra.mrb[0].mxu0 %v4700
        %v4792 = vpop.f32.mrb[0].mxu0
        %v4793 = vadd.f32 0.0, %v4792
        %v4794 = vpop.f32.mrb[0].mxu0
        %v4795 = vadd.f32 0.0, %v4794
        %4796 = vmatprep.mubr.f32.mxu0 0.0
        %4797 = vmatmul.mubr.f32.gmra.mrb[0].mxu0 %v4703
        %v4798 = vpop.f32.mrb[0].mxu0
        %v4799 = vadd.f32 0.0, %v4798
        %v4800 = vpop.f32.mrb[0].mxu0
        %v4801 = vadd.f32 0.0, %v4800
        %4802 = vmatprep.mubr.f32.mxu0 0.0
        %4803 = vmatmul.mubr.f32.gmra.mrb[0].mxu0 %v4706
        %v4804 = vpop.f32.mrb[0].mxu0
        %v4805 = vadd.f32 0.0, %v4804
        %v4806 = vpop.f32.mrb[0].mxu0
        %v4807 = vadd.f32 0.0, %v4806
        %4808 = vmatprep.mubr.f32.mxu0 0.0
        %4809 = vmatmul.mubr.f32.gmra.mrb[0].mxu0 %v4709
        %v4810 = vpop.f32.mrb[0].mxu0
        %v4811 = vadd.f32 0.0, %v4810
        %v4812 = vpop.f32.mrb[0].mxu0
        %v4813 = vadd.f32 0.0, %v4812
        %4814 = vmatprep.mubr.f32.mxu0 0.0
        %4815 = vmatmul.mubr.f32.gmra.mrb[0].mxu0 %v4712
        %v4816 = vpop.f32.mrb[0].mxu0
        %v4817 = vadd.f32 0.0, %v4816
        %v4818 = vpop.f32.mrb[0].mxu0
        %v4819 = vadd.f32 0.0, %v4818
        %4820 = vmatprep.mubr.f32.mxu0 0.0
        %4821 = vmatmul.mubr.f32.gmra.mrb[0].mxu0 %v4715
        %v4822 = vpop.f32.mrb[0].mxu0
        %v4823 = vadd.f32 0.0, %v4822
        %v4824 = vpop.f32.mrb[0].mxu0
        %v4825 = vadd.f32 0.0, %v4824
        %4826 = vmatprep.mubr.f32.mxu0 0.0
        %4827 = vmatmul.mubr.f32.gmra.mrb[0].mxu0 %v4718
        %v4828 = vpop.f32.mrb[0].mxu0
        %v4829 = vadd.f32 0.0, %v4828
        %v4830 = vpop.f32.mrb[0].mxu0
        %v4831 = vadd.f32 0.0, %v4830
        %4832 = vdwg.mxu0
        %v4833 = vadd.f32 %v4656, %v4787
        %v4834 = vadd.f32 %v4657, %v4789
        %v4835 = vadd.f32 %v4658, %v4793
        %v4836 = vadd.f32 %v4659, %v4795
        %v4837 = vadd.f32 %v4660, %v4799
        %v4838 = vadd.f32 %v4661, %v4801
        %v4839 = vadd.f32 %v4662, %v4805
        %v4840 = vadd.f32 %v4663, %v4807
        %v4841 = vadd.f32 %v4664, %v4811
        %v4842 = vadd.f32 %v4665, %v4813
        %v4843 = vadd.f32 %v4666, %v4817
        %v4844 = vadd.f32 %v4667, %v4819
        %v4845 = vadd.f32 %v4668, %v4823
        %v4846 = vadd.f32 %v4669, %v4825
        %v4847 = vadd.f32 %v4670, %v4829
        %v4848 = vadd.f32 %v4671, %v4831
        %v4849 = vxor.u32 %v4833, 2147483648
        %v4850 = vxor.u32 %v4834, 2147483648
        %v4851 = vxor.u32 %v4835, 2147483648
        %v4852 = vxor.u32 %v4836, 2147483648
        %v4853 = vxor.u32 %v4837, 2147483648
        %v4854 = vxor.u32 %v4838, 2147483648
        %v4855 = vxor.u32 %v4839, 2147483648
        %v4856 = vxor.u32 %v4840, 2147483648
        %v4857 = vxor.u32 %v4841, 2147483648
        %v4858 = vxor.u32 %v4842, 2147483648
        %v4859 = vxor.u32 %v4843, 2147483648
        %v4860 = vxor.u32 %v4844, 2147483648
        %v4861 = vxor.u32 %v4845, 2147483648
        %v4862 = vxor.u32 %v4846, 2147483648
        %v4863 = vxor.u32 %v4847, 2147483648
        %v4864 = vxor.u32 %v4848, 2147483648
        %v4865 = vmul.f32 %v4849, 1.442695
        %v4866 = vpow.pop %v4865
        %v4867 = vmul.f32 %v4850, 1.442695
        %v4868 = vpow.pop %v4867
        %v4869 = vmul.f32 %v4851, 1.442695
        %v4870 = vpow.pop %v4869
        %v4871 = vmul.f32 %v4852, 1.442695
        %v4872 = vpow.pop %v4871
        %v4873 = vmul.f32 %v4853, 1.442695
        %v4874 = vpow.pop %v4873
        %v4875 = vmul.f32 %v4854, 1.442695
        %v4876 = vpow.pop %v4875
        %v4877 = vmul.f32 %v4855, 1.442695
        %v4878 = vpow.pop %v4877
        %v4879 = vmul.f32 %v4856, 1.442695
        %v4880 = vpow.pop %v4879
        %v4881 = vmul.f32 %v4857, 1.442695
        %v4882 = vpow.pop %v4881
        %v4883 = vmul.f32 %v4858, 1.442695
        %v4884 = vpow.pop %v4883
        %v4885 = vmul.f32 %v4859, 1.442695
        %v4886 = vpow.pop %v4885
        %v4887 = vmul.f32 %v4860, 1.442695
        %v4888 = vpow.pop %v4887
        %v4889 = vmul.f32 %v4861, 1.442695
        %v4890 = vpow.pop %v4889
        %v4891 = vmul.f32 %v4862, 1.442695
        %v4892 = vpow.pop %v4891
        %v4893 = vmul.f32 %v4863, 1.442695
        %v4894 = vpow.pop %v4893
        %v4895 = vmul.f32 %v4864, 1.442695
        %v4896 = vpow.pop %v4895
        %v4897 = vadd.f32 %v4866, 1.0
        %v4898 = vadd.f32 %v4868, 1.0
        %v4899 = vadd.f32 %v4870, 1.0
        %v4900 = vadd.f32 %v4872, 1.0
        %v4901 = vadd.f32 %v4874, 1.0
        %v4902 = vadd.f32 %v4876, 1.0
        %v4903 = vadd.f32 %v4878, 1.0
        %v4904 = vadd.f32 %v4880, 1.0
        %v4905 = vadd.f32 %v4882, 1.0
        %v4906 = vadd.f32 %v4884, 1.0
        %v4907 = vadd.f32 %v4886, 1.0
        %v4908 = vadd.f32 %v4888, 1.0
        %v4909 = vadd.f32 %v4890, 1.0
        %v4910 = vadd.f32 %v4892, 1.0
        %v4911 = vadd.f32 %v4894, 1.0
        %v4912 = vadd.f32 %v4896, 1.0
        %v4913 = vrcp.pop %v4897
        %v4914 = vmul.f32 1.0, %v4913
        %v4915 = vrcp.pop %v4898
        %v4916 = vmul.f32 1.0, %v4915
        %v4917 = vrcp.pop %v4899
        %v4918 = vmul.f32 1.0, %v4917
        %v4919 = vrcp.pop %v4900
        %v4920 = vmul.f32 1.0, %v4919
        %v4921 = vrcp.pop %v4901
        %v4922 = vmul.f32 1.0, %v4921
        %v4923 = vrcp.pop %v4902
        %v4924 = vmul.f32 1.0, %v4923
        %v4925 = vrcp.pop %v4903
        %v4926 = vmul.f32 1.0, %v4925
        %v4927 = vrcp.pop %v4904
        %v4928 = vmul.f32 1.0, %v4927
        %v4929 = vrcp.pop %v4905
        %v4930 = vmul.f32 1.0, %v4929
        %v4931 = vrcp.pop %v4906
        %v4932 = vmul.f32 1.0, %v4931
        %v4933 = vrcp.pop %v4907
        %v4934 = vmul.f32 1.0, %v4933
        %v4935 = vrcp.pop %v4908
        %v4936 = vmul.f32 1.0, %v4935
        %v4937 = vrcp.pop %v4909
        %v4938 = vmul.f32 1.0, %v4937
        %v4939 = vrcp.pop %v4910
        %v4940 = vmul.f32 1.0, %v4939
        %v4941 = vrcp.pop %v4911
        %v4942 = vmul.f32 1.0, %v4941
        %v4943 = vrcp.pop %v4912
        %v4944 = vmul.f32 1.0, %v4943
        %v4945 = vtanh.pop %v4834
        %v4946 = vtanh.pop %v4836
        %v4947 = vtanh.pop %v4838
        %v4948 = vtanh.pop %v4840
        %v4949 = vtanh.pop %v4842
        %v4950 = vtanh.pop %v4844
        %v4951 = vtanh.pop %v4846
        %v4952 = vtanh.pop %v4848
        %v4953 = vld [vmem:[#allocation4] sm:$0xff]
        %v4954 = vld [vmem:[#allocation4 + $0x8] sm:$0xff]
        %v4955 = vld [vmem:[#allocation4 + $0x10] sm:$0xff]
        %v4956 = vld [vmem:[#allocation4 + $0x18] sm:$0xff]
        %v4957 = vld [vmem:[#allocation4 + $0x20] sm:$0xff]
        %v4958 = vld [vmem:[#allocation4 + $0x28] sm:$0xff]
        %v4959 = vld [vmem:[#allocation4 + $0x30] sm:$0xff]
        %v4960 = vld [vmem:[#allocation4 + $0x38] sm:$0xff]
        %4969 = vrot.lane.b32.xlu0 %v4953, 64
        %v4970 = vpop.permute.xlu0 %4969
        %4971 = vrot.lane.b32.xlu0 %v4954, 64
        %v4972 = vpop.permute.xlu0 %4971
        %4973 = vrot.lane.b32.xlu0 %v4955, 64
        %v4974 = vpop.permute.xlu0 %4973
        %4975 = vrot.lane.b32.xlu0 %v4956, 64
        %v4976 = vpop.permute.xlu0 %4975
        %4977 = vrot.lane.b32.xlu0 %v4957, 64
        %v4978 = vpop.permute.xlu0 %4977
        %4979 = vrot.lane.b32.xlu0 %v4958, 64
        %v4980 = vpop.permute.xlu0 %4979
        %4981 = vrot.lane.b32.xlu0 %v4959, 64
        %v4982 = vpop.permute.xlu0 %4981
        %4983 = vrot.lane.b32.xlu0 %v4960, 64
        %v4984 = vpop.permute.xlu0 %4983
        %v4993 = vmul.f32 %v4914, %v4970
        %v4994 = vmul.f32 %v4918, %v4972
        %v4995 = vmul.f32 %v4922, %v4974
        %v4996 = vmul.f32 %v4926, %v4976
        %v4997 = vmul.f32 %v4930, %v4978
        %v4998 = vmul.f32 %v4934, %v4980
        %v4999 = vmul.f32 %v4938, %v4982
        %v5000 = vmul.f32 %v4942, %v4984
        %5009 = vrot.lane.b32.xlu0 %v4945, 64
        %v5010 = vpop.permute.xlu0 %5009
        %5011 = vrot.lane.b32.xlu0 %v4946, 64
        %v5012 = vpop.permute.xlu0 %5011
        %5013 = vrot.lane.b32.xlu0 %v4947, 64
        %v5014 = vpop.permute.xlu0 %5013
        %5015 = vrot.lane.b32.xlu0 %v4948, 64
        %v5016 = vpop.permute.xlu0 %5015
        %5017 = vrot.lane.b32.xlu0 %v4949, 64
        %v5018 = vpop.permute.xlu0 %5017
        %5019 = vrot.lane.b32.xlu0 %v4950, 64
        %v5020 = vpop.permute.xlu0 %5019
        %5021 = vrot.lane.b32.xlu0 %v4951, 64
        %v5022 = vpop.permute.xlu0 %5021
        %5023 = vrot.lane.b32.xlu0 %v4952, 64
        %v5024 = vpop.permute.xlu0 %5023
        %v5033 = vmul.f32 %v4914, %v5010
        %v5034 = vmul.f32 %v4918, %v5012
        %v5035 = vmul.f32 %v4922, %v5014
        %v5036 = vmul.f32 %v4926, %v5016
        %v5037 = vmul.f32 %v4930, %v5018
        %v5038 = vmul.f32 %v4934, %v5020
        %v5039 = vmul.f32 %v4938, %v5022
        %v5040 = vmul.f32 %v4942, %v5024
        %5049 = vrot.lane.b32.xlu0 %v5033, 64
        %v5050 = vpop.permute.xlu0 %5049
        %5051 = vrot.lane.b32.xlu0 %v5034, 64
        %v5052 = vpop.permute.xlu0 %5051
        %5053 = vrot.lane.b32.xlu0 %v5035, 64
        %v5054 = vpop.permute.xlu0 %5053
        %5055 = vrot.lane.b32.xlu0 %v5036, 64
        %v5056 = vpop.permute.xlu0 %5055
        %5057 = vrot.lane.b32.xlu0 %v5037, 64
        %v5058 = vpop.permute.xlu0 %5057
        %5059 = vrot.lane.b32.xlu0 %v5038, 64
        %v5060 = vpop.permute.xlu0 %5059
        %5061 = vrot.lane.b32.xlu0 %v5039, 64
        %v5062 = vpop.permute.xlu0 %5061
        %5063 = vrot.lane.b32.xlu0 %v5040, 64
        %v5064 = vpop.permute.xlu0 %5063
        %v5073 = vadd.f32 %v4993, %v5050
        %v5074 = vadd.f32 %v4994, %v5052
        %v5075 = vadd.f32 %v4995, %v5054
        %v5076 = vadd.f32 %v4996, %v5056
        %v5077 = vadd.f32 %v4997, %v5058
        %v5078 = vadd.f32 %v4998, %v5060
        %v5079 = vadd.f32 %v4999, %v5062
        %v5080 = vadd.f32 %v5000, %v5064
        %v5081 = vtanh.pop %v5073
        %v5082 = vtanh.pop %v5074
        %v5083 = vtanh.pop %v5075
        %v5084 = vtanh.pop %v5076
        %v5085 = vtanh.pop %v5077
        %v5086 = vtanh.pop %v5078
        %v5087 = vtanh.pop %v5079
        %v5088 = vtanh.pop %v5080
        %5097 = vrot.lane.b32.xlu0 %v5081, 64
        %v5098 = vpop.permute.xlu0 %5097
        %5099 = vrot.lane.b32.xlu0 %v5082, 64
        %v5100 = vpop.permute.xlu0 %5099
        %5101 = vrot.lane.b32.xlu0 %v5083, 64
        %v5102 = vpop.permute.xlu0 %5101
        %5103 = vrot.lane.b32.xlu0 %v5084, 64
        %v5104 = vpop.permute.xlu0 %5103
        %5105 = vrot.lane.b32.xlu0 %v5085, 64
        %v5106 = vpop.permute.xlu0 %5105
        %5107 = vrot.lane.b32.xlu0 %v5086, 64
        %v5108 = vpop.permute.xlu0 %5107
        %5109 = vrot.lane.b32.xlu0 %v5087, 64
        %v5110 = vpop.permute.xlu0 %5109
        %5111 = vrot.lane.b32.xlu0 %v5088, 64
        %v5112 = vpop.permute.xlu0 %5111
        %v5121 = vmul.f32 %v4916, %v5098
        %v5122 = vmul.f32 %v4920, %v5100
        %v5123 = vmul.f32 %v4924, %v5102
        %v5124 = vmul.f32 %v4928, %v5104
        %v5125 = vmul.f32 %v4932, %v5106
        %v5126 = vmul.f32 %v4936, %v5108
        %v5127 = vmul.f32 %v4940, %v5110
        %v5128 = vmul.f32 %v4944, %v5112
        %5137 = vrot.lane.b32.xlu0 %v5073, 64
        %v5138 = vpop.permute.xlu0 %5137
        %5139 = vrot.lane.b32.xlu0 %v5074, 64
        %v5140 = vpop.permute.xlu0 %5139
        %5141 = vrot.lane.b32.xlu0 %v5075, 64
        %v5142 = vpop.permute.xlu0 %5141
        %5143 = vrot.lane.b32.xlu0 %v5076, 64
        %v5144 = vpop.permute.xlu0 %5143
        %5145 = vrot.lane.b32.xlu0 %v5077, 64
        %v5146 = vpop.permute.xlu0 %5145
        %5147 = vrot.lane.b32.xlu0 %v5078, 64
        %v5148 = vpop.permute.xlu0 %5147
        %5149 = vrot.lane.b32.xlu0 %v5079, 64
        %v5150 = vpop.permute.xlu0 %5149
        %5151 = vrot.lane.b32.xlu0 %v5080, 64
        %v5152 = vpop.permute.xlu0 %5151
        %5161 = vst.msk [vmem:[#allocation4] sm:$0xff] %vm1313, %v5138
        %5162 = vst.msk [vmem:[#allocation4 + $0x8] sm:$0xff] %vm1313, %v5140
        %5163 = vst.msk [vmem:[#allocation4 + $0x10] sm:$0xff] %vm1313, %v5142
        %5164 = vst.msk [vmem:[#allocation4 + $0x18] sm:$0xff] %vm1313, %v5144
        %5165 = vst.msk [vmem:[#allocation4 + $0x20] sm:$0xff] %vm1313, %v5146
        %5166 = vst.msk [vmem:[#allocation4 + $0x28] sm:$0xff] %vm1313, %v5148
        %5167 = vst.msk [vmem:[#allocation4 + $0x30] sm:$0xff] %vm1313, %v5150
        %5168 = vst.msk [vmem:[#allocation4 + $0x38] sm:$0xff] %vm1313, %v5152
        %5169 = vst.msk [vmem:[#allocation3] sm:$0xff] %vm1313, %v5121
        %5170 = vst.msk [vmem:[#allocation3 + $0x8] sm:$0xff] %vm1313, %v5122
        %5171 = vst.msk [vmem:[#allocation3 + $0x10] sm:$0xff] %vm1313, %v5123
        %5172 = vst.msk [vmem:[#allocation3 + $0x18] sm:$0xff] %vm1313, %v5124
        %5173 = vst.msk [vmem:[#allocation3 + $0x20] sm:$0xff] %vm1313, %v5125
        %5174 = vst.msk [vmem:[#allocation3 + $0x28] sm:$0xff] %vm1313, %v5126
        %5175 = vst.msk [vmem:[#allocation3 + $0x30] sm:$0xff] %vm1313, %v5127
        %5176 = vst.msk [vmem:[#allocation3 + $0x38] sm:$0xff] %vm1313, %v5128
        %v5177 = vld [vmem:[#allocation5] sm:$0xff]
        %v5178 = vld [vmem:[#allocation5 + $0x8] sm:$0xff]
        %v5179 = vld [vmem:[#allocation5 + $0x10] sm:$0xff]
        %v5180 = vld [vmem:[#allocation5 + $0x18] sm:$0xff]
        %v5181 = vld [vmem:[#allocation5 + $0x20] sm:$0xff]
        %v5182 = vld [vmem:[#allocation5 + $0x28] sm:$0xff]
        %v5183 = vld [vmem:[#allocation5 + $0x30] sm:$0xff]
        %v5184 = vld [vmem:[#allocation5 + $0x38] sm:$0xff]
        %v5185 = vmax.f32 %v5121, 0.0
        %v5186 = vmax.f32 %v5122, 0.0
        %v5187 = vmax.f32 %v5123, 0.0
        %v5188 = vmax.f32 %v5124, 0.0
        %v5189 = vmax.f32 %v5125, 0.0
        %v5190 = vmax.f32 %v5126, 0.0
        %v5191 = vmax.f32 %v5127, 0.0
        %v5192 = vmax.f32 %v5128, 0.0
        %v5193 = vadd.f32 %v5177, %v5185
        %v5194 = vadd.f32 %v5178, %v5186
        %v5195 = vadd.f32 %v5179, %v5187
        %v5196 = vadd.f32 %v5180, %v5188
        %v5197 = vadd.f32 %v5181, %v5189
        %v5198 = vadd.f32 %v5182, %v5190
        %v5199 = vadd.f32 %v5183, %v5191
        %v5200 = vadd.f32 %v5184, %v5192
        %5201 = vst.msk [vmem:[#allocation5] sm:$0xff] %vm1313, %v5193
        %5202 = vst.msk [vmem:[#allocation5 + $0x8] sm:$0xff] %vm1313, %v5194
        %5203 = vst.msk [vmem:[#allocation5 + $0x10] sm:$0xff] %vm1313, %v5195
        %5204 = vst.msk [vmem:[#allocation5 + $0x18] sm:$0xff] %vm1313, %v5196
        %5205 = vst.msk [vmem:[#allocation5 + $0x20] sm:$0xff] %vm1313, %v5197
        %5206 = vst.msk [vmem:[#allocation5 + $0x28] sm:$0xff] %vm1313, %v5198
        %5207 = vst.msk [vmem:[#allocation5 + $0x30] sm:$0xff] %vm1313, %v5199
        %5208 = vst.msk [vmem:[#allocation5 + $0x38] sm:$0xff] %vm1313, %v5200
        %v5209 = vld [vmem:[#allocation2 + $0x70] sm:$0xff]
        %v5210 = vld [vmem:[#allocation2 + $0x78] sm:$0xff]
        %v5211 = vld [vmem:[#allocation2 + $0xf0] sm:$0xff]
        %v5212 = vld [vmem:[#allocation2 + $0xf8] sm:$0xff]
        %v5213 = vld [vmem:[#allocation2 + $0x170] sm:$0xff]
        %v5214 = vld [vmem:[#allocation2 + $0x178] sm:$0xff]
        %v5215 = vld [vmem:[#allocation2 + $0x1f0] sm:$0xff]
        %v5216 = vld [vmem:[#allocation2 + $0x1f8] sm:$0xff]
        %v5217 = vld [vmem:[#allocation2 + $0x270] sm:$0xff]
        %v5218 = vld [vmem:[#allocation2 + $0x278] sm:$0xff]
        %v5219 = vld [vmem:[#allocation2 + $0x2f0] sm:$0xff]
        %v5220 = vld [vmem:[#allocation2 + $0x2f8] sm:$0xff]
        %v5221 = vld [vmem:[#allocation2 + $0x370] sm:$0xff]
        %v5222 = vld [vmem:[#allocation2 + $0x378] sm:$0xff]
        %v5223 = vld [vmem:[#allocation2 + $0x3f0] sm:$0xff]
        %v5224 = vld [vmem:[#allocation2 + $0x3f8] sm:$0xff]
        %v5225 = vld [vmem:[#allocation3] sm:$0xff]
        %v5226 = vld [vmem:[#allocation3 + $0x8] sm:$0xff]
        %v5227 = vld [vmem:[#allocation3 + $0x10] sm:$0xff]
        %v5228 = vld [vmem:[#allocation3 + $0x18] sm:$0xff]
        %v5229 = vld [vmem:[#allocation3 + $0x20] sm:$0xff]
        %v5230 = vld [vmem:[#allocation3 + $0x28] sm:$0xff]
        %v5231 = vld [vmem:[#allocation3 + $0x30] sm:$0xff]
        %v5232 = vld [vmem:[#allocation3 + $0x38] sm:$0xff]
        %v5233 = vld [vmem:[#allocation9] sm:$0xff]
        %v5234 = vld [vmem:[#allocation9 + $0x8] sm:$0xff]
        %v5235 = vld [vmem:[#allocation9 + $0x10] sm:$0xff]
        %v5236 = vld [vmem:[#allocation9 + $0x18] sm:$0xff]
        %v5237 = vld [vmem:[#allocation9 + $0x20] sm:$0xff]
        %v5238 = vld [vmem:[#allocation9 + $0x28] sm:$0xff]
        %v5239 = vld [vmem:[#allocation9 + $0x30] sm:$0xff]
        %v5240 = vld [vmem:[#allocation9 + $0x38] sm:$0xff]
        %v5241 = vld [vmem:[#allocation9 + $0x40] sm:$0xff]
        %v5242 = vld [vmem:[#allocation9 + $0x48] sm:$0xff]
        %v5243 = vld [vmem:[#allocation9 + $0x50] sm:$0xff]
        %v5244 = vld [vmem:[#allocation9 + $0x58] sm:$0xff]
        %v5245 = vld [vmem:[#allocation9 + $0x60] sm:$0xff]
        %v5246 = vld [vmem:[#allocation9 + $0x68] sm:$0xff]
        %v5247 = vld [vmem:[#allocation9 + $0x70] sm:$0xff]
        %v5248 = vld [vmem:[#allocation9 + $0x78] sm:$0xff]
        %v5250 = vsel %vm1313, %v5225, 0
        %v5253 = vsel %vm1313, %v5226, 0
        %v5256 = vsel %vm1313, %v5227, 0
        %v5259 = vsel %vm1313, %v5228, 0
        %v5262 = vsel %vm1313, %v5229, 0
        %v5265 = vsel %vm1313, %v5230, 0
        %v5268 = vsel %vm1313, %v5231, 0
        %v5271 = vsel %vm1313, %v5232, 0
        %5273 = vmatprep.subr.mxu0 %v5234
        %5274 = vmatpush1.msra.mxu0 %v5233
        %5275 = vmatprep.subr.mxu0 %v5236
        %5276 = vmatpush1.msra.mxu0 %v5235
        %5277 = vmatprep.subr.mxu0 %v5238
        %5278 = vmatpush1.msra.mxu0 %v5237
        %5279 = vmatprep.subr.mxu0 %v5240
        %5280 = vmatpush1.msra.mxu0 %v5239
        %5281 = vmatprep.subr.mxu0 %v5242
        %5282 = vmatpush1.msra.mxu0 %v5241
        %5283 = vmatprep.subr.mxu0 %v5244
        %5284 = vmatpush1.msra.mxu0 %v5243
        %5285 = vmatprep.subr.mxu0 %v5246
        %5286 = vmatpush1.msra.mxu0 %v5245
        %5287 = vmatprep.subr.mxu0 %v5248
        %5288 = vmatpush1.msra.mxu0 %v5247
        %5289 = vmatprep.subr.mxu0 0.0
        %5290 = vmatpush1.msra.mxu0 0.0
        %5291 = vmatprep.subr.mxu0 0.0
        %5292 = vmatpush1.msra.mxu0 0.0
        %5293 = vmatprep.subr.mxu0 0.0
        %5294 = vmatpush1.msra.mxu0 0.0
        %5295 = vmatprep.subr.mxu0 0.0
        %5296 = vmatpush1.msra.mxu0 0.0
        %5297 = vmatprep.subr.mxu0 0.0
        %5298 = vmatpush1.msra.mxu0 0.0
        %5299 = vmatprep.subr.mxu0 0.0
        %5300 = vmatpush1.msra.mxu0 0.0
        %5301 = vmatprep.subr.mxu0 0.0
        %5302 = vmatpush1.msra.mxu0 0.0
        %5303 = vmatprep.subr.mxu0 0.0
        %5304 = vmatpush1.msra.mxu0 0.0
        %5305 = vmatprep.subr.mxu0 0.0
        %5306 = vmatpush1.msra.mxu0 0.0
        %5307 = vmatprep.subr.mxu0 0.0
        %5308 = vmatpush1.msra.mxu0 0.0
        %5309 = vmatprep.subr.mxu0 0.0
        %5310 = vmatpush1.msra.mxu0 0.0
        %5311 = vmatprep.subr.mxu0 0.0
        %5312 = vmatpush1.msra.mxu0 0.0
        %5313 = vmatprep.subr.mxu0 0.0
        %5314 = vmatpush1.msra.mxu0 0.0
        %5315 = vmatprep.subr.mxu0 0.0
        %5316 = vmatpush1.msra.mxu0 0.0
        %5317 = vmatprep.subr.mxu0 0.0
        %5318 = vmatpush1.msra.mxu0 0.0
        %5319 = vmatprep.subr.mxu0 0.0
        %5320 = vmatpush1.msra.mxu0 0.0
        %5321 = vmatprep.subr.mxu0 0.0
        %5322 = vmatpush1.msra.mxu0 0.0
        %5323 = vmatprep.subr.mxu0 0.0
        %5324 = vmatpush1.msra.mxu0 0.0
        %5325 = vmatprep.subr.mxu0 0.0
        %5326 = vmatpush1.msra.mxu0 0.0
        %5327 = vmatprep.subr.mxu0 0.0
        %5328 = vmatpush1.msra.mxu0 0.0
        %5329 = vmatprep.subr.mxu0 0.0
        %5330 = vmatpush1.msra.mxu0 0.0
        %5331 = vmatprep.subr.mxu0 0.0
        %5332 = vmatpush1.msra.mxu0 0.0
        %5333 = vmatprep.subr.mxu0 0.0
        %5334 = vmatpush1.msra.mxu0 0.0
        %5335 = vmatprep.subr.mxu0 0.0
        %5336 = vmatpush1.msra.mxu0 0.0
        %5337 = vmatprep.mubr.f32.mxu0 0.0
        %5338 = vmatmul.mubr.f32.gmra.mrb[0].mxu0 %v5250
        %v5339 = vpop.f32.mrb[0].mxu0
        %v5340 = vadd.f32 0.0, %v5339
        %v5341 = vpop.f32.mrb[0].mxu0
        %v5342 = vadd.f32 0.0, %v5341
        %5343 = vmatprep.mubr.f32.mxu0 0.0
        %5344 = vmatmul.mubr.f32.gmra.mrb[0].mxu0 %v5253
        %v5345 = vpop.f32.mrb[0].mxu0
        %v5346 = vadd.f32 0.0, %v5345
        %v5347 = vpop.f32.mrb[0].mxu0
        %v5348 = vadd.f32 0.0, %v5347
        %5349 = vmatprep.mubr.f32.mxu0 0.0
        %5350 = vmatmul.mubr.f32.gmra.mrb[0].mxu0 %v5256
        %v5351 = vpop.f32.mrb[0].mxu0
        %v5352 = vadd.f32 0.0, %v5351
        %v5353 = vpop.f32.mrb[0].mxu0
        %v5354 = vadd.f32 0.0, %v5353
        %5355 = vmatprep.mubr.f32.mxu0 0.0
        %5356 = vmatmul.mubr.f32.gmra.mrb[0].mxu0 %v5259
        %v5357 = vpop.f32.mrb[0].mxu0
        %v5358 = vadd.f32 0.0, %v5357
        %v5359 = vpop.f32.mrb[0].mxu0
        %v5360 = vadd.f32 0.0, %v5359
        %5361 = vmatprep.mubr.f32.mxu0 0.0
        %5362 = vmatmul.mubr.f32.gmra.mrb[0].mxu0 %v5262
        %v5363 = vpop.f32.mrb[0].mxu0
        %v5364 = vadd.f32 0.0, %v5363
        %v5365 = vpop.f32.mrb[0].mxu0
        %v5366 = vadd.f32 0.0, %v5365
        %5367 = vmatprep.mubr.f32.mxu0 0.0
        %5368 = vmatmul.mubr.f32.gmra.mrb[0].mxu0 %v5265
        %v5369 = vpop.f32.mrb[0].mxu0
        %v5370 = vadd.f32 0.0, %v5369
        %v5371 = vpop.f32.mrb[0].mxu0
        %v5372 = vadd.f32 0.0, %v5371
        %5373 = vmatprep.mubr.f32.mxu0 0.0
        %5374 = vmatmul.mubr.f32.gmra.mrb[0].mxu0 %v5268
        %v5375 = vpop.f32.mrb[0].mxu0
        %v5376 = vadd.f32 0.0, %v5375
        %v5377 = vpop.f32.mrb[0].mxu0
        %v5378 = vadd.f32 0.0, %v5377
        %5379 = vmatprep.mubr.f32.mxu0 0.0
        %5380 = vmatmul.mubr.f32.gmra.mrb[0].mxu0 %v5271
        %v5381 = vpop.f32.mrb[0].mxu0
        %v5382 = vadd.f32 0.0, %v5381
        %v5383 = vpop.f32.mrb[0].mxu0
        %v5384 = vadd.f32 0.0, %v5383
        %5385 = vdwg.mxu0
        %v5386 = vadd.f32 %v5209, %v5340
        %v5387 = vadd.f32 %v5210, %v5342
        %v5388 = vadd.f32 %v5211, %v5346
        %v5389 = vadd.f32 %v5212, %v5348
        %v5390 = vadd.f32 %v5213, %v5352
        %v5391 = vadd.f32 %v5214, %v5354
        %v5392 = vadd.f32 %v5215, %v5358
        %v5393 = vadd.f32 %v5216, %v5360
        %v5394 = vadd.f32 %v5217, %v5364
        %v5395 = vadd.f32 %v5218, %v5366
        %v5396 = vadd.f32 %v5219, %v5370
        %v5397 = vadd.f32 %v5220, %v5372
        %v5398 = vadd.f32 %v5221, %v5376
        %v5399 = vadd.f32 %v5222, %v5378
        %v5400 = vadd.f32 %v5223, %v5382
        %v5401 = vadd.f32 %v5224, %v5384
        %v5402 = vxor.u32 %v5386, 2147483648
        %v5403 = vxor.u32 %v5387, 2147483648
        %v5404 = vxor.u32 %v5388, 2147483648
        %v5405 = vxor.u32 %v5389, 2147483648
        %v5406 = vxor.u32 %v5390, 2147483648
        %v5407 = vxor.u32 %v5391, 2147483648
        %v5408 = vxor.u32 %v5392, 2147483648
        %v5409 = vxor.u32 %v5393, 2147483648
        %v5410 = vxor.u32 %v5394, 2147483648
        %v5411 = vxor.u32 %v5395, 2147483648
        %v5412 = vxor.u32 %v5396, 2147483648
        %v5413 = vxor.u32 %v5397, 2147483648
        %v5414 = vxor.u32 %v5398, 2147483648
        %v5415 = vxor.u32 %v5399, 2147483648
        %v5416 = vxor.u32 %v5400, 2147483648
        %v5417 = vxor.u32 %v5401, 2147483648
        %v5418 = vmul.f32 %v5402, 1.442695
        %v5419 = vpow.pop %v5418
        %v5420 = vmul.f32 %v5403, 1.442695
        %v5421 = vpow.pop %v5420
        %v5422 = vmul.f32 %v5404, 1.442695
        %v5423 = vpow.pop %v5422
        %v5424 = vmul.f32 %v5405, 1.442695
        %v5425 = vpow.pop %v5424
        %v5426 = vmul.f32 %v5406, 1.442695
        %v5427 = vpow.pop %v5426
        %v5428 = vmul.f32 %v5407, 1.442695
        %v5429 = vpow.pop %v5428
        %v5430 = vmul.f32 %v5408, 1.442695
        %v5431 = vpow.pop %v5430
        %v5432 = vmul.f32 %v5409, 1.442695
        %v5433 = vpow.pop %v5432
        %v5434 = vmul.f32 %v5410, 1.442695
        %v5435 = vpow.pop %v5434
        %v5436 = vmul.f32 %v5411, 1.442695
        %v5437 = vpow.pop %v5436
        %v5438 = vmul.f32 %v5412, 1.442695
        %v5439 = vpow.pop %v5438
        %v5440 = vmul.f32 %v5413, 1.442695
        %v5441 = vpow.pop %v5440
        %v5442 = vmul.f32 %v5414, 1.442695
        %v5443 = vpow.pop %v5442
        %v5444 = vmul.f32 %v5415, 1.442695
        %v5445 = vpow.pop %v5444
        %v5446 = vmul.f32 %v5416, 1.442695
        %v5447 = vpow.pop %v5446
        %v5448 = vmul.f32 %v5417, 1.442695
        %v5449 = vpow.pop %v5448
        %v5450 = vadd.f32 %v5419, 1.0
        %v5451 = vadd.f32 %v5421, 1.0
        %v5452 = vadd.f32 %v5423, 1.0
        %v5453 = vadd.f32 %v5425, 1.0
        %v5454 = vadd.f32 %v5427, 1.0
        %v5455 = vadd.f32 %v5429, 1.0
        %v5456 = vadd.f32 %v5431, 1.0
        %v5457 = vadd.f32 %v5433, 1.0
        %v5458 = vadd.f32 %v5435, 1.0
        %v5459 = vadd.f32 %v5437, 1.0
        %v5460 = vadd.f32 %v5439, 1.0
        %v5461 = vadd.f32 %v5441, 1.0
        %v5462 = vadd.f32 %v5443, 1.0
        %v5463 = vadd.f32 %v5445, 1.0
        %v5464 = vadd.f32 %v5447, 1.0
        %v5465 = vadd.f32 %v5449, 1.0
        %v5466 = vrcp.pop %v5450
        %v5467 = vmul.f32 1.0, %v5466
        %v5468 = vrcp.pop %v5451
        %v5469 = vmul.f32 1.0, %v5468
        %v5470 = vrcp.pop %v5452
        %v5471 = vmul.f32 1.0, %v5470
        %v5472 = vrcp.pop %v5453
        %v5473 = vmul.f32 1.0, %v5472
        %v5474 = vrcp.pop %v5454
        %v5475 = vmul.f32 1.0, %v5474
        %v5476 = vrcp.pop %v5455
        %v5477 = vmul.f32 1.0, %v5476
        %v5478 = vrcp.pop %v5456
        %v5479 = vmul.f32 1.0, %v5478
        %v5480 = vrcp.pop %v5457
        %v5481 = vmul.f32 1.0, %v5480
        %v5482 = vrcp.pop %v5458
        %v5483 = vmul.f32 1.0, %v5482
        %v5484 = vrcp.pop %v5459
        %v5485 = vmul.f32 1.0, %v5484
        %v5486 = vrcp.pop %v5460
        %v5487 = vmul.f32 1.0, %v5486
        %v5488 = vrcp.pop %v5461
        %v5489 = vmul.f32 1.0, %v5488
        %v5490 = vrcp.pop %v5462
        %v5491 = vmul.f32 1.0, %v5490
        %v5492 = vrcp.pop %v5463
        %v5493 = vmul.f32 1.0, %v5492
        %v5494 = vrcp.pop %v5464
        %v5495 = vmul.f32 1.0, %v5494
        %v5496 = vrcp.pop %v5465
        %v5497 = vmul.f32 1.0, %v5496
        %v5498 = vtanh.pop %v5387
        %v5499 = vtanh.pop %v5389
        %v5500 = vtanh.pop %v5391
        %v5501 = vtanh.pop %v5393
        %v5502 = vtanh.pop %v5395
        %v5503 = vtanh.pop %v5397
        %v5504 = vtanh.pop %v5399
        %v5505 = vtanh.pop %v5401
        %v5506 = vld [vmem:[#allocation4] sm:$0xff]
        %v5507 = vld [vmem:[#allocation4 + $0x8] sm:$0xff]
        %v5508 = vld [vmem:[#allocation4 + $0x10] sm:$0xff]
        %v5509 = vld [vmem:[#allocation4 + $0x18] sm:$0xff]
        %v5510 = vld [vmem:[#allocation4 + $0x20] sm:$0xff]
        %v5511 = vld [vmem:[#allocation4 + $0x28] sm:$0xff]
        %v5512 = vld [vmem:[#allocation4 + $0x30] sm:$0xff]
        %v5513 = vld [vmem:[#allocation4 + $0x38] sm:$0xff]
        %5522 = vrot.lane.b32.xlu0 %v5506, 64
        %v5523 = vpop.permute.xlu0 %5522
        %5524 = vrot.lane.b32.xlu0 %v5507, 64
        %v5525 = vpop.permute.xlu0 %5524
        %5526 = vrot.lane.b32.xlu0 %v5508, 64
        %v5527 = vpop.permute.xlu0 %5526
        %5528 = vrot.lane.b32.xlu0 %v5509, 64
        %v5529 = vpop.permute.xlu0 %5528
        %5530 = vrot.lane.b32.xlu0 %v5510, 64
        %v5531 = vpop.permute.xlu0 %5530
        %5532 = vrot.lane.b32.xlu0 %v5511, 64
        %v5533 = vpop.permute.xlu0 %5532
        %5534 = vrot.lane.b32.xlu0 %v5512, 64
        %v5535 = vpop.permute.xlu0 %5534
        %5536 = vrot.lane.b32.xlu0 %v5513, 64
        %v5537 = vpop.permute.xlu0 %5536
        %v5546 = vmul.f32 %v5467, %v5523
        %v5547 = vmul.f32 %v5471, %v5525
        %v5548 = vmul.f32 %v5475, %v5527
        %v5549 = vmul.f32 %v5479, %v5529
        %v5550 = vmul.f32 %v5483, %v5531
        %v5551 = vmul.f32 %v5487, %v5533
        %v5552 = vmul.f32 %v5491, %v5535
        %v5553 = vmul.f32 %v5495, %v5537
        %5562 = vrot.lane.b32.xlu0 %v5498, 64
        %v5563 = vpop.permute.xlu0 %5562
        %5564 = vrot.lane.b32.xlu0 %v5499, 64
        %v5565 = vpop.permute.xlu0 %5564
        %5566 = vrot.lane.b32.xlu0 %v5500, 64
        %v5567 = vpop.permute.xlu0 %5566
        %5568 = vrot.lane.b32.xlu0 %v5501, 64
        %v5569 = vpop.permute.xlu0 %5568
        %5570 = vrot.lane.b32.xlu0 %v5502, 64
        %v5571 = vpop.permute.xlu0 %5570
        %5572 = vrot.lane.b32.xlu0 %v5503, 64
        %v5573 = vpop.permute.xlu0 %5572
        %5574 = vrot.lane.b32.xlu0 %v5504, 64
        %v5575 = vpop.permute.xlu0 %5574
        %5576 = vrot.lane.b32.xlu0 %v5505, 64
        %v5577 = vpop.permute.xlu0 %5576
        %v5586 = vmul.f32 %v5467, %v5563
        %v5587 = vmul.f32 %v5471, %v5565
        %v5588 = vmul.f32 %v5475, %v5567
        %v5589 = vmul.f32 %v5479, %v5569
        %v5590 = vmul.f32 %v5483, %v5571
        %v5591 = vmul.f32 %v5487, %v5573
        %v5592 = vmul.f32 %v5491, %v5575
        %v5593 = vmul.f32 %v5495, %v5577
        %5602 = vrot.lane.b32.xlu0 %v5586, 64
        %v5603 = vpop.permute.xlu0 %5602
        %5604 = vrot.lane.b32.xlu0 %v5587, 64
        %v5605 = vpop.permute.xlu0 %5604
        %5606 = vrot.lane.b32.xlu0 %v5588, 64
        %v5607 = vpop.permute.xlu0 %5606
        %5608 = vrot.lane.b32.xlu0 %v5589, 64
        %v5609 = vpop.permute.xlu0 %5608
        %5610 = vrot.lane.b32.xlu0 %v5590, 64
        %v5611 = vpop.permute.xlu0 %5610
        %5612 = vrot.lane.b32.xlu0 %v5591, 64
        %v5613 = vpop.permute.xlu0 %5612
        %5614 = vrot.lane.b32.xlu0 %v5592, 64
        %v5615 = vpop.permute.xlu0 %5614
        %5616 = vrot.lane.b32.xlu0 %v5593, 64
        %v5617 = vpop.permute.xlu0 %5616
        %v5626 = vadd.f32 %v5546, %v5603
        %v5627 = vadd.f32 %v5547, %v5605
        %v5628 = vadd.f32 %v5548, %v5607
        %v5629 = vadd.f32 %v5549, %v5609
        %v5630 = vadd.f32 %v5550, %v5611
        %v5631 = vadd.f32 %v5551, %v5613
        %v5632 = vadd.f32 %v5552, %v5615
        %v5633 = vadd.f32 %v5553, %v5617
        %v5634 = vtanh.pop %v5626
        %v5635 = vtanh.pop %v5627
        %v5636 = vtanh.pop %v5628
        %v5637 = vtanh.pop %v5629
        %v5638 = vtanh.pop %v5630
        %v5639 = vtanh.pop %v5631
        %v5640 = vtanh.pop %v5632
        %v5641 = vtanh.pop %v5633
        %5650 = vrot.lane.b32.xlu0 %v5634, 64
        %v5651 = vpop.permute.xlu0 %5650
        %5652 = vrot.lane.b32.xlu0 %v5635, 64
        %v5653 = vpop.permute.xlu0 %5652
        %5654 = vrot.lane.b32.xlu0 %v5636, 64
        %v5655 = vpop.permute.xlu0 %5654
        %5656 = vrot.lane.b32.xlu0 %v5637, 64
        %v5657 = vpop.permute.xlu0 %5656
        %5658 = vrot.lane.b32.xlu0 %v5638, 64
        %v5659 = vpop.permute.xlu0 %5658
        %5660 = vrot.lane.b32.xlu0 %v5639, 64
        %v5661 = vpop.permute.xlu0 %5660
        %5662 = vrot.lane.b32.xlu0 %v5640, 64
        %v5663 = vpop.permute.xlu0 %5662
        %5664 = vrot.lane.b32.xlu0 %v5641, 64
        %v5665 = vpop.permute.xlu0 %5664
        %v5674 = vmul.f32 %v5469, %v5651
        %v5675 = vmul.f32 %v5473, %v5653
        %v5676 = vmul.f32 %v5477, %v5655
        %v5677 = vmul.f32 %v5481, %v5657
        %v5678 = vmul.f32 %v5485, %v5659
        %v5679 = vmul.f32 %v5489, %v5661
        %v5680 = vmul.f32 %v5493, %v5663
        %v5681 = vmul.f32 %v5497, %v5665
        %5690 = vrot.lane.b32.xlu0 %v5626, 64
        %v5691 = vpop.permute.xlu0 %5690
        %5692 = vrot.lane.b32.xlu0 %v5627, 64
        %v5693 = vpop.permute.xlu0 %5692
        %5694 = vrot.lane.b32.xlu0 %v5628, 64
        %v5695 = vpop.permute.xlu0 %5694
        %5696 = vrot.lane.b32.xlu0 %v5629, 64
        %v5697 = vpop.permute.xlu0 %5696
        %5698 = vrot.lane.b32.xlu0 %v5630, 64
        %v5699 = vpop.permute.xlu0 %5698
        %5700 = vrot.lane.b32.xlu0 %v5631, 64
        %v5701 = vpop.permute.xlu0 %5700
        %5702 = vrot.lane.b32.xlu0 %v5632, 64
        %v5703 = vpop.permute.xlu0 %5702
        %5704 = vrot.lane.b32.xlu0 %v5633, 64
        %v5705 = vpop.permute.xlu0 %5704
        %5714 = vst.msk [vmem:[#allocation4] sm:$0xff] %vm1313, %v5691
        %5715 = vst.msk [vmem:[#allocation4 + $0x8] sm:$0xff] %vm1313, %v5693
        %5716 = vst.msk [vmem:[#allocation4 + $0x10] sm:$0xff] %vm1313, %v5695
        %5717 = vst.msk [vmem:[#allocation4 + $0x18] sm:$0xff] %vm1313, %v5697
        %5718 = vst.msk [vmem:[#allocation4 + $0x20] sm:$0xff] %vm1313, %v5699
        %5719 = vst.msk [vmem:[#allocation4 + $0x28] sm:$0xff] %vm1313, %v5701
        %5720 = vst.msk [vmem:[#allocation4 + $0x30] sm:$0xff] %vm1313, %v5703
        %5721 = vst.msk [vmem:[#allocation4 + $0x38] sm:$0xff] %vm1313, %v5705
        %5722 = vst.msk [vmem:[#allocation3] sm:$0xff] %vm1313, %v5674
        %5723 = vst.msk [vmem:[#allocation3 + $0x8] sm:$0xff] %vm1313, %v5675
        %5724 = vst.msk [vmem:[#allocation3 + $0x10] sm:$0xff] %vm1313, %v5676
        %5725 = vst.msk [vmem:[#allocation3 + $0x18] sm:$0xff] %vm1313, %v5677
        %5726 = vst.msk [vmem:[#allocation3 + $0x20] sm:$0xff] %vm1313, %v5678
        %5727 = vst.msk [vmem:[#allocation3 + $0x28] sm:$0xff] %vm1313, %v5679
        %5728 = vst.msk [vmem:[#allocation3 + $0x30] sm:$0xff] %vm1313, %v5680
        %5729 = vst.msk [vmem:[#allocation3 + $0x38] sm:$0xff] %vm1313, %v5681
        %v5730 = vld [vmem:[#allocation5] sm:$0xff]
        %v5731 = vld [vmem:[#allocation5 + $0x8] sm:$0xff]
        %v5732 = vld [vmem:[#allocation5 + $0x10] sm:$0xff]
        %v5733 = vld [vmem:[#allocation5 + $0x18] sm:$0xff]
        %v5734 = vld [vmem:[#allocation5 + $0x20] sm:$0xff]
        %v5735 = vld [vmem:[#allocation5 + $0x28] sm:$0xff]
        %v5736 = vld [vmem:[#allocation5 + $0x30] sm:$0xff]
        %v5737 = vld [vmem:[#allocation5 + $0x38] sm:$0xff]
        %v5738 = vmax.f32 %v5674, 0.0
        %v5739 = vmax.f32 %v5675, 0.0
        %v5740 = vmax.f32 %v5676, 0.0
        %v5741 = vmax.f32 %v5677, 0.0
        %v5742 = vmax.f32 %v5678, 0.0
        %v5743 = vmax.f32 %v5679, 0.0
        %v5744 = vmax.f32 %v5680, 0.0
        %v5745 = vmax.f32 %v5681, 0.0
        %v5746 = vadd.f32 %v5730, %v5738
        %v5747 = vadd.f32 %v5731, %v5739
        %v5748 = vadd.f32 %v5732, %v5740
        %v5749 = vadd.f32 %v5733, %v5741
        %v5750 = vadd.f32 %v5734, %v5742
        %v5751 = vadd.f32 %v5735, %v5743
        %v5752 = vadd.f32 %v5736, %v5744
        %v5753 = vadd.f32 %v5737, %v5745
        %5754 = vst.msk [vmem:[#allocation5] sm:$0xff] %vm1313, %v5746
        %5755 = vst.msk [vmem:[#allocation5 + $0x8] sm:$0xff] %vm1313, %v5747
        %5756 = vst.msk [vmem:[#allocation5 + $0x10] sm:$0xff] %vm1313, %v5748
        %5757 = vst.msk [vmem:[#allocation5 + $0x18] sm:$0xff] %vm1313, %v5749
        %5758 = vst.msk [vmem:[#allocation5 + $0x20] sm:$0xff] %vm1313, %v5750
        %5759 = vst.msk [vmem:[#allocation5 + $0x28] sm:$0xff] %vm1313, %v5751
        %5760 = vst.msk [vmem:[#allocation5 + $0x30] sm:$0xff] %vm1313, %v5752
        %5761 = vst.msk [vmem:[#allocation5 + $0x38] sm:$0xff] %vm1313, %v5753
        %v5762 = vld [vmem:[#allocation5] sm:$0xff]
        %v5763 = vld [vmem:[#allocation5 + $0x8] sm:$0xff]
        %v5764 = vld [vmem:[#allocation5 + $0x10] sm:$0xff]
        %v5765 = vld [vmem:[#allocation5 + $0x18] sm:$0xff]
        %v5766 = vld [vmem:[#allocation5 + $0x20] sm:$0xff]
        %v5767 = vld [vmem:[#allocation5 + $0x28] sm:$0xff]
        %v5768 = vld [vmem:[#allocation5 + $0x30] sm:$0xff]
        %v5769 = vld [vmem:[#allocation5 + $0x38] sm:$0xff]
        %v5770 = vmul.f32 %v5762, 0.125
        %v5771 = vmul.f32 %v5763, 0.125
        %v5772 = vmul.f32 %v5764, 0.125
        %v5773 = vmul.f32 %v5765, 0.125
        %v5774 = vmul.f32 %v5766, 0.125
        %v5775 = vmul.f32 %v5767, 0.125
        %v5776 = vmul.f32 %v5768, 0.125
        %v5777 = vmul.f32 %v5769, 0.125
        %v5778 = vld [vmem:[%s4] sm:$0xff]
        %v5779 = vld [vmem:[%s4 + $0x8] sm:$0xff]
        %v5780 = vld [vmem:[%s4 + $0x10] sm:$0xff]
        %v5781 = vld [vmem:[%s4 + $0x18] sm:$0xff]
        %v5782 = vld [vmem:[%s4 + $0x20] sm:$0xff]
        %v5783 = vld [vmem:[%s4 + $0x28] sm:$0xff]
        %v5784 = vld [vmem:[%s4 + $0x30] sm:$0xff]
        %v5785 = vld [vmem:[%s4 + $0x38] sm:$0xff]
        %v5786 = vld [vmem:[%s5] sm:$0x1]
        %v5788 = vlaneseq
        %v5789 = vshrl.u32 %v5788, 7
        %v5790 = vsub.s32 0, %v5789
        %v5791 = vrot.slane %v5786, %v5790
        %v5794 = vsel %vm1313, %v5770, 0
        %v5797 = vsel %vm1313, %v5771, 0
        %v5800 = vsel %vm1313, %v5772, 0
        %v5803 = vsel %vm1313, %v5773, 0
        %v5806 = vsel %vm1313, %v5774, 0
        %v5809 = vsel %vm1313, %v5775, 0
        %v5812 = vsel %vm1313, %v5776, 0
        %v5815 = vsel %vm1313, %v5777, 0
        %5817 = vmatprep.subr.mxu0 0.0
        %5818 = vmatpush1.msra.mxu0 %v5778
        %5819 = vmatprep.subr.mxu0 0.0
        %5820 = vmatpush1.msra.mxu0 %v5779
        %5821 = vmatprep.subr.mxu0 0.0
        %5822 = vmatpush1.msra.mxu0 %v5780
        %5823 = vmatprep.subr.mxu0 0.0
        %5824 = vmatpush1.msra.mxu0 %v5781
        %5825 = vmatprep.subr.mxu0 0.0
        %5826 = vmatpush1.msra.mxu0 %v5782
        %5827 = vmatprep.subr.mxu0 0.0
        %5828 = vmatpush1.msra.mxu0 %v5783
        %5829 = vmatprep.subr.mxu0 0.0
        %5830 = vmatpush1.msra.mxu0 %v5784
        %5831 = vmatprep.subr.mxu0 0.0
        %5832 = vmatpush1.msra.mxu0 %v5785
        %5833 = vmatprep.subr.mxu0 0.0
        %5834 = vmatpush1.msra.mxu0 0.0
        %5835 = vmatprep.subr.mxu0 0.0
        %5836 = vmatpush1.msra.mxu0 0.0
        %5837 = vmatprep.subr.mxu0 0.0
        %5838 = vmatpush1.msra.mxu0 0.0
        %5839 = vmatprep.subr.mxu0 0.0
        %5840 = vmatpush1.msra.mxu0 0.0
        %5841 = vmatprep.subr.mxu0 0.0
        %5842 = vmatpush1.msra.mxu0 0.0
        %5843 = vmatprep.subr.mxu0 0.0
        %5844 = vmatpush1.msra.mxu0 0.0
        %5845 = vmatprep.subr.mxu0 0.0
        %5846 = vmatpush1.msra.mxu0 0.0
        %5847 = vmatprep.subr.mxu0 0.0
        %5848 = vmatpush1.msra.mxu0 0.0
        %5849 = vmatprep.subr.mxu0 0.0
        %5850 = vmatpush1.msra.mxu0 0.0
        %5851 = vmatprep.subr.mxu0 0.0
        %5852 = vmatpush1.msra.mxu0 0.0
        %5853 = vmatprep.subr.mxu0 0.0
        %5854 = vmatpush1.msra.mxu0 0.0
        %5855 = vmatprep.subr.mxu0 0.0
        %5856 = vmatpush1.msra.mxu0 0.0
        %5857 = vmatprep.subr.mxu0 0.0
        %5858 = vmatpush1.msra.mxu0 0.0
        %5859 = vmatprep.subr.mxu0 0.0
        %5860 = vmatpush1.msra.mxu0 0.0
        %5861 = vmatprep.subr.mxu0 0.0
        %5862 = vmatpush1.msra.mxu0 0.0
        %5863 = vmatprep.subr.mxu0 0.0
        %5864 = vmatpush1.msra.mxu0 0.0
        %5865 = vmatprep.subr.mxu0 0.0
        %5866 = vmatpush1.msra.mxu0 0.0
        %5867 = vmatprep.subr.mxu0 0.0
        %5868 = vmatpush1.msra.mxu0 0.0
        %5869 = vmatprep.subr.mxu0 0.0
        %5870 = vmatpush1.msra.mxu0 0.0
        %5871 = vmatprep.subr.mxu0 0.0
        %5872 = vmatpush1.msra.mxu0 0.0
        %5873 = vmatprep.subr.mxu0 0.0
        %5874 = vmatpush1.msra.mxu0 0.0
        %5875 = vmatprep.subr.mxu0 0.0
        %5876 = vmatpush1.msra.mxu0 0.0
        %5877 = vmatprep.subr.mxu0 0.0
        %5878 = vmatpush1.msra.mxu0 0.0
        %5879 = vmatprep.subr.mxu0 0.0
        %5880 = vmatpush1.msra.mxu0 0.0
        %5881 = vmatprep.mubr.f32.mxu0 0.0
        %5882 = vmatmul.mubr.f32.gmra.mrb[0].mxu0 %v5794
        %v5883 = vpop.f32.mrb[0].mxu0
        %v5884 = vadd.f32 %v5791, %v5883
        %v5885 = vpop.f32.mrb[0].mxu0
        %5886 = vmatprep.mubr.f32.mxu0 0.0
        %5887 = vmatmul.mubr.f32.gmra.mrb[0].mxu0 %v5797
        %v5888 = vpop.f32.mrb[0].mxu0
        %v5889 = vadd.f32 %v5791, %v5888
        %v5890 = vpop.f32.mrb[0].mxu0
        %5891 = vmatprep.mubr.f32.mxu0 0.0
        %5892 = vmatmul.mubr.f32.gmra.mrb[0].mxu0 %v5800
        %v5893 = vpop.f32.mrb[0].mxu0
        %v5894 = vadd.f32 %v5791, %v5893
        %v5895 = vpop.f32.mrb[0].mxu0
        %5896 = vmatprep.mubr.f32.mxu0 0.0
        %5897 = vmatmul.mubr.f32.gmra.mrb[0].mxu0 %v5803
        %v5898 = vpop.f32.mrb[0].mxu0
        %v5899 = vadd.f32 %v5791, %v5898
        %v5900 = vpop.f32.mrb[0].mxu0
        %5901 = vmatprep.mubr.f32.mxu0 0.0
        %5902 = vmatmul.mubr.f32.gmra.mrb[0].mxu0 %v5806
        %v5903 = vpop.f32.mrb[0].mxu0
        %v5904 = vadd.f32 %v5791, %v5903
        %v5905 = vpop.f32.mrb[0].mxu0
        %5906 = vmatprep.mubr.f32.mxu0 0.0
        %5907 = vmatmul.mubr.f32.gmra.mrb[0].mxu0 %v5809
        %v5908 = vpop.f32.mrb[0].mxu0
        %v5909 = vadd.f32 %v5791, %v5908
        %v5910 = vpop.f32.mrb[0].mxu0
        %5911 = vmatprep.mubr.f32.mxu0 0.0
        %5912 = vmatmul.mubr.f32.gmra.mrb[0].mxu0 %v5812
        %v5913 = vpop.f32.mrb[0].mxu0
        %v5914 = vadd.f32 %v5791, %v5913
        %v5915 = vpop.f32.mrb[0].mxu0
        %5916 = vmatprep.mubr.f32.mxu0 0.0
        %5917 = vmatmul.mubr.f32.gmra.mrb[0].mxu0 %v5815
        %v5918 = vpop.f32.mrb[0].mxu0
        %v5919 = vadd.f32 %v5791, %v5918
        %v5920 = vpop.f32.mrb[0].mxu0
        %5921 = vdwg.mxu0
        %5922 = vst [vmem:[%s275] sm:$0xff] %v5884
        %5923 = vst [vmem:[%s275 + $0x8] sm:$0xff] %v5889
        %5924 = vst [vmem:[%s275 + $0x10] sm:$0xff] %v5894
        %5925 = vst [vmem:[%s275 + $0x18] sm:$0xff] %v5899
        %5926 = vst [vmem:[%s275 + $0x20] sm:$0xff] %v5904
        %5927 = vst [vmem:[%s275 + $0x28] sm:$0xff] %v5909
        %5928 = vst [vmem:[%s275 + $0x30] sm:$0xff] %v5914
        %5929 = vst [vmem:[%s275 + $0x38] sm:$0xff] %v5919
        %s5930 = sand.u32 %s161, 1
        %s5931 = scalar_lea.sflag [#allocation8], %s5930
        %s5932 = sand.u32 %s161, 1
        %s5933 = smul.addr %s5932, 64
        %s5934 = scalar_lea.vmem [#allocation11], %s5933
        // Predicated region
        $region53: #{tpu_custom_call.1} parent=43 // pred_check
          %p5935 = pneg %p171
        $region54: #{tpu_custom_call.1} parent=43 // pred_check_branch
          %5937 = sbr.rel (%p5935) target = $region56
        $region55: #{tpu_custom_call.1} parent=43 // pred_region
          %s5938 = smul.u32 8, %s22
          %s5940 = ssub.s32 1024, 1024
          %5941 = vsyncadd %s5931, %s5940
          %s5942 = smul.addr %s5938, 128
          %s5943 = scalar_lea.hbm %s6, %s5942
          %s5944 = sshll.u32 %s5934, 4
          %s5945 = int_to_ptr.vmem [resolvable:$true] %s5944
          %5950 = dma.vmem_to_hbm [thread:$0]  %s5945, 1024, %s5943, %s5931, 128, 128, 8
        $region56: #{tpu_custom_call.1} parent=43 // pred_fallthru
          _
      $region44: #{tpu_custom_call.1} parent=5 // pred_fallthru
        _
      %p5951 = scmp.le.s32.totalorder 2, %s17
      // Predicated region
      $region57: #{tpu_custom_call.1} parent=5 // pred_check
        %p5952 = pneg %p5951
      $region58: #{tpu_custom_call.1} parent=5 // pred_check_branch
        %5954 = sbr.rel (%p5952) target = $region60
      $region59: #{tpu_custom_call.1} parent=5 // pred_region
        %s5955 = ssub.s32 %s17, 2
        // Predicated region
        $region61: #{tpu_custom_call.1} parent=59 // pred_check
          %p5956 = pneg %p177
        $region62: #{tpu_custom_call.1} parent=59 // pred_check_branch
          %5958 = sbr.rel (%p5956) target = $region64
        $region63: #{tpu_custom_call.1} parent=59 // pred_region
          %s5959 = sand.u32 %s162, 1
          %s5960 = scalar_lea.sflag [#allocation8], %s5959
          %s5961 = sand.u32 %s162, 1
          %s5962 = smul.addr %s5961, 64
          %s5963 = scalar_lea.vmem [#allocation11], %s5962
          %5964 = dma.done %s5960, 1024
        $region64: #{tpu_custom_call.1} parent=59 // pred_fallthru
          _
      $region60: #{tpu_custom_call.1} parent=5 // pred_fallthru
        _
    $region6: #{tpu_custom_call.1} parent=1 // loop_footer
      %s21 = sadd.s32 1, %s17
    $region7: #{tpu_custom_call.1} parent=1 // loop_footer_branch
      %16 = sbr.rel target = $region3
    $region8: #{tpu_custom_call.1} parent=1 // loop_exit
      _
    %5965 = vsyncpa [#allocation7], 1
    %s5966 = scalar_lea.sflag [#allocation7], 1
    %5967 = vsyncpa %s5966, 1
    %5968 = vsyncpa [#allocation10], 1
    %5969 = vsyncpa [#allocation8], 1
    %s5970 = scalar_lea.sflag [#allocation8], 1
    %5971 = vsyncpa %s5970, 1

</llo_original>
